<compile_context>
chip_gen: v6e
topology: v6e:2x2x1
jax: 0.10.0
libtpu: 0.0.40
codegen_flags: <defaults>
</compile_context>

<pallas_src>
import functools

import jax
import jax.numpy as jnp
from jax.experimental import pallas as pl
from jax.experimental.pallas import tpu as pltpu

BN_EPS = 1e-5  # PyTorch nn.BatchNorm1d default


# ---------------------------------------------------------------------------
# BatchNorm (eval mode) folding into the preceding 1x1 Conv1d
# ---------------------------------------------------------------------------
def fold_bn(w, b, gamma, beta, mean, var, eps=BN_EPS):
    """y = gamma*(x@w + b - mean)/sqrt(var+eps) + beta  ==  x@w_eff + b_eff."""
    scale = gamma / jnp.sqrt(var + eps)
    return w * scale[None, :], (b - mean) * scale + beta


# ---------------------------------------------------------------------------
# Fused kernel: first_conv -> maxpool -> (split) second_conv -> maxpool
# ---------------------------------------------------------------------------
def patch_embedding_kernel(x_ref,
                           w1_ref, b1_ref,        # Conv1d(Cin,H1,1)+BN folded (f32)
                           w2_ref, b2_ref,        # Conv1d(H1,H2,1)            (bf16 w)
                           w3g_ref, w3l_ref, b3_ref,  # Conv1d(2*H2,H3,1)+BN folded, split
                           w4_ref, b4_ref,        # Conv1d(H3,E,1)             (bf16 w)
                           o_ref):
    TM, N, Cin = x_ref.shape
    H1 = w1_ref.shape[1]
    H2 = w2_ref.shape[1]
    H3 = w3g_ref.shape[1]
    E = w4_ref.shape[1]

    # Flatten (TM, N, Cin) -> (TM*N, Cin): every GEMM sees M = TM*N rows.
    x = x_ref[...].reshape(TM * N, Cin)

    # ---- first_conv[0] + BN + ReLU:  Cin (tiny, e.g. 3) -> H1 --------------
    # Cin is far too small for the MXU; Cin rank-1 VPU updates (f32).
    acc = jnp.zeros((TM * N, H1), jnp.float32)
    for k in range(Cin):                        # static, tiny trip count
        acc = acc + x[:, k:k + 1] * w1_ref[k:k + 1, :]
    h = jnp.maximum(acc + b1_ref[...], 0.0)

    # ---- first_conv[3]:  H1 -> H2  (bf16 MXU GEMM, f32 accumulate) ----------
    feat = jnp.dot(h.astype(jnp.bfloat16), w2_ref[...],
                   preferred_element_type=jnp.float32) + b2_ref[...]   # (R, H2) f32

    # ---- max over points --------------------------------------------------
    gmax = jnp.max(feat.reshape(TM, N, H2), axis=1)                    # (TM, H2)

    # ---- second_conv[0] + BN + ReLU:  split GEMM instead of concat ---------
    #   cat([global, local]) @ w3 == gmax @ w3[:H2] + feat @ w3[H2:]
    g_part = jnp.dot(gmax.astype(jnp.bfloat16), w3g_ref[...],
                     preferred_element_type=jnp.float32)               # (TM, H3)
    l_part = jnp.dot(feat.astype(jnp.bfloat16), w3l_ref[...],
                     preferred_element_type=jnp.float32)               # (R, H3)
    h = l_part.reshape(TM, N, H3) + g_part[:, None, :] + b3_ref[...]
    h = jnp.maximum(h, 0.0).reshape(TM * N, H3)

    # ---- second_conv[3]:  H3 -> E  (bf16 MXU GEMM, f32 accumulate) ----------
    h = jnp.dot(h.astype(jnp.bfloat16), w4_ref[...],
                preferred_element_type=jnp.float32) + b4_ref[...]      # (R, E)

    # ---- final max over points -> (TM, E) ----------------------------------
    o_ref[...] = jnp.max(h.reshape(TM, N, E), axis=1)


# ---------------------------------------------------------------------------
# Wrapper
# ---------------------------------------------------------------------------
def _resident_spec(a):
    """Constant index_map -> block stays resident in VMEM; single-buffered."""
    nd = a.ndim
    idx = lambda i, _nd=nd: (0,) * _nd
    try:
        return pl.BlockSpec(a.shape, idx, pipeline_mode=pl.Buffered(1))
    except (TypeError, AttributeError):   # older jax without pipeline_mode
        return pl.BlockSpec(a.shape, idx)


def patch_embedding_forward(point_groups, params, *, tile_m=64,
                            vmem_limit_bytes=48 * 1024 * 1024):
    """point_groups: (bs, g, n, c) float32 -> (bs, g, embed_dim) float32."""
    bs, g, n, c = point_groups.shape
    M = bs * g
    x = point_groups.reshape(M, n, c)

    w1, b1 = params['w1'], params['b1']
    w2, b2 = params['w2'], params['b2']
    w3g, w3l, b3 = params['w3g'], params['w3l'], params['b3']
    w4, b4 = params['w4'], params['b4']
    H1, H2, H3, E = w1.shape[1], w2.shape[1], w3g.shape[1], w4.shape[1]

    # --- pick group-tile: multiple of 8 (sublane), >= 4 grid steps if possible
    tile_m = max(8, min(int(tile_m), M))
    tile_m = max(8, (tile_m // 8) * 8)
    while tile_m > 8 and pl.cdiv(M, tile_m) < 4:
        tile_m = max(8, ((tile_m // 2) // 8) * 8)

    # --- pad M up to a multiple of tile_m (padded groups are sliced off) -----
    M_pad = pl.cdiv(M, tile_m) * tile_m
    if M_pad != M:
        x = jnp.pad(x, ((0, M_pad - M), (0, 0), (0, 0)))
    grid = (M_pad // tile_m,)

    # --- advisory cost estimate ----------------------------------------------
    R = M_pad * n
    flops = (2 * R * (c * H1 + H1 * H2 + H2 * H3 + H3 * E)
             + 2 * M_pad * H2 * H3)
    weight_bytes = sum(int(p.size) * p.dtype.itemsize for p in params.values())
    bytes_accessed = int(x.size) * 4 + weight_bytes + M_pad * E * 4
    cost = pl.CostEstimate(flops=flops, transcendentals=0,
                           bytes_accessed=bytes_accessed)

    out = pl.pallas_call(
        patch_embedding_kernel,
        out_shape=jax.ShapeDtypeStruct((M_pad, E), jnp.float32),
        grid=grid,
        in_specs=[pl.BlockSpec((tile_m, n, c), lambda i: (i, 0, 0))]
                 + [_resident_spec(a)
                    for a in (w1, b1, w2, b2, w3g, w3l, b3, w4, b4)],
        out_specs=pl.BlockSpec((tile_m, E), lambda i: (i, 0)),
        compiler_params=pltpu.CompilerParams(
            dimension_semantics=("parallel",),        # v7x: shard tiles over TCs
            vmem_limit_bytes=vmem_limit_bytes),
        cost_estimate=cost,
    )(x, w1, b1, w2, b2, w3g, w3l, b3, w4, b4)

    return out[:M].reshape(bs, g, E)


# ---------------------------------------------------------------------------
# Parameter construction (PyTorch-equivalent, eval mode) + pure-JAX reference
# ---------------------------------------------------------------------------
def init_raw_params(key, *, embed_dim, input_channel=3):
    """Raw Conv1d / BatchNorm1d (eval) parameters for the large=False branch."""
    # TODO(synk): large=True branch (3-conv first stage, 2048-wide second stage)
    #             not implemented; same kernel structure would apply.
    C = input_channel
    H1, H2, H3 = 128, 256, 512

    def nrm(k, shape, scale=0.02):
        return (scale * jax.random.normal(k, shape)).astype(jnp.float32)

    ks = jax.random.split(key, 16)
    raw = dict(
        # conv weights stored channels-last: (Cin, Cout); Conv1d(k=1) == linear
        c1_w=nrm(ks[0], (C, H1)),  c1_b=nrm(ks[1], (H1,)),
        bn1=(jnp.ones((H1,), jnp.float32) + nrm(ks[2], (H1,)),   # gamma
             nrm(ks[3], (H1,)),                                   # beta
             nrm(ks[4], (H1,)),                                   # running mean
             jnp.abs(nrm(ks[5], (H1,))) + 0.5),                   # running var
        c2_w=nrm(ks[6], (H1, H2)), c2_b=nrm(ks[7], (H2,)),
        c3_w=nrm(ks[8], (2 * H2, H3)), c3_b=nrm(ks[9], (H3,)),
        bn2=(jnp.ones((H3,), jnp.float32) + nrm(ks[10], (H3,)),
             nrm(ks[11], (H3,)),
             nrm(ks[12], (H3,)),
             jnp.abs(nrm(ks[13], (H3,))) + 0.5),
        c4_w=nrm(ks[14], (H3, embed_dim)), c4_b=nrm(ks[15], (embed_dim,)),
    )
    return raw


def fold_params(raw):
    """Fold eval-mode BN into the preceding convs; split w3 into global/local
    halves; big-GEMM weights stored bf16, everything else f32."""
    w1, b1 = fold_bn(raw['c1_w'], raw['c1_b'], *raw['bn1'])
    w3, b3 = fold_bn(raw['c3_w'], raw['c3_b'], *raw['bn2'])
    H2 = raw['c2_w'].shape[1]
    return dict(
        w1=w1.astype(jnp.float32),              b1=b1[None, :].astype(jnp.float32),
        w2=raw['c2_w'].astype(jnp.bfloat16),    b2=raw['c2_b'][None, :].astype(jnp.float32),
        w3g=w3[:H2].astype(jnp.bfloat16),       # global (pooled) half of concat
        w3l=w3[H2:].astype(jnp.bfloat16),       # local (per-point) half of concat
        b3=b3[None, :].astype(jnp.float32),
        w4=raw['c4_w'].astype(jnp.bfloat16),    b4=raw['c4_b'][None, :].astype(jnp.float32),
    )


def reference_forward(point_groups, raw):
    """Pure-JAX mirror of PatchEmbedding.forward (eval mode), for verification."""
    bs, g, n, c = point_groups.shape
    x = point_groups.reshape(bs * g, n, c)                    # channels-last
    hi = jax.lax.Precision.HIGHEST

    def conv(x, w, b):
        return jnp.einsum('mnc,cd->mnd', x, w, precision=hi) + b

    def bn(x, gamma, beta, mean, var):
        return (x - mean) / jnp.sqrt(var + BN_EPS) * gamma + beta

    h = jax.nn.relu(bn(conv(x, raw['c1_w'], raw['c1_b']), *raw['bn1']))
    feat = conv(h, raw['c2_w'], raw['c2_b'])
    gmax = jnp.max(feat, axis=1, keepdims=True)
    catf = jnp.concatenate([jnp.broadcast_to(gmax, feat.shape), feat], axis=-1)
    h = jax.nn.relu(bn(conv(catf, raw['c3_w'], raw['c3_b']), *raw['bn2']))
    h = conv(h, raw['c4_w'], raw['c4_b'])
    return jnp.max(h, axis=1).reshape(bs, g, -1)


# ---------------------------------------------------------------------------
if __name__ == "__main__":
    bs, g, n, c = 2, 32, 32, 3      # (batch, groups, points-per-group, xyz)
    embed_dim = 128                 # lane-dense output (real configs: 384/768/1024)

    key = jax.random.PRNGKey(0)
    kx, kw = jax.random.split(key)
    point_groups = jax.random.normal(kx, (bs, g, n, c), dtype=jnp.float32)

    raw = init_raw_params(kw, embed_dim=embed_dim, input_channel=c)
    params = fold_params(raw)

    fwd = jax.jit(functools.partial(patch_embedding_forward, tile_m=64))
    out = fwd(point_groups, params)
    out = jax.block_until_ready(out)

    assert out.shape == (bs, g, embed_dim), out.shape
    assert bool(jnp.all(jnp.isfinite(out)))

    ref = jax.block_until_ready(reference_forward(point_groups, raw))
    assert bool(jnp.allclose(out, ref, rtol=1e-2, atol=1e-2)), \
        float(jnp.max(jnp.abs(out - ref)))

    print("KERNEL_OK")
</pallas_src>

<mosaic_0001>
module attributes {stable_mosaic.version = 11 : i64} {
  func.func @patch_embedding_kernel(%arg0: i32, %arg1: memref<16x32x3xf32, #tpu.memory_space<vmem>>, %arg2: memref<3x128xf32, #tpu.memory_space<vmem>>, %arg3: memref<1x128xf32, #tpu.memory_space<vmem>>, %arg4: memref<128x256xbf16, #tpu.memory_space<vmem>>, %arg5: memref<1x256xf32, #tpu.memory_space<vmem>>, %arg6: memref<256x512xbf16, #tpu.memory_space<vmem>>, %arg7: memref<256x512xbf16, #tpu.memory_space<vmem>>, %arg8: memref<1x512xf32, #tpu.memory_space<vmem>>, %arg9: memref<512x128xbf16, #tpu.memory_space<vmem>>, %arg10: memref<1x128xf32, #tpu.memory_space<vmem>>, %arg11: memref<16x128xf32, #tpu.memory_space<vmem>>) attributes {dimension_semantics = [#tpu.dimension_semantics<parallel>], iteration_bounds = array<i64: 4>, scalar_prefetch = 0 : i64, scratch_operands = 0 : i64, tpu.core_type = #tpu.core_type<tc>, window_params = [{transform_indices = @transform_0, window_bounds = array<i64: 16, 32, 3>}, {pipeline_mode = #tpu.pipeline_mode<synchronous>, transform_indices = @transform_1, window_bounds = array<i64: 3, 128>}, {pipeline_mode = #tpu.pipeline_mode<synchronous>, transform_indices = @transform_2, window_bounds = array<i64: 1, 128>}, {pipeline_mode = #tpu.pipeline_mode<synchronous>, transform_indices = @transform_3, window_bounds = array<i64: 128, 256>}, {pipeline_mode = #tpu.pipeline_mode<synchronous>, transform_indices = @transform_4, window_bounds = array<i64: 1, 256>}, {pipeline_mode = #tpu.pipeline_mode<synchronous>, transform_indices = @transform_5, window_bounds = array<i64: 256, 512>}, {pipeline_mode = #tpu.pipeline_mode<synchronous>, transform_indices = @transform_6, window_bounds = array<i64: 256, 512>}, {pipeline_mode = #tpu.pipeline_mode<synchronous>, transform_indices = @transform_7, window_bounds = array<i64: 1, 512>}, {pipeline_mode = #tpu.pipeline_mode<synchronous>, transform_indices = @transform_8, window_bounds = array<i64: 512, 128>}, {pipeline_mode = #tpu.pipeline_mode<synchronous>, transform_indices = @transform_9, window_bounds = array<i64: 1, 128>}, {transform_indices = @transform_10, window_bounds = array<i64: 16, 128>}]} {
    %c0 = arith.constant 0 : index
    %c0_0 = arith.constant 0 : index
    %c0_1 = arith.constant 0 : index
    %0 = vector.load %arg1[%c0, %c0_0, %c0_1] : memref<16x32x3xf32, #tpu.memory_space<vmem>>, vector<16x32x3xf32>
    %1 = vector.shape_cast %0 : vector<16x32x3xf32> to vector<512x3xf32>
    %cst = arith.constant 0.000000e+00 : f32
    %2 = vector.broadcast %cst : f32 to vector<512x128xf32>
    %3 = vector.extract_strided_slice %1 {offsets = [0, 0], sizes = [512, 1], strides = [1, 1]} : vector<512x3xf32> to vector<512x1xf32>
    %c0_2 = arith.constant 0 : index
    %c0_3 = arith.constant 0 : index
    %4 = vector.load %arg2[%c0_2, %c0_3] : memref<3x128xf32, #tpu.memory_space<vmem>>, vector<1x128xf32>
    %5 = vector.broadcast %3 : vector<512x1xf32> to vector<512x128xf32>
    %6 = vector.broadcast %4 : vector<1x128xf32> to vector<512x128xf32>
    %7 = arith.mulf %5, %6 : vector<512x128xf32>
    %8 = arith.addf %2, %7 : vector<512x128xf32>
    %9 = vector.extract_strided_slice %1 {offsets = [0, 1], sizes = [512, 1], strides = [1, 1]} : vector<512x3xf32> to vector<512x1xf32>
    %c1 = arith.constant 1 : index
    %c0_4 = arith.constant 0 : index
    %10 = vector.load %arg2[%c1, %c0_4] : memref<3x128xf32, #tpu.memory_space<vmem>>, vector<1x128xf32>
    %11 = vector.broadcast %9 : vector<512x1xf32> to vector<512x128xf32>
    %12 = vector.broadcast %10 : vector<1x128xf32> to vector<512x128xf32>
    %13 = arith.mulf %11, %12 : vector<512x128xf32>
    %14 = arith.addf %8, %13 : vector<512x128xf32>
    %15 = vector.extract_strided_slice %1 {offsets = [0, 2], sizes = [512, 1], strides = [1, 1]} : vector<512x3xf32> to vector<512x1xf32>
    %c2 = arith.constant 2 : index
    %c0_5 = arith.constant 0 : index
    %16 = vector.load %arg2[%c2, %c0_5] : memref<3x128xf32, #tpu.memory_space<vmem>>, vector<1x128xf32>
    %17 = vector.broadcast %15 : vector<512x1xf32> to vector<512x128xf32>
    %18 = vector.broadcast %16 : vector<1x128xf32> to vector<512x128xf32>
    %19 = arith.mulf %17, %18 : vector<512x128xf32>
    %20 = arith.addf %14, %19 : vector<512x128xf32>
    %c0_6 = arith.constant 0 : index
    %c0_7 = arith.constant 0 : index
    %21 = vector.load %arg3[%c0_6, %c0_7] : memref<1x128xf32, #tpu.memory_space<vmem>>, vector<1x128xf32>
    %22 = vector.broadcast %21 : vector<1x128xf32> to vector<512x128xf32>
    %23 = arith.addf %20, %22 : vector<512x128xf32>
    %cst_8 = arith.constant 0.000000e+00 : f32
    %24 = vector.broadcast %cst_8 : f32 to vector<512x128xf32>
    %25 = arith.maximumf %23, %24 : vector<512x128xf32>
    %26 = arith.truncf %25 : vector<512x128xf32> to vector<512x128xbf16>
    %c0_9 = arith.constant 0 : index
    %c0_10 = arith.constant 0 : index
    %27 = vector.load %arg4[%c0_9, %c0_10] : memref<128x256xbf16, #tpu.memory_space<vmem>>, vector<128x256xbf16>
    %cst_11 = arith.constant dense<0.000000e+00> : vector<512x256xf32>
    %28 = tpu.matmul %26, %27, %cst_11 {dimension_numbers = #tpu.dot_dimension_numbers<[1], [0], [0], [1], [0, 0, 1, 1], [], []>} : vector<512x128xbf16>, vector<128x256xbf16>, vector<512x256xf32> -> vector<512x256xf32>
    %c0_12 = arith.constant 0 : index
    %c0_13 = arith.constant 0 : index
    %29 = vector.load %arg5[%c0_12, %c0_13] : memref<1x256xf32, #tpu.memory_space<vmem>>, vector<1x256xf32>
    %30 = vector.broadcast %29 : vector<1x256xf32> to vector<512x256xf32>
    %31 = arith.addf %28, %30 : vector<512x256xf32>
    %32 = vector.shape_cast %31 : vector<512x256xf32> to vector<16x32x256xf32>
    %cst_14 = arith.constant dense<0xFF800000> : vector<16x256xf32>
    %33 = vector.multi_reduction <maximumf>, %32, %cst_14 [1] : vector<16x32x256xf32> to vector<16x256xf32>
    %34 = arith.truncf %33 : vector<16x256xf32> to vector<16x256xbf16>
    %c0_15 = arith.constant 0 : index
    %c0_16 = arith.constant 0 : index
    %35 = vector.load %arg6[%c0_15, %c0_16] : memref<256x512xbf16, #tpu.memory_space<vmem>>, vector<256x512xbf16>
    %cst_17 = arith.constant dense<0.000000e+00> : vector<16x512xf32>
    %36 = tpu.matmul %34, %35, %cst_17 {dimension_numbers = #tpu.dot_dimension_numbers<[1], [0], [0], [1], [0, 0, 1, 1], [], []>} : vector<16x256xbf16>, vector<256x512xbf16>, vector<16x512xf32> -> vector<16x512xf32>
    %37 = arith.truncf %31 : vector<512x256xf32> to vector<512x256xbf16>
    %c0_18 = arith.constant 0 : index
    %c0_19 = arith.constant 0 : index
    %38 = vector.load %arg7[%c0_18, %c0_19] : memref<256x512xbf16, #tpu.memory_space<vmem>>, vector<256x512xbf16>
    %cst_20 = arith.constant dense<0.000000e+00> : vector<512x512xf32>
    %39 = tpu.matmul %37, %38, %cst_20 {dimension_numbers = #tpu.dot_dimension_numbers<[1], [0], [0], [1], [0, 0, 1, 1], [], []>} : vector<512x256xbf16>, vector<256x512xbf16>, vector<512x512xf32> -> vector<512x512xf32>
    %40 = vector.shape_cast %39 : vector<512x512xf32> to vector<16x32x512xf32>
    %41 = vector.shape_cast %36 : vector<16x512xf32> to vector<16x1x512xf32>
    %42 = vector.broadcast %41 : vector<16x1x512xf32> to vector<16x32x512xf32>
    %43 = arith.addf %40, %42 : vector<16x32x512xf32>
    %c0_21 = arith.constant 0 : index
    %c0_22 = arith.constant 0 : index
    %44 = vector.load %arg8[%c0_21, %c0_22] : memref<1x512xf32, #tpu.memory_space<vmem>>, vector<1x512xf32>
    %45 = vector.shape_cast %44 : vector<1x512xf32> to vector<1x1x512xf32>
    %46 = vector.broadcast %45 : vector<1x1x512xf32> to vector<16x32x512xf32>
    %47 = arith.addf %43, %46 : vector<16x32x512xf32>
    %cst_23 = arith.constant 0.000000e+00 : f32
    %48 = vector.broadcast %cst_23 : f32 to vector<16x32x512xf32>
    %49 = arith.maximumf %47, %48 : vector<16x32x512xf32>
    %50 = vector.shape_cast %49 : vector<16x32x512xf32> to vector<512x512xf32>
    %51 = arith.truncf %50 : vector<512x512xf32> to vector<512x512xbf16>
    %c0_24 = arith.constant 0 : index
    %c0_25 = arith.constant 0 : index
    %52 = vector.load %arg9[%c0_24, %c0_25] : memref<512x128xbf16, #tpu.memory_space<vmem>>, vector<512x128xbf16>
    %cst_26 = arith.constant dense<0.000000e+00> : vector<512x128xf32>
    %53 = tpu.matmul %51, %52, %cst_26 {dimension_numbers = #tpu.dot_dimension_numbers<[1], [0], [0], [1], [0, 0, 1, 1], [], []>} : vector<512x512xbf16>, vector<512x128xbf16>, vector<512x128xf32> -> vector<512x128xf32>
    %c0_27 = arith.constant 0 : index
    %c0_28 = arith.constant 0 : index
    %54 = vector.load %arg10[%c0_27, %c0_28] : memref<1x128xf32, #tpu.memory_space<vmem>>, vector<1x128xf32>
    %55 = vector.broadcast %54 : vector<1x128xf32> to vector<512x128xf32>
    %56 = arith.addf %53, %55 : vector<512x128xf32>
    %57 = vector.shape_cast %56 : vector<512x128xf32> to vector<16x32x128xf32>
    %cst_29 = arith.constant dense<0xFF800000> : vector<16x128xf32>
    %58 = vector.multi_reduction <maximumf>, %57, %cst_29 [1] : vector<16x32x128xf32> to vector<16x128xf32>
    %c0_30 = arith.constant 0 : index
    %c0_31 = arith.constant 0 : index
    %59 = vector.load %arg11[%c0_30, %c0_31] : memref<16x128xf32, #tpu.memory_space<vmem>>, vector<16x128xf32>
    tpu.vector_store %arg11[%c0_30, %c0_31], %58 {strides = array<i32>} : memref<16x128xf32, #tpu.memory_space<vmem>>, vector<16x128xf32>,
    return
  }
  func.func @transform_0(%arg0: i32) -> (i32, i32, i32) {
    %c0_i32 = arith.constant 0 : i32
    %c0_i32_0 = arith.constant 0 : i32
    %c0_i32_1 = arith.constant 0 : i32
    return %arg0, %c0_i32, %c0_i32_0 : i32, i32, i32
  }
  func.func @transform_1(%arg0: i32) -> (i32, i32) {
    %c0_i32 = arith.constant 0 : i32
    %c0_i32_0 = arith.constant 0 : i32
    %c0_i32_1 = arith.constant 0 : i32
    return %c0_i32, %c0_i32_0 : i32, i32
  }
  func.func @transform_2(%arg0: i32) -> (i32, i32) {
    %c0_i32 = arith.constant 0 : i32
    %c0_i32_0 = arith.constant 0 : i32
    %c0_i32_1 = arith.constant 0 : i32
    return %c0_i32, %c0_i32_0 : i32, i32
  }
  func.func @transform_3(%arg0: i32) -> (i32, i32) {
    %c0_i32 = arith.constant 0 : i32
    %c0_i32_0 = arith.constant 0 : i32
    %c0_i32_1 = arith.constant 0 : i32
    return %c0_i32, %c0_i32_0 : i32, i32
  }
  func.func @transform_4(%arg0: i32) -> (i32, i32) {
    %c0_i32 = arith.constant 0 : i32
    %c0_i32_0 = arith.constant 0 : i32
    %c0_i32_1 = arith.constant 0 : i32
    return %c0_i32, %c0_i32_0 : i32, i32
  }
  func.func @transform_5(%arg0: i32) -> (i32, i32) {
    %c0_i32 = arith.constant 0 : i32
    %c0_i32_0 = arith.constant 0 : i32
    %c0_i32_1 = arith.constant 0 : i32
    return %c0_i32, %c0_i32_0 : i32, i32
  }
  func.func @transform_6(%arg0: i32) -> (i32, i32) {
    %c0_i32 = arith.constant 0 : i32
    %c0_i32_0 = arith.constant 0 : i32
    %c0_i32_1 = arith.constant 0 : i32
    return %c0_i32, %c0_i32_0 : i32, i32
  }
  func.func @transform_7(%arg0: i32) -> (i32, i32) {
    %c0_i32 = arith.constant 0 : i32
    %c0_i32_0 = arith.constant 0 : i32
    %c0_i32_1 = arith.constant 0 : i32
    return %c0_i32, %c0_i32_0 : i32, i32
  }
  func.func @transform_8(%arg0: i32) -> (i32, i32) {
    %c0_i32 = arith.constant 0 : i32
    %c0_i32_0 = arith.constant 0 : i32
    %c0_i32_1 = arith.constant 0 : i32
    return %c0_i32, %c0_i32_0 : i32, i32
  }
  func.func @transform_9(%arg0: i32) -> (i32, i32) {
    %c0_i32 = arith.constant 0 : i32
    %c0_i32_0 = arith.constant 0 : i32
    %c0_i32_1 = arith.constant 0 : i32
    return %c0_i32, %c0_i32_0 : i32, i32
  }
  func.func @transform_10(%arg0: i32) -> (i32, i32) {
    %c0_i32 = arith.constant 0 : i32
    %c0_i32_0 = arith.constant 0 : i32
    return %arg0, %c0_i32 : i32, i32
  }
}

</mosaic_0001>

<llo_original>
// kernel: patch_embedding_forward.1
$region0: #{patch_embedding_forward.1}
  #allocation0 [shape = 'u32[]', space=smem, size = 0x4, offset = 0x4, fixed_abs, tag = 'smem constant byte address 0x4 - core index']
  #allocation1 [shape = 'u32[144,128]{1,0:T(1,128)}', space=vmem, size = 0x12000, scoped, tag = 'internal scratch']
  %s0 = inlined_call_operand.vmem [shape: f32[64,32,3], index: 0, kind: input, shape index: {}]
  %s1 = inlined_call_operand.vmem [shape: f32[3,128], index: 1, kind: input, shape index: {}]
  %s2 = inlined_call_operand.vmem [shape: f32[1,128], index: 2, kind: input, shape index: {}]
  %s3 = inlined_call_operand.vmem [shape: bf16[128,256], index: 3, kind: input, shape index: {}]
  %s4 = inlined_call_operand.vmem [shape: f32[1,256], index: 4, kind: input, shape index: {}]
  %s5 = inlined_call_operand.vmem [shape: bf16[256,512], index: 5, kind: input, shape index: {}]
  %s6 = inlined_call_operand.vmem [shape: bf16[256,512], index: 6, kind: input, shape index: {}]
  %s7 = inlined_call_operand.vmem [shape: f32[1,512], index: 7, kind: input, shape index: {}]
  %s8 = inlined_call_operand.vmem [shape: bf16[512,128], index: 8, kind: input, shape index: {}]
  %s9 = inlined_call_operand.vmem [shape: f32[1,128], index: 9, kind: input, shape index: {}]
  %s10 = inlined_call_operand.hbm [shape: f32[64,128], index: 10, kind: output, shape index: {}]
  %s11 = sld [smem:[#allocation0]]
  $region73: #{patch_embedding_forward.1} parent=0
    _
  %s13 = ssub.s32 1, %s11
  %s14 = scalar_select 0, %s13, %s11
  $region1: #{patch_embedding_forward.1} parent=0
    #allocation2 [shape = 'u8[16384]{0}', space=vmem, size = 0x4000, scoped, tag = 'output window, operand 0']
    #allocation3 [shape = 's32[2]{0}', space=sflag, size = 0x8, scoped, tag = 'scoped memory for patch_embedding_forward.1']
    %15 = vsyncpa [#allocation3], 0
    %s16 = scalar_lea.sflag [#allocation3], 1
    %17 = vsyncpa %s16, 0
    loop: start=0, step=1, limit=6
    $region2: #{patch_embedding_forward.1} parent=1 // loop_pre_header
      _
    $region3: #{patch_embedding_forward.1} parent=1 // loop_header
      %s19 = sphi 0, %s23
      %p20 = scmp.ge.s32.totalorder %s19, 6
      %s29 = sphi 0, %s31
      %s32 = sphi 0, %s29
      %s33 = sphi 0, %s32
      %s49 = sphi 0, %s33
      %s53 = sphi 0, %s53
      %s55 = sphi 0, %s53
      %s56 = sphi 0, %s55
      %s70 = sphi 0, %s56
      %s74 = sphi 0, %s74
      %s76 = sphi 0, %s74
      %s77 = sphi 0, %s76
      %s91 = sphi 0, %s77
      %s95 = sphi 0, %s95
      %s97 = sphi 0, %s95
      %s98 = sphi 0, %s97
      %s112 = sphi 0, %s98
      %s116 = sphi 0, %s116
      %s118 = sphi 0, %s116
      %s119 = sphi 0, %s118
      %s133 = sphi 0, %s119
      %s137 = sphi 0, %s137
      %s139 = sphi 0, %s137
      %s140 = sphi 0, %s139
      %s154 = sphi 0, %s140
      %s158 = sphi 0, %s158
      %s160 = sphi 0, %s158
      %s161 = sphi 0, %s160
      %s175 = sphi 0, %s161
      %s179 = sphi 0, %s179
      %s181 = sphi 0, %s179
      %s182 = sphi 0, %s181
      %s196 = sphi 0, %s182
      %s200 = sphi 0, %s200
      %s202 = sphi 0, %s200
      %s203 = sphi 0, %s202
      %s217 = sphi 0, %s203
      %s221 = sphi 0, %s221
      %s223 = sphi 0, %s221
      %s224 = sphi 0, %s223
      %s238 = sphi 0, %s224
      %s244 = sphi 0, %s246
      %s247 = sphi 0, %s244
      %s248 = sphi 0, %s247
      %s264 = sphi 0, %s248
    $region4: #{patch_embedding_forward.1} parent=1 // loop_header_branch
      %22 = sbr.rel (%p20) target = $region8
    $region5: #{patch_embedding_forward.1} parent=1 // loop_body
      %s24 = ssub.s32 %s19, 1
      %s25 = ssub.s32 %s19, 2
      %s26 = sadd.s32 %s19, 1
      %s27 = ssub.s32 %s19, %s26
      %p28 = scmp.eq.s32.totalorder %s27, 0
      %s30 = sadd.s32 %s29, 1
      %s31 = scalar_select %p28, %s29, %s30
      %p34 = pneg %p28
      %p35 = scmp.eq.s32.totalorder %s19, 3
      %p36 = por %p34, %p35
      %p37 = scmp.ne.s32.totalorder %s29, %s32
      %p38 = scmp.eq.s32.totalorder %s19, 0
      %p39 = por %p37, %p38
      %p40 = scmp.ne.s32.totalorder %s29, %s32
      %p41 = scmp.eq.s32.totalorder %s24, 3
      %p42 = por %p40, %p41
      %p43 = scmp.ne.s32.totalorder %s32, %s33
      %p44 = scmp.eq.s32.totalorder %s24, 0
      %p45 = por %p43, %p44
      %p46 = scmp.ne.s32.totalorder %s32, %s33
      %p47 = scmp.eq.s32.totalorder %s25, 3
      %p48 = por %p46, %p47
      %p50 = scmp.ne.s32.totalorder %s33, %s49
      %p51 = scmp.eq.s32.totalorder %s25, 0
      %p52 = por %p50, %p51
      %s54 = sadd.s32 %s53, 1
      %p57 = scmp.eq.s32.totalorder %s19, 3
      %p58 = scmp.ne.s32.totalorder %s53, %s55
      %p59 = scmp.eq.s32.totalorder %s19, 0
      %p60 = por %p58, %p59
      %p61 = scmp.ne.s32.totalorder %s53, %s55
      %p62 = scmp.eq.s32.totalorder %s24, 3
      %p63 = por %p61, %p62
      %p64 = scmp.ne.s32.totalorder %s55, %s56
      %p65 = scmp.eq.s32.totalorder %s24, 0
      %p66 = por %p64, %p65
      %p67 = scmp.ne.s32.totalorder %s55, %s56
      %p68 = scmp.eq.s32.totalorder %s25, 3
      %p69 = por %p67, %p68
      %p71 = scmp.ne.s32.totalorder %s56, %s70
      %p72 = scmp.eq.s32.totalorder %s25, 0
      %p73 = por %p71, %p72
      %s75 = sadd.s32 %s74, 1
      %p78 = scmp.eq.s32.totalorder %s19, 3
      %p79 = scmp.ne.s32.totalorder %s74, %s76
      %p80 = scmp.eq.s32.totalorder %s19, 0
      %p81 = por %p79, %p80
      %p82 = scmp.ne.s32.totalorder %s74, %s76
      %p83 = scmp.eq.s32.totalorder %s24, 3
      %p84 = por %p82, %p83
      %p85 = scmp.ne.s32.totalorder %s76, %s77
      %p86 = scmp.eq.s32.totalorder %s24, 0
      %p87 = por %p85, %p86
      %p88 = scmp.ne.s32.totalorder %s76, %s77
      %p89 = scmp.eq.s32.totalorder %s25, 3
      %p90 = por %p88, %p89
      %p92 = scmp.ne.s32.totalorder %s77, %s91
      %p93 = scmp.eq.s32.totalorder %s25, 0
      %p94 = por %p92, %p93
      %s96 = sadd.s32 %s95, 1
      %p99 = scmp.eq.s32.totalorder %s19, 3
      %p100 = scmp.ne.s32.totalorder %s95, %s97
      %p101 = scmp.eq.s32.totalorder %s19, 0
      %p102 = por %p100, %p101
      %p103 = scmp.ne.s32.totalorder %s95, %s97
      %p104 = scmp.eq.s32.totalorder %s24, 3
      %p105 = por %p103, %p104
      %p106 = scmp.ne.s32.totalorder %s97, %s98
      %p107 = scmp.eq.s32.totalorder %s24, 0
      %p108 = por %p106, %p107
      %p109 = scmp.ne.s32.totalorder %s97, %s98
      %p110 = scmp.eq.s32.totalorder %s25, 3
      %p111 = por %p109, %p110
      %p113 = scmp.ne.s32.totalorder %s98, %s112
      %p114 = scmp.eq.s32.totalorder %s25, 0
      %p115 = por %p113, %p114
      %s117 = sadd.s32 %s116, 1
      %p120 = scmp.eq.s32.totalorder %s19, 3
      %p121 = scmp.ne.s32.totalorder %s116, %s118
      %p122 = scmp.eq.s32.totalorder %s19, 0
      %p123 = por %p121, %p122
      %p124 = scmp.ne.s32.totalorder %s116, %s118
      %p125 = scmp.eq.s32.totalorder %s24, 3
      %p126 = por %p124, %p125
      %p127 = scmp.ne.s32.totalorder %s118, %s119
      %p128 = scmp.eq.s32.totalorder %s24, 0
      %p129 = por %p127, %p128
      %p130 = scmp.ne.s32.totalorder %s118, %s119
      %p131 = scmp.eq.s32.totalorder %s25, 3
      %p132 = por %p130, %p131
      %p134 = scmp.ne.s32.totalorder %s119, %s133
      %p135 = scmp.eq.s32.totalorder %s25, 0
      %p136 = por %p134, %p135
      %s138 = sadd.s32 %s137, 1
      %p141 = scmp.eq.s32.totalorder %s19, 3
      %p142 = scmp.ne.s32.totalorder %s137, %s139
      %p143 = scmp.eq.s32.totalorder %s19, 0
      %p144 = por %p142, %p143
      %p145 = scmp.ne.s32.totalorder %s137, %s139
      %p146 = scmp.eq.s32.totalorder %s24, 3
      %p147 = por %p145, %p146
      %p148 = scmp.ne.s32.totalorder %s139, %s140
      %p149 = scmp.eq.s32.totalorder %s24, 0
      %p150 = por %p148, %p149
      %p151 = scmp.ne.s32.totalorder %s139, %s140
      %p152 = scmp.eq.s32.totalorder %s25, 3
      %p153 = por %p151, %p152
      %p155 = scmp.ne.s32.totalorder %s140, %s154
      %p156 = scmp.eq.s32.totalorder %s25, 0
      %p157 = por %p155, %p156
      %s159 = sadd.s32 %s158, 1
      %p162 = scmp.eq.s32.totalorder %s19, 3
      %p163 = scmp.ne.s32.totalorder %s158, %s160
      %p164 = scmp.eq.s32.totalorder %s19, 0
      %p165 = por %p163, %p164
      %p166 = scmp.ne.s32.totalorder %s158, %s160
      %p167 = scmp.eq.s32.totalorder %s24, 3
      %p168 = por %p166, %p167
      %p169 = scmp.ne.s32.totalorder %s160, %s161
      %p170 = scmp.eq.s32.totalorder %s24, 0
      %p171 = por %p169, %p170
      %p172 = scmp.ne.s32.totalorder %s160, %s161
      %p173 = scmp.eq.s32.totalorder %s25, 3
      %p174 = por %p172, %p173
      %p176 = scmp.ne.s32.totalorder %s161, %s175
      %p177 = scmp.eq.s32.totalorder %s25, 0
      %p178 = por %p176, %p177
      %s180 = sadd.s32 %s179, 1
      %p183 = scmp.eq.s32.totalorder %s19, 3
      %p184 = scmp.ne.s32.totalorder %s179, %s181
      %p185 = scmp.eq.s32.totalorder %s19, 0
      %p186 = por %p184, %p185
      %p187 = scmp.ne.s32.totalorder %s179, %s181
      %p188 = scmp.eq.s32.totalorder %s24, 3
      %p189 = por %p187, %p188
      %p190 = scmp.ne.s32.totalorder %s181, %s182
      %p191 = scmp.eq.s32.totalorder %s24, 0
      %p192 = por %p190, %p191
      %p193 = scmp.ne.s32.totalorder %s181, %s182
      %p194 = scmp.eq.s32.totalorder %s25, 3
      %p195 = por %p193, %p194
      %p197 = scmp.ne.s32.totalorder %s182, %s196
      %p198 = scmp.eq.s32.totalorder %s25, 0
      %p199 = por %p197, %p198
      %s201 = sadd.s32 %s200, 1
      %p204 = scmp.eq.s32.totalorder %s19, 3
      %p205 = scmp.ne.s32.totalorder %s200, %s202
      %p206 = scmp.eq.s32.totalorder %s19, 0
      %p207 = por %p205, %p206
      %p208 = scmp.ne.s32.totalorder %s200, %s202
      %p209 = scmp.eq.s32.totalorder %s24, 3
      %p210 = por %p208, %p209
      %p211 = scmp.ne.s32.totalorder %s202, %s203
      %p212 = scmp.eq.s32.totalorder %s24, 0
      %p213 = por %p211, %p212
      %p214 = scmp.ne.s32.totalorder %s202, %s203
      %p215 = scmp.eq.s32.totalorder %s25, 3
      %p216 = por %p214, %p215
      %p218 = scmp.ne.s32.totalorder %s203, %s217
      %p219 = scmp.eq.s32.totalorder %s25, 0
      %p220 = por %p218, %p219
      %s222 = sadd.s32 %s221, 1
      %p225 = scmp.eq.s32.totalorder %s19, 3
      %p226 = scmp.ne.s32.totalorder %s221, %s223
      %p227 = scmp.eq.s32.totalorder %s19, 0
      %p228 = por %p226, %p227
      %p229 = scmp.ne.s32.totalorder %s221, %s223
      %p230 = scmp.eq.s32.totalorder %s24, 3
      %p231 = por %p229, %p230
      %p232 = scmp.ne.s32.totalorder %s223, %s224
      %p233 = scmp.eq.s32.totalorder %s24, 0
      %p234 = por %p232, %p233
      %p235 = scmp.ne.s32.totalorder %s223, %s224
      %p236 = scmp.eq.s32.totalorder %s25, 3
      %p237 = por %p235, %p236
      %p239 = scmp.ne.s32.totalorder %s224, %s238
      %p240 = scmp.eq.s32.totalorder %s25, 0
      %p241 = por %p239, %p240
      %s242 = ssub.s32 %s19, %s26
      %p243 = scmp.eq.s32.totalorder %s242, 0
      %s245 = sadd.s32 %s244, 1
      %s246 = scalar_select %p243, %s244, %s245
      %p249 = pneg %p243
      %p250 = scmp.eq.s32.totalorder %s19, 3
      %p251 = por %p249, %p250
      %p252 = scmp.ne.s32.totalorder %s244, %s247
      %p253 = scmp.eq.s32.totalorder %s19, 0
      %p254 = por %p252, %p253
      %p255 = scmp.ne.s32.totalorder %s244, %s247
      %p256 = scmp.eq.s32.totalorder %s24, 3
      %p257 = por %p255, %p256
      %p258 = scmp.ne.s32.totalorder %s247, %s248
      %p259 = scmp.eq.s32.totalorder %s24, 0
      %p260 = por %p258, %p259
      %p261 = scmp.ne.s32.totalorder %s247, %s248
      %p262 = scmp.eq.s32.totalorder %s25, 3
      %p263 = por %p261, %p262
      %p265 = scmp.ne.s32.totalorder %s248, %s264
      %p266 = scmp.eq.s32.totalorder %s25, 0
      %p267 = por %p265, %p266
      %p268 = scmp.le.s32.totalorder 1, %s19
      %p269 = scmp.lt.s32.totalorder %s19, 5
      %p270 = pnand %p268, %p269
      %p271 = pneg %p270
      // Predicated region
      $region9: #{patch_embedding_forward.1} parent=5 // pred_check
        _
      $region10: #{patch_embedding_forward.1} parent=5 // pred_check_branch
        %273 = sbr.rel (%p270) target = $region12
      $region11: #{patch_embedding_forward.1} parent=5 // pred_region
        %s274 = ssub.s32 %s19, 1
        // Predicated region
        $region13: #{patch_embedding_forward.1} parent=11 // pred_check
          %p275 = pneg %p66
        $region14: #{patch_embedding_forward.1} parent=11 // pred_check_branch
          %277 = sbr.rel (%p275) target = $region16
        $region15: #{patch_embedding_forward.1} parent=11 // pred_region
          _
        $region16: #{patch_embedding_forward.1} parent=11 // pred_fallthru
          _
        // Predicated region
        $region17: #{patch_embedding_forward.1} parent=11 // pred_check
          %p278 = pneg %p87
        $region18: #{patch_embedding_forward.1} parent=11 // pred_check_branch
          %280 = sbr.rel (%p278) target = $region20
        $region19: #{patch_embedding_forward.1} parent=11 // pred_region
          _
        $region20: #{patch_embedding_forward.1} parent=11 // pred_fallthru
          _
        // Predicated region
        $region21: #{patch_embedding_forward.1} parent=11 // pred_check
          %p281 = pneg %p108
        $region22: #{patch_embedding_forward.1} parent=11 // pred_check_branch
          %283 = sbr.rel (%p281) target = $region24
        $region23: #{patch_embedding_forward.1} parent=11 // pred_region
          _
        $region24: #{patch_embedding_forward.1} parent=11 // pred_fallthru
          _
        // Predicated region
        $region25: #{patch_embedding_forward.1} parent=11 // pred_check
          %p284 = pneg %p129
        $region26: #{patch_embedding_forward.1} parent=11 // pred_check_branch
          %286 = sbr.rel (%p284) target = $region28
        $region27: #{patch_embedding_forward.1} parent=11 // pred_region
          _
        $region28: #{patch_embedding_forward.1} parent=11 // pred_fallthru
          _
        // Predicated region
        $region29: #{patch_embedding_forward.1} parent=11 // pred_check
          %p287 = pneg %p150
        $region30: #{patch_embedding_forward.1} parent=11 // pred_check_branch
          %289 = sbr.rel (%p287) target = $region32
        $region31: #{patch_embedding_forward.1} parent=11 // pred_region
          _
        $region32: #{patch_embedding_forward.1} parent=11 // pred_fallthru
          _
        // Predicated region
        $region33: #{patch_embedding_forward.1} parent=11 // pred_check
          %p290 = pneg %p171
        $region34: #{patch_embedding_forward.1} parent=11 // pred_check_branch
          %292 = sbr.rel (%p290) target = $region36
        $region35: #{patch_embedding_forward.1} parent=11 // pred_region
          _
        $region36: #{patch_embedding_forward.1} parent=11 // pred_fallthru
          _
        // Predicated region
        $region37: #{patch_embedding_forward.1} parent=11 // pred_check
          %p293 = pneg %p192
        $region38: #{patch_embedding_forward.1} parent=11 // pred_check_branch
          %295 = sbr.rel (%p293) target = $region40
        $region39: #{patch_embedding_forward.1} parent=11 // pred_region
          _
        $region40: #{patch_embedding_forward.1} parent=11 // pred_fallthru
          _
        // Predicated region
        $region41: #{patch_embedding_forward.1} parent=11 // pred_check
          %p296 = pneg %p213
        $region42: #{patch_embedding_forward.1} parent=11 // pred_check_branch
          %298 = sbr.rel (%p296) target = $region44
        $region43: #{patch_embedding_forward.1} parent=11 // pred_region
          _
        $region44: #{patch_embedding_forward.1} parent=11 // pred_fallthru
          _
        // Predicated region
        $region45: #{patch_embedding_forward.1} parent=11 // pred_check
          %p299 = pneg %p234
        $region46: #{patch_embedding_forward.1} parent=11 // pred_check_branch
          %301 = sbr.rel (%p299) target = $region48
        $region47: #{patch_embedding_forward.1} parent=11 // pred_region
          _
        $region48: #{patch_embedding_forward.1} parent=11 // pred_fallthru
          _
      $region12: #{patch_embedding_forward.1} parent=5 // pred_fallthru
        _
      %p302 = scmp.lt.s32.totalorder %s19, 4
      // Predicated region
      $region49: #{patch_embedding_forward.1} parent=5 // pred_check
        %p303 = pneg %p302
      $region50: #{patch_embedding_forward.1} parent=5 // pred_check_branch
        %305 = sbr.rel (%p303) target = $region52
      $region51: #{patch_embedding_forward.1} parent=5 // pred_region
        // Predicated region
        $region53: #{patch_embedding_forward.1} parent=51 // pred_check
          %p306 = pneg %p39
        $region54: #{patch_embedding_forward.1} parent=51 // pred_check_branch
          %308 = sbr.rel (%p306) target = $region56
        $region55: #{patch_embedding_forward.1} parent=51 // pred_region
          %s309 = smul.u32 16, %s19
          %p310 = scmp.lt.s32.totalorder %s309, 63
          %s311 = scalar_select %p310, %s309, 63
          %s312 = smul.addr %s311, 4
          %s313 = smul.addr %s312, 8
          %s314 = scalar_lea.vmem %s0, %s313
          %s315 = smul.u32 16, %s19
        $region56: #{patch_embedding_forward.1} parent=51 // pred_fallthru
          _
      $region52: #{patch_embedding_forward.1} parent=5 // pred_fallthru
        _
      %p316 = scmp.le.s32.totalorder 1, %s19
      %p317 = scmp.lt.s32.totalorder %s19, 5
      %p318 = pnand %p316, %p317
      %p319 = pneg %p318
      // Predicated region
      $region57: #{patch_embedding_forward.1} parent=5 // pred_check
        _
      $region58: #{patch_embedding_forward.1} parent=5 // pred_check_branch
        %321 = sbr.rel (%p318) target = $region60
      $region59: #{patch_embedding_forward.1} parent=5 // pred_region
        %s322 = ssub.s32 %s19, 1
        %s323 = smul.u32 16, %s24
        %p324 = scmp.lt.s32.totalorder %s323, 63
        %s325 = scalar_select %p324, %s323, 63
        %s326 = smul.addr %s325, 4
        %s327 = smul.addr %s326, 8
        %s328 = scalar_lea.vmem %s0, %s327
        %p329 = pneg %p45
        %p330 = pneg %p42
        %p331 = pneg %p66
        %p332 = pneg %p63
        %p333 = pneg %p87
        %p334 = pneg %p84
        %p335 = pneg %p108
        %p336 = pneg %p105
        %p337 = pneg %p129
        %p338 = pneg %p126
        %p339 = pneg %p150
        %p340 = pneg %p147
        %p341 = pneg %p171
        %p342 = pneg %p168
        %p343 = pneg %p192
        %p344 = pneg %p189
        %p345 = pneg %p213
        %p346 = pneg %p210
        %p347 = pneg %p234
        %p348 = pneg %p231
        %p349 = pneg %p260
        %p350 = pneg %p257
        %s351 = sand.u32 %s247, 1
        %s352 = scalar_lea.sflag [#allocation3], %s351
        %s353 = sand.u32 %s247, 1
        %s354 = smul.addr %s353, 16
        %s355 = scalar_lea.vmem [#allocation2], %s354
        %s356 = smul.u32 16, %s24
        %p357 = scmp.lt.s32.totalorder %s356, 63
        %s358 = scalar_select %p357, %s356, 63
        %s359 = smul.addr %s358, 4
        %s360 = smul.addr %s359, 8
        %s361 = scalar_lea.vmem %s0, %s360
        %s362 = smul.u32 16, %s24
        %s363 = smul.u32 2, %s24
        %v365 = vld [vmem:[%s361] sm:$0xff]
        %v366 = vld [vmem:[%s361 + $0x8] sm:$0xff]
        %v367 = vld [vmem:[%s361 + $0x10] sm:$0xff]
        %v368 = vld [vmem:[%s361 + $0x18] sm:$0xff]
        %v369 = vld [vmem:[%s361 + $0x20] sm:$0xff]
        %v370 = vld [vmem:[%s361 + $0x28] sm:$0xff]
        %v371 = vld [vmem:[%s361 + $0x30] sm:$0xff]
        %v372 = vld [vmem:[%s361 + $0x38] sm:$0xff]
        %v373 = vld [vmem:[%s361 + $0x40] sm:$0xff]
        %v374 = vld [vmem:[%s361 + $0x48] sm:$0xff]
        %v375 = vld [vmem:[%s361 + $0x50] sm:$0xff]
        %v376 = vld [vmem:[%s361 + $0x58] sm:$0xff]
        %v377 = vld [vmem:[%s361 + $0x60] sm:$0xff]
        %v378 = vld [vmem:[%s361 + $0x68] sm:$0xff]
        %v379 = vld [vmem:[%s361 + $0x70] sm:$0xff]
        %v380 = vld [vmem:[%s361 + $0x78] sm:$0xff]
        %v381 = vld [vmem:[%s361 + $0x80] sm:$0xff]
        %v382 = vld [vmem:[%s361 + $0x88] sm:$0xff]
        %v383 = vld [vmem:[%s361 + $0x90] sm:$0xff]
        %v384 = vld [vmem:[%s361 + $0x98] sm:$0xff]
        %v385 = vld [vmem:[%s361 + $0xa0] sm:$0xff]
        %v386 = vld [vmem:[%s361 + $0xa8] sm:$0xff]
        %v387 = vld [vmem:[%s361 + $0xb0] sm:$0xff]
        %v388 = vld [vmem:[%s361 + $0xb8] sm:$0xff]
        %v389 = vld [vmem:[%s361 + $0xc0] sm:$0xff]
        %v390 = vld [vmem:[%s361 + $0xc8] sm:$0xff]
        %v391 = vld [vmem:[%s361 + $0xd0] sm:$0xff]
        %v392 = vld [vmem:[%s361 + $0xd8] sm:$0xff]
        %v393 = vld [vmem:[%s361 + $0xe0] sm:$0xff]
        %v394 = vld [vmem:[%s361 + $0xe8] sm:$0xff]
        %v395 = vld [vmem:[%s361 + $0xf0] sm:$0xff]
        %v396 = vld [vmem:[%s361 + $0xf8] sm:$0xff]
        %v397 = vld [vmem:[%s361 + $0x100] sm:$0xff]
        %v398 = vld [vmem:[%s361 + $0x108] sm:$0xff]
        %v399 = vld [vmem:[%s361 + $0x110] sm:$0xff]
        %v400 = vld [vmem:[%s361 + $0x118] sm:$0xff]
        %v401 = vld [vmem:[%s361 + $0x120] sm:$0xff]
        %v402 = vld [vmem:[%s361 + $0x128] sm:$0xff]
        %v403 = vld [vmem:[%s361 + $0x130] sm:$0xff]
        %v404 = vld [vmem:[%s361 + $0x138] sm:$0xff]
        %v405 = vld [vmem:[%s361 + $0x140] sm:$0xff]
        %v406 = vld [vmem:[%s361 + $0x148] sm:$0xff]
        %v407 = vld [vmem:[%s361 + $0x150] sm:$0xff]
        %v408 = vld [vmem:[%s361 + $0x158] sm:$0xff]
        %v409 = vld [vmem:[%s361 + $0x160] sm:$0xff]
        %v410 = vld [vmem:[%s361 + $0x168] sm:$0xff]
        %v411 = vld [vmem:[%s361 + $0x170] sm:$0xff]
        %v412 = vld [vmem:[%s361 + $0x178] sm:$0xff]
        %v413 = vld [vmem:[%s361 + $0x180] sm:$0xff]
        %v414 = vld [vmem:[%s361 + $0x188] sm:$0xff]
        %v415 = vld [vmem:[%s361 + $0x190] sm:$0xff]
        %v416 = vld [vmem:[%s361 + $0x198] sm:$0xff]
        %v417 = vld [vmem:[%s361 + $0x1a0] sm:$0xff]
        %v418 = vld [vmem:[%s361 + $0x1a8] sm:$0xff]
        %v419 = vld [vmem:[%s361 + $0x1b0] sm:$0xff]
        %v420 = vld [vmem:[%s361 + $0x1b8] sm:$0xff]
        %v421 = vld [vmem:[%s361 + $0x1c0] sm:$0xff]
        %v422 = vld [vmem:[%s361 + $0x1c8] sm:$0xff]
        %v423 = vld [vmem:[%s361 + $0x1d0] sm:$0xff]
        %v424 = vld [vmem:[%s361 + $0x1d8] sm:$0xff]
        %v425 = vld [vmem:[%s361 + $0x1e0] sm:$0xff]
        %v426 = vld [vmem:[%s361 + $0x1e8] sm:$0xff]
        %v427 = vld [vmem:[%s361 + $0x1f0] sm:$0xff]
        %v428 = vld [vmem:[%s361 + $0x1f8] sm:$0xff]
        %v429 = vld [vmem:[%s1] sm:$0x1]
        %431 = vset.pattern.permute.xlu0 0
        %432 = vperm.xlu0 %431, %v365
        %v433 = vpop.permute.xlu0 %432
        %436 = vset.pattern.permute.xlu0 0
        %437 = vperm.xlu0 %436, %v366
        %v438 = vpop.permute.xlu0 %437
        %441 = vset.pattern.permute.xlu0 0
        %442 = vperm.xlu0 %441, %v367
        %v443 = vpop.permute.xlu0 %442
        %446 = vset.pattern.permute.xlu0 0
        %447 = vperm.xlu0 %446, %v368
        %v448 = vpop.permute.xlu0 %447
        %451 = vset.pattern.permute.xlu0 0
        %452 = vperm.xlu0 %451, %v369
        %v453 = vpop.permute.xlu0 %452
        %456 = vset.pattern.permute.xlu0 0
        %457 = vperm.xlu0 %456, %v370
        %v458 = vpop.permute.xlu0 %457
        %461 = vset.pattern.permute.xlu0 0
        %462 = vperm.xlu0 %461, %v371
        %v463 = vpop.permute.xlu0 %462
        %466 = vset.pattern.permute.xlu0 0
        %467 = vperm.xlu0 %466, %v372
        %v468 = vpop.permute.xlu0 %467
        %471 = vset.pattern.permute.xlu0 0
        %472 = vperm.xlu0 %471, %v373
        %v473 = vpop.permute.xlu0 %472
        %476 = vset.pattern.permute.xlu0 0
        %477 = vperm.xlu0 %476, %v374
        %v478 = vpop.permute.xlu0 %477
        %481 = vset.pattern.permute.xlu0 0
        %482 = vperm.xlu0 %481, %v375
        %v483 = vpop.permute.xlu0 %482
        %486 = vset.pattern.permute.xlu0 0
        %487 = vperm.xlu0 %486, %v376
        %v488 = vpop.permute.xlu0 %487
        %491 = vset.pattern.permute.xlu0 0
        %492 = vperm.xlu0 %491, %v377
        %v493 = vpop.permute.xlu0 %492
        %496 = vset.pattern.permute.xlu0 0
        %497 = vperm.xlu0 %496, %v378
        %v498 = vpop.permute.xlu0 %497
        %501 = vset.pattern.permute.xlu0 0
        %502 = vperm.xlu0 %501, %v379
        %v503 = vpop.permute.xlu0 %502
        %506 = vset.pattern.permute.xlu0 0
        %507 = vperm.xlu0 %506, %v380
        %v508 = vpop.permute.xlu0 %507
        %511 = vset.pattern.permute.xlu0 0
        %512 = vperm.xlu0 %511, %v381
        %v513 = vpop.permute.xlu0 %512
        %516 = vset.pattern.permute.xlu0 0
        %517 = vperm.xlu0 %516, %v382
        %v518 = vpop.permute.xlu0 %517
        %521 = vset.pattern.permute.xlu0 0
        %522 = vperm.xlu0 %521, %v383
        %v523 = vpop.permute.xlu0 %522
        %526 = vset.pattern.permute.xlu0 0
        %527 = vperm.xlu0 %526, %v384
        %v528 = vpop.permute.xlu0 %527
        %531 = vset.pattern.permute.xlu0 0
        %532 = vperm.xlu0 %531, %v385
        %v533 = vpop.permute.xlu0 %532
        %536 = vset.pattern.permute.xlu0 0
        %537 = vperm.xlu0 %536, %v386
        %v538 = vpop.permute.xlu0 %537
        %541 = vset.pattern.permute.xlu0 0
        %542 = vperm.xlu0 %541, %v387
        %v543 = vpop.permute.xlu0 %542
        %546 = vset.pattern.permute.xlu0 0
        %547 = vperm.xlu0 %546, %v388
        %v548 = vpop.permute.xlu0 %547
        %551 = vset.pattern.permute.xlu0 0
        %552 = vperm.xlu0 %551, %v389
        %v553 = vpop.permute.xlu0 %552
        %556 = vset.pattern.permute.xlu0 0
        %557 = vperm.xlu0 %556, %v390
        %v558 = vpop.permute.xlu0 %557
        %561 = vset.pattern.permute.xlu0 0
        %562 = vperm.xlu0 %561, %v391
        %v563 = vpop.permute.xlu0 %562
        %566 = vset.pattern.permute.xlu0 0
        %567 = vperm.xlu0 %566, %v392
        %v568 = vpop.permute.xlu0 %567
        %571 = vset.pattern.permute.xlu0 0
        %572 = vperm.xlu0 %571, %v393
        %v573 = vpop.permute.xlu0 %572
        %576 = vset.pattern.permute.xlu0 0
        %577 = vperm.xlu0 %576, %v394
        %v578 = vpop.permute.xlu0 %577
        %581 = vset.pattern.permute.xlu0 0
        %582 = vperm.xlu0 %581, %v395
        %v583 = vpop.permute.xlu0 %582
        %586 = vset.pattern.permute.xlu0 0
        %587 = vperm.xlu0 %586, %v396
        %v588 = vpop.permute.xlu0 %587
        %591 = vset.pattern.permute.xlu0 0
        %592 = vperm.xlu0 %591, %v397
        %v593 = vpop.permute.xlu0 %592
        %596 = vset.pattern.permute.xlu0 0
        %597 = vperm.xlu0 %596, %v398
        %v598 = vpop.permute.xlu0 %597
        %601 = vset.pattern.permute.xlu0 0
        %602 = vperm.xlu0 %601, %v399
        %v603 = vpop.permute.xlu0 %602
        %606 = vset.pattern.permute.xlu0 0
        %607 = vperm.xlu0 %606, %v400
        %v608 = vpop.permute.xlu0 %607
        %611 = vset.pattern.permute.xlu0 0
        %612 = vperm.xlu0 %611, %v401
        %v613 = vpop.permute.xlu0 %612
        %616 = vset.pattern.permute.xlu0 0
        %617 = vperm.xlu0 %616, %v402
        %v618 = vpop.permute.xlu0 %617
        %621 = vset.pattern.permute.xlu0 0
        %622 = vperm.xlu0 %621, %v403
        %v623 = vpop.permute.xlu0 %622
        %626 = vset.pattern.permute.xlu0 0
        %627 = vperm.xlu0 %626, %v404
        %v628 = vpop.permute.xlu0 %627
        %631 = vset.pattern.permute.xlu0 0
        %632 = vperm.xlu0 %631, %v405
        %v633 = vpop.permute.xlu0 %632
        %636 = vset.pattern.permute.xlu0 0
        %637 = vperm.xlu0 %636, %v406
        %v638 = vpop.permute.xlu0 %637
        %641 = vset.pattern.permute.xlu0 0
        %642 = vperm.xlu0 %641, %v407
        %v643 = vpop.permute.xlu0 %642
        %646 = vset.pattern.permute.xlu0 0
        %647 = vperm.xlu0 %646, %v408
        %v648 = vpop.permute.xlu0 %647
        %651 = vset.pattern.permute.xlu0 0
        %652 = vperm.xlu0 %651, %v409
        %v653 = vpop.permute.xlu0 %652
        %656 = vset.pattern.permute.xlu0 0
        %657 = vperm.xlu0 %656, %v410
        %v658 = vpop.permute.xlu0 %657
        %661 = vset.pattern.permute.xlu0 0
        %662 = vperm.xlu0 %661, %v411
        %v663 = vpop.permute.xlu0 %662
        %666 = vset.pattern.permute.xlu0 0
        %667 = vperm.xlu0 %666, %v412
        %v668 = vpop.permute.xlu0 %667
        %671 = vset.pattern.permute.xlu0 0
        %672 = vperm.xlu0 %671, %v413
        %v673 = vpop.permute.xlu0 %672
        %676 = vset.pattern.permute.xlu0 0
        %677 = vperm.xlu0 %676, %v414
        %v678 = vpop.permute.xlu0 %677
        %681 = vset.pattern.permute.xlu0 0
        %682 = vperm.xlu0 %681, %v415
        %v683 = vpop.permute.xlu0 %682
        %686 = vset.pattern.permute.xlu0 0
        %687 = vperm.xlu0 %686, %v416
        %v688 = vpop.permute.xlu0 %687
        %691 = vset.pattern.permute.xlu0 0
        %692 = vperm.xlu0 %691, %v417
        %v693 = vpop.permute.xlu0 %692
        %696 = vset.pattern.permute.xlu0 0
        %697 = vperm.xlu0 %696, %v418
        %v698 = vpop.permute.xlu0 %697
        %701 = vset.pattern.permute.xlu0 0
        %702 = vperm.xlu0 %701, %v419
        %v703 = vpop.permute.xlu0 %702
        %706 = vset.pattern.permute.xlu0 0
        %707 = vperm.xlu0 %706, %v420
        %v708 = vpop.permute.xlu0 %707
        %711 = vset.pattern.permute.xlu0 0
        %712 = vperm.xlu0 %711, %v421
        %v713 = vpop.permute.xlu0 %712
        %716 = vset.pattern.permute.xlu0 0
        %717 = vperm.xlu0 %716, %v422
        %v718 = vpop.permute.xlu0 %717
        %721 = vset.pattern.permute.xlu0 0
        %722 = vperm.xlu0 %721, %v423
        %v723 = vpop.permute.xlu0 %722
        %726 = vset.pattern.permute.xlu0 0
        %727 = vperm.xlu0 %726, %v424
        %v728 = vpop.permute.xlu0 %727
        %731 = vset.pattern.permute.xlu0 0
        %732 = vperm.xlu0 %731, %v425
        %v733 = vpop.permute.xlu0 %732
        %736 = vset.pattern.permute.xlu0 0
        %737 = vperm.xlu0 %736, %v426
        %v738 = vpop.permute.xlu0 %737
        %741 = vset.pattern.permute.xlu0 0
        %742 = vperm.xlu0 %741, %v427
        %v743 = vpop.permute.xlu0 %742
        %746 = vset.pattern.permute.xlu0 0
        %747 = vperm.xlu0 %746, %v428
        %v748 = vpop.permute.xlu0 %747
        %v750 = vlaneseq
        %v751 = vshrl.u32 %v750, 7
        %v752 = vsub.s32 0, %v751
        %v753 = vrot.slane %v429, %v752
        %v754 = vmul.f32 %v433, %v753
        %v755 = vmul.f32 %v438, %v753
        %v756 = vmul.f32 %v443, %v753
        %v757 = vmul.f32 %v448, %v753
        %v758 = vmul.f32 %v453, %v753
        %v759 = vmul.f32 %v458, %v753
        %v760 = vmul.f32 %v463, %v753
        %v761 = vmul.f32 %v468, %v753
        %v762 = vmul.f32 %v473, %v753
        %v763 = vmul.f32 %v478, %v753
        %v764 = vmul.f32 %v483, %v753
        %v765 = vmul.f32 %v488, %v753
        %v766 = vmul.f32 %v493, %v753
        %v767 = vmul.f32 %v498, %v753
        %v768 = vmul.f32 %v503, %v753
        %v769 = vmul.f32 %v508, %v753
        %v770 = vmul.f32 %v513, %v753
        %v771 = vmul.f32 %v518, %v753
        %v772 = vmul.f32 %v523, %v753
        %v773 = vmul.f32 %v528, %v753
        %v774 = vmul.f32 %v533, %v753
        %v775 = vmul.f32 %v538, %v753
        %v776 = vmul.f32 %v543, %v753
        %v777 = vmul.f32 %v548, %v753
        %v778 = vmul.f32 %v553, %v753
        %v779 = vmul.f32 %v558, %v753
        %v780 = vmul.f32 %v563, %v753
        %v781 = vmul.f32 %v568, %v753
        %v782 = vmul.f32 %v573, %v753
        %v783 = vmul.f32 %v578, %v753
        %v784 = vmul.f32 %v583, %v753
        %v785 = vmul.f32 %v588, %v753
        %v786 = vmul.f32 %v593, %v753
        %v787 = vmul.f32 %v598, %v753
        %v788 = vmul.f32 %v603, %v753
        %v789 = vmul.f32 %v608, %v753
        %v790 = vmul.f32 %v613, %v753
        %v791 = vmul.f32 %v618, %v753
        %v792 = vmul.f32 %v623, %v753
        %v793 = vmul.f32 %v628, %v753
        %v794 = vmul.f32 %v633, %v753
        %v795 = vmul.f32 %v638, %v753
        %v796 = vmul.f32 %v643, %v753
        %v797 = vmul.f32 %v648, %v753
        %v798 = vmul.f32 %v653, %v753
        %v799 = vmul.f32 %v658, %v753
        %v800 = vmul.f32 %v663, %v753
        %v801 = vmul.f32 %v668, %v753
        %v802 = vmul.f32 %v673, %v753
        %v803 = vmul.f32 %v678, %v753
        %v804 = vmul.f32 %v683, %v753
        %v805 = vmul.f32 %v688, %v753
        %v806 = vmul.f32 %v693, %v753
        %v807 = vmul.f32 %v698, %v753
        %v808 = vmul.f32 %v703, %v753
        %v809 = vmul.f32 %v708, %v753
        %v810 = vmul.f32 %v713, %v753
        %v811 = vmul.f32 %v718, %v753
        %v812 = vmul.f32 %v723, %v753
        %v813 = vmul.f32 %v728, %v753
        %v814 = vmul.f32 %v733, %v753
        %v815 = vmul.f32 %v738, %v753
        %v816 = vmul.f32 %v743, %v753
        %v817 = vmul.f32 %v748, %v753
        %v818 = vadd.f32 %v754, 0.0
        %v819 = vadd.f32 %v755, 0.0
        %v820 = vadd.f32 %v756, 0.0
        %v821 = vadd.f32 %v757, 0.0
        %v822 = vadd.f32 %v758, 0.0
        %v823 = vadd.f32 %v759, 0.0
        %v824 = vadd.f32 %v760, 0.0
        %v825 = vadd.f32 %v761, 0.0
        %v826 = vadd.f32 %v762, 0.0
        %v827 = vadd.f32 %v763, 0.0
        %v828 = vadd.f32 %v764, 0.0
        %v829 = vadd.f32 %v765, 0.0
        %v830 = vadd.f32 %v766, 0.0
        %v831 = vadd.f32 %v767, 0.0
        %v832 = vadd.f32 %v768, 0.0
        %v833 = vadd.f32 %v769, 0.0
        %v834 = vadd.f32 %v770, 0.0
        %v835 = vadd.f32 %v771, 0.0
        %v836 = vadd.f32 %v772, 0.0
        %v837 = vadd.f32 %v773, 0.0
        %v838 = vadd.f32 %v774, 0.0
        %v839 = vadd.f32 %v775, 0.0
        %v840 = vadd.f32 %v776, 0.0
        %v841 = vadd.f32 %v777, 0.0
        %v842 = vadd.f32 %v778, 0.0
        %v843 = vadd.f32 %v779, 0.0
        %v844 = vadd.f32 %v780, 0.0
        %v845 = vadd.f32 %v781, 0.0
        %v846 = vadd.f32 %v782, 0.0
        %v847 = vadd.f32 %v783, 0.0
        %v848 = vadd.f32 %v784, 0.0
        %v849 = vadd.f32 %v785, 0.0
        %v850 = vadd.f32 %v786, 0.0
        %v851 = vadd.f32 %v787, 0.0
        %v852 = vadd.f32 %v788, 0.0
        %v853 = vadd.f32 %v789, 0.0
        %v854 = vadd.f32 %v790, 0.0
        %v855 = vadd.f32 %v791, 0.0
        %v856 = vadd.f32 %v792, 0.0
        %v857 = vadd.f32 %v793, 0.0
        %v858 = vadd.f32 %v794, 0.0
        %v859 = vadd.f32 %v795, 0.0
        %v860 = vadd.f32 %v796, 0.0
        %v861 = vadd.f32 %v797, 0.0
        %v862 = vadd.f32 %v798, 0.0
        %v863 = vadd.f32 %v799, 0.0
        %v864 = vadd.f32 %v800, 0.0
        %v865 = vadd.f32 %v801, 0.0
        %v866 = vadd.f32 %v802, 0.0
        %v867 = vadd.f32 %v803, 0.0
        %v868 = vadd.f32 %v804, 0.0
        %v869 = vadd.f32 %v805, 0.0
        %v870 = vadd.f32 %v806, 0.0
        %v871 = vadd.f32 %v807, 0.0
        %v872 = vadd.f32 %v808, 0.0
        %v873 = vadd.f32 %v809, 0.0
        %v874 = vadd.f32 %v810, 0.0
        %v875 = vadd.f32 %v811, 0.0
        %v876 = vadd.f32 %v812, 0.0
        %v877 = vadd.f32 %v813, 0.0
        %v878 = vadd.f32 %v814, 0.0
        %v879 = vadd.f32 %v815, 0.0
        %v880 = vadd.f32 %v816, 0.0
        %v881 = vadd.f32 %v817, 0.0
        %v882 = vld [vmem:[%s1 + $0x1] sm:$0x1]
        %883 = vset.pattern.permute.xlu0 1
        %884 = vperm.xlu0 %883, %v365
        %v885 = vpop.permute.xlu0 %884
        %887 = vset.pattern.permute.xlu0 1
        %888 = vperm.xlu0 %887, %v366
        %v889 = vpop.permute.xlu0 %888
        %891 = vset.pattern.permute.xlu0 1
        %892 = vperm.xlu0 %891, %v367
        %v893 = vpop.permute.xlu0 %892
        %895 = vset.pattern.permute.xlu0 1
        %896 = vperm.xlu0 %895, %v368
        %v897 = vpop.permute.xlu0 %896
        %899 = vset.pattern.permute.xlu0 1
        %900 = vperm.xlu0 %899, %v369
        %v901 = vpop.permute.xlu0 %900
        %903 = vset.pattern.permute.xlu0 1
        %904 = vperm.xlu0 %903, %v370
        %v905 = vpop.permute.xlu0 %904
        %907 = vset.pattern.permute.xlu0 1
        %908 = vperm.xlu0 %907, %v371
        %v909 = vpop.permute.xlu0 %908
        %911 = vset.pattern.permute.xlu0 1
        %912 = vperm.xlu0 %911, %v372
        %v913 = vpop.permute.xlu0 %912
        %915 = vset.pattern.permute.xlu0 1
        %916 = vperm.xlu0 %915, %v373
        %v917 = vpop.permute.xlu0 %916
        %919 = vset.pattern.permute.xlu0 1
        %920 = vperm.xlu0 %919, %v374
        %v921 = vpop.permute.xlu0 %920
        %923 = vset.pattern.permute.xlu0 1
        %924 = vperm.xlu0 %923, %v375
        %v925 = vpop.permute.xlu0 %924
        %927 = vset.pattern.permute.xlu0 1
        %928 = vperm.xlu0 %927, %v376
        %v929 = vpop.permute.xlu0 %928
        %931 = vset.pattern.permute.xlu0 1
        %932 = vperm.xlu0 %931, %v377
        %v933 = vpop.permute.xlu0 %932
        %935 = vset.pattern.permute.xlu0 1
        %936 = vperm.xlu0 %935, %v378
        %v937 = vpop.permute.xlu0 %936
        %939 = vset.pattern.permute.xlu0 1
        %940 = vperm.xlu0 %939, %v379
        %v941 = vpop.permute.xlu0 %940
        %943 = vset.pattern.permute.xlu0 1
        %944 = vperm.xlu0 %943, %v380
        %v945 = vpop.permute.xlu0 %944
        %947 = vset.pattern.permute.xlu0 1
        %948 = vperm.xlu0 %947, %v381
        %v949 = vpop.permute.xlu0 %948
        %951 = vset.pattern.permute.xlu0 1
        %952 = vperm.xlu0 %951, %v382
        %v953 = vpop.permute.xlu0 %952
        %955 = vset.pattern.permute.xlu0 1
        %956 = vperm.xlu0 %955, %v383
        %v957 = vpop.permute.xlu0 %956
        %959 = vset.pattern.permute.xlu0 1
        %960 = vperm.xlu0 %959, %v384
        %v961 = vpop.permute.xlu0 %960
        %963 = vset.pattern.permute.xlu0 1
        %964 = vperm.xlu0 %963, %v385
        %v965 = vpop.permute.xlu0 %964
        %967 = vset.pattern.permute.xlu0 1
        %968 = vperm.xlu0 %967, %v386
        %v969 = vpop.permute.xlu0 %968
        %971 = vset.pattern.permute.xlu0 1
        %972 = vperm.xlu0 %971, %v387
        %v973 = vpop.permute.xlu0 %972
        %975 = vset.pattern.permute.xlu0 1
        %976 = vperm.xlu0 %975, %v388
        %v977 = vpop.permute.xlu0 %976
        %979 = vset.pattern.permute.xlu0 1
        %980 = vperm.xlu0 %979, %v389
        %v981 = vpop.permute.xlu0 %980
        %983 = vset.pattern.permute.xlu0 1
        %984 = vperm.xlu0 %983, %v390
        %v985 = vpop.permute.xlu0 %984
        %987 = vset.pattern.permute.xlu0 1
        %988 = vperm.xlu0 %987, %v391
        %v989 = vpop.permute.xlu0 %988
        %991 = vset.pattern.permute.xlu0 1
        %992 = vperm.xlu0 %991, %v392
        %v993 = vpop.permute.xlu0 %992
        %995 = vset.pattern.permute.xlu0 1
        %996 = vperm.xlu0 %995, %v393
        %v997 = vpop.permute.xlu0 %996
        %999 = vset.pattern.permute.xlu0 1
        %1000 = vperm.xlu0 %999, %v394
        %v1001 = vpop.permute.xlu0 %1000
        %1003 = vset.pattern.permute.xlu0 1
        %1004 = vperm.xlu0 %1003, %v395
        %v1005 = vpop.permute.xlu0 %1004
        %1007 = vset.pattern.permute.xlu0 1
        %1008 = vperm.xlu0 %1007, %v396
        %v1009 = vpop.permute.xlu0 %1008
        %1011 = vset.pattern.permute.xlu0 1
        %1012 = vperm.xlu0 %1011, %v397
        %v1013 = vpop.permute.xlu0 %1012
        %1015 = vset.pattern.permute.xlu0 1
        %1016 = vperm.xlu0 %1015, %v398
        %v1017 = vpop.permute.xlu0 %1016
        %1019 = vset.pattern.permute.xlu0 1
        %1020 = vperm.xlu0 %1019, %v399
        %v1021 = vpop.permute.xlu0 %1020
        %1023 = vset.pattern.permute.xlu0 1
        %1024 = vperm.xlu0 %1023, %v400
        %v1025 = vpop.permute.xlu0 %1024
        %1027 = vset.pattern.permute.xlu0 1
        %1028 = vperm.xlu0 %1027, %v401
        %v1029 = vpop.permute.xlu0 %1028
        %1031 = vset.pattern.permute.xlu0 1
        %1032 = vperm.xlu0 %1031, %v402
        %v1033 = vpop.permute.xlu0 %1032
        %1035 = vset.pattern.permute.xlu0 1
        %1036 = vperm.xlu0 %1035, %v403
        %v1037 = vpop.permute.xlu0 %1036
        %1039 = vset.pattern.permute.xlu0 1
        %1040 = vperm.xlu0 %1039, %v404
        %v1041 = vpop.permute.xlu0 %1040
        %1043 = vset.pattern.permute.xlu0 1
        %1044 = vperm.xlu0 %1043, %v405
        %v1045 = vpop.permute.xlu0 %1044
        %1047 = vset.pattern.permute.xlu0 1
        %1048 = vperm.xlu0 %1047, %v406
        %v1049 = vpop.permute.xlu0 %1048
        %1051 = vset.pattern.permute.xlu0 1
        %1052 = vperm.xlu0 %1051, %v407
        %v1053 = vpop.permute.xlu0 %1052
        %1055 = vset.pattern.permute.xlu0 1
        %1056 = vperm.xlu0 %1055, %v408
        %v1057 = vpop.permute.xlu0 %1056
        %1059 = vset.pattern.permute.xlu0 1
        %1060 = vperm.xlu0 %1059, %v409
        %v1061 = vpop.permute.xlu0 %1060
        %1063 = vset.pattern.permute.xlu0 1
        %1064 = vperm.xlu0 %1063, %v410
        %v1065 = vpop.permute.xlu0 %1064
        %1067 = vset.pattern.permute.xlu0 1
        %1068 = vperm.xlu0 %1067, %v411
        %v1069 = vpop.permute.xlu0 %1068
        %1071 = vset.pattern.permute.xlu0 1
        %1072 = vperm.xlu0 %1071, %v412
        %v1073 = vpop.permute.xlu0 %1072
        %1075 = vset.pattern.permute.xlu0 1
        %1076 = vperm.xlu0 %1075, %v413
        %v1077 = vpop.permute.xlu0 %1076
        %1079 = vset.pattern.permute.xlu0 1
        %1080 = vperm.xlu0 %1079, %v414
        %v1081 = vpop.permute.xlu0 %1080
        %1083 = vset.pattern.permute.xlu0 1
        %1084 = vperm.xlu0 %1083, %v415
        %v1085 = vpop.permute.xlu0 %1084
        %1087 = vset.pattern.permute.xlu0 1
        %1088 = vperm.xlu0 %1087, %v416
        %v1089 = vpop.permute.xlu0 %1088
        %1091 = vset.pattern.permute.xlu0 1
        %1092 = vperm.xlu0 %1091, %v417
        %v1093 = vpop.permute.xlu0 %1092
        %1095 = vset.pattern.permute.xlu0 1
        %1096 = vperm.xlu0 %1095, %v418
        %v1097 = vpop.permute.xlu0 %1096
        %1099 = vset.pattern.permute.xlu0 1
        %1100 = vperm.xlu0 %1099, %v419
        %v1101 = vpop.permute.xlu0 %1100
        %1103 = vset.pattern.permute.xlu0 1
        %1104 = vperm.xlu0 %1103, %v420
        %v1105 = vpop.permute.xlu0 %1104
        %1107 = vset.pattern.permute.xlu0 1
        %1108 = vperm.xlu0 %1107, %v421
        %v1109 = vpop.permute.xlu0 %1108
        %1111 = vset.pattern.permute.xlu0 1
        %1112 = vperm.xlu0 %1111, %v422
        %v1113 = vpop.permute.xlu0 %1112
        %1115 = vset.pattern.permute.xlu0 1
        %1116 = vperm.xlu0 %1115, %v423
        %v1117 = vpop.permute.xlu0 %1116
        %1119 = vset.pattern.permute.xlu0 1
        %1120 = vperm.xlu0 %1119, %v424
        %v1121 = vpop.permute.xlu0 %1120
        %1123 = vset.pattern.permute.xlu0 1
        %1124 = vperm.xlu0 %1123, %v425
        %v1125 = vpop.permute.xlu0 %1124
        %1127 = vset.pattern.permute.xlu0 1
        %1128 = vperm.xlu0 %1127, %v426
        %v1129 = vpop.permute.xlu0 %1128
        %1131 = vset.pattern.permute.xlu0 1
        %1132 = vperm.xlu0 %1131, %v427
        %v1133 = vpop.permute.xlu0 %1132
        %1135 = vset.pattern.permute.xlu0 1
        %1136 = vperm.xlu0 %1135, %v428
        %v1137 = vpop.permute.xlu0 %1136
        %v1139 = vlaneseq
        %v1140 = vshrl.u32 %v1139, 7
        %v1141 = vsub.s32 0, %v1140
        %v1142 = vrot.slane %v882, %v1141
        %v1143 = vmul.f32 %v885, %v1142
        %v1144 = vmul.f32 %v889, %v1142
        %v1145 = vmul.f32 %v893, %v1142
        %v1146 = vmul.f32 %v897, %v1142
        %v1147 = vmul.f32 %v901, %v1142
        %v1148 = vmul.f32 %v905, %v1142
        %v1149 = vmul.f32 %v909, %v1142
        %v1150 = vmul.f32 %v913, %v1142
        %v1151 = vmul.f32 %v917, %v1142
        %v1152 = vmul.f32 %v921, %v1142
        %v1153 = vmul.f32 %v925, %v1142
        %v1154 = vmul.f32 %v929, %v1142
        %v1155 = vmul.f32 %v933, %v1142
        %v1156 = vmul.f32 %v937, %v1142
        %v1157 = vmul.f32 %v941, %v1142
        %v1158 = vmul.f32 %v945, %v1142
        %v1159 = vmul.f32 %v949, %v1142
        %v1160 = vmul.f32 %v953, %v1142
        %v1161 = vmul.f32 %v957, %v1142
        %v1162 = vmul.f32 %v961, %v1142
        %v1163 = vmul.f32 %v965, %v1142
        %v1164 = vmul.f32 %v969, %v1142
        %v1165 = vmul.f32 %v973, %v1142
        %v1166 = vmul.f32 %v977, %v1142
        %v1167 = vmul.f32 %v981, %v1142
        %v1168 = vmul.f32 %v985, %v1142
        %v1169 = vmul.f32 %v989, %v1142
        %v1170 = vmul.f32 %v993, %v1142
        %v1171 = vmul.f32 %v997, %v1142
        %v1172 = vmul.f32 %v1001, %v1142
        %v1173 = vmul.f32 %v1005, %v1142
        %v1174 = vmul.f32 %v1009, %v1142
        %v1175 = vmul.f32 %v1013, %v1142
        %v1176 = vmul.f32 %v1017, %v1142
        %v1177 = vmul.f32 %v1021, %v1142
        %v1178 = vmul.f32 %v1025, %v1142
        %v1179 = vmul.f32 %v1029, %v1142
        %v1180 = vmul.f32 %v1033, %v1142
        %v1181 = vmul.f32 %v1037, %v1142
        %v1182 = vmul.f32 %v1041, %v1142
        %v1183 = vmul.f32 %v1045, %v1142
        %v1184 = vmul.f32 %v1049, %v1142
        %v1185 = vmul.f32 %v1053, %v1142
        %v1186 = vmul.f32 %v1057, %v1142
        %v1187 = vmul.f32 %v1061, %v1142
        %v1188 = vmul.f32 %v1065, %v1142
        %v1189 = vmul.f32 %v1069, %v1142
        %v1190 = vmul.f32 %v1073, %v1142
        %v1191 = vmul.f32 %v1077, %v1142
        %v1192 = vmul.f32 %v1081, %v1142
        %v1193 = vmul.f32 %v1085, %v1142
        %v1194 = vmul.f32 %v1089, %v1142
        %v1195 = vmul.f32 %v1093, %v1142
        %v1196 = vmul.f32 %v1097, %v1142
        %v1197 = vmul.f32 %v1101, %v1142
        %v1198 = vmul.f32 %v1105, %v1142
        %v1199 = vmul.f32 %v1109, %v1142
        %v1200 = vmul.f32 %v1113, %v1142
        %v1201 = vmul.f32 %v1117, %v1142
        %v1202 = vmul.f32 %v1121, %v1142
        %v1203 = vmul.f32 %v1125, %v1142
        %v1204 = vmul.f32 %v1129, %v1142
        %v1205 = vmul.f32 %v1133, %v1142
        %v1206 = vmul.f32 %v1137, %v1142
        %v1207 = vadd.f32 %v818, %v1143
        %v1208 = vadd.f32 %v819, %v1144
        %v1209 = vadd.f32 %v820, %v1145
        %v1210 = vadd.f32 %v821, %v1146
        %v1211 = vadd.f32 %v822, %v1147
        %v1212 = vadd.f32 %v823, %v1148
        %v1213 = vadd.f32 %v824, %v1149
        %v1214 = vadd.f32 %v825, %v1150
        %v1215 = vadd.f32 %v826, %v1151
        %v1216 = vadd.f32 %v827, %v1152
        %v1217 = vadd.f32 %v828, %v1153
        %v1218 = vadd.f32 %v829, %v1154
        %v1219 = vadd.f32 %v830, %v1155
        %v1220 = vadd.f32 %v831, %v1156
        %v1221 = vadd.f32 %v832, %v1157
        %v1222 = vadd.f32 %v833, %v1158
        %v1223 = vadd.f32 %v834, %v1159
        %v1224 = vadd.f32 %v835, %v1160
        %v1225 = vadd.f32 %v836, %v1161
        %v1226 = vadd.f32 %v837, %v1162
        %v1227 = vadd.f32 %v838, %v1163
        %v1228 = vadd.f32 %v839, %v1164
        %v1229 = vadd.f32 %v840, %v1165
        %v1230 = vadd.f32 %v841, %v1166
        %v1231 = vadd.f32 %v842, %v1167
        %v1232 = vadd.f32 %v843, %v1168
        %v1233 = vadd.f32 %v844, %v1169
        %v1234 = vadd.f32 %v845, %v1170
        %v1235 = vadd.f32 %v846, %v1171
        %v1236 = vadd.f32 %v847, %v1172
        %v1237 = vadd.f32 %v848, %v1173
        %v1238 = vadd.f32 %v849, %v1174
        %v1239 = vadd.f32 %v850, %v1175
        %v1240 = vadd.f32 %v851, %v1176
        %v1241 = vadd.f32 %v852, %v1177
        %v1242 = vadd.f32 %v853, %v1178
        %v1243 = vadd.f32 %v854, %v1179
        %v1244 = vadd.f32 %v855, %v1180
        %v1245 = vadd.f32 %v856, %v1181
        %v1246 = vadd.f32 %v857, %v1182
        %v1247 = vadd.f32 %v858, %v1183
        %v1248 = vadd.f32 %v859, %v1184
        %v1249 = vadd.f32 %v860, %v1185
        %v1250 = vadd.f32 %v861, %v1186
        %v1251 = vadd.f32 %v862, %v1187
        %v1252 = vadd.f32 %v863, %v1188
        %v1253 = vadd.f32 %v864, %v1189
        %v1254 = vadd.f32 %v865, %v1190
        %v1255 = vadd.f32 %v866, %v1191
        %v1256 = vadd.f32 %v867, %v1192
        %v1257 = vadd.f32 %v868, %v1193
        %v1258 = vadd.f32 %v869, %v1194
        %v1259 = vadd.f32 %v870, %v1195
        %v1260 = vadd.f32 %v871, %v1196
        %v1261 = vadd.f32 %v872, %v1197
        %v1262 = vadd.f32 %v873, %v1198
        %v1263 = vadd.f32 %v874, %v1199
        %v1264 = vadd.f32 %v875, %v1200
        %v1265 = vadd.f32 %v876, %v1201
        %v1266 = vadd.f32 %v877, %v1202
        %v1267 = vadd.f32 %v878, %v1203
        %v1268 = vadd.f32 %v879, %v1204
        %v1269 = vadd.f32 %v880, %v1205
        %v1270 = vadd.f32 %v881, %v1206
        %v1271 = vld [vmem:[%s1 + $0x2] sm:$0x1]
        %1272 = vset.pattern.permute.xlu0 2
        %1273 = vperm.xlu0 %1272, %v365
        %v1274 = vpop.permute.xlu0 %1273
        %1276 = vset.pattern.permute.xlu0 2
        %1277 = vperm.xlu0 %1276, %v366
        %v1278 = vpop.permute.xlu0 %1277
        %1280 = vset.pattern.permute.xlu0 2
        %1281 = vperm.xlu0 %1280, %v367
        %v1282 = vpop.permute.xlu0 %1281
        %1284 = vset.pattern.permute.xlu0 2
        %1285 = vperm.xlu0 %1284, %v368
        %v1286 = vpop.permute.xlu0 %1285
        %1288 = vset.pattern.permute.xlu0 2
        %1289 = vperm.xlu0 %1288, %v369
        %v1290 = vpop.permute.xlu0 %1289
        %1292 = vset.pattern.permute.xlu0 2
        %1293 = vperm.xlu0 %1292, %v370
        %v1294 = vpop.permute.xlu0 %1293
        %1296 = vset.pattern.permute.xlu0 2
        %1297 = vperm.xlu0 %1296, %v371
        %v1298 = vpop.permute.xlu0 %1297
        %1300 = vset.pattern.permute.xlu0 2
        %1301 = vperm.xlu0 %1300, %v372
        %v1302 = vpop.permute.xlu0 %1301
        %1304 = vset.pattern.permute.xlu0 2
        %1305 = vperm.xlu0 %1304, %v373
        %v1306 = vpop.permute.xlu0 %1305
        %1308 = vset.pattern.permute.xlu0 2
        %1309 = vperm.xlu0 %1308, %v374
        %v1310 = vpop.permute.xlu0 %1309
        %1312 = vset.pattern.permute.xlu0 2
        %1313 = vperm.xlu0 %1312, %v375
        %v1314 = vpop.permute.xlu0 %1313
        %1316 = vset.pattern.permute.xlu0 2
        %1317 = vperm.xlu0 %1316, %v376
        %v1318 = vpop.permute.xlu0 %1317
        %1320 = vset.pattern.permute.xlu0 2
        %1321 = vperm.xlu0 %1320, %v377
        %v1322 = vpop.permute.xlu0 %1321
        %1324 = vset.pattern.permute.xlu0 2
        %1325 = vperm.xlu0 %1324, %v378
        %v1326 = vpop.permute.xlu0 %1325
        %1328 = vset.pattern.permute.xlu0 2
        %1329 = vperm.xlu0 %1328, %v379
        %v1330 = vpop.permute.xlu0 %1329
        %1332 = vset.pattern.permute.xlu0 2
        %1333 = vperm.xlu0 %1332, %v380
        %v1334 = vpop.permute.xlu0 %1333
        %1336 = vset.pattern.permute.xlu0 2
        %1337 = vperm.xlu0 %1336, %v381
        %v1338 = vpop.permute.xlu0 %1337
        %1340 = vset.pattern.permute.xlu0 2
        %1341 = vperm.xlu0 %1340, %v382
        %v1342 = vpop.permute.xlu0 %1341
        %1344 = vset.pattern.permute.xlu0 2
        %1345 = vperm.xlu0 %1344, %v383
        %v1346 = vpop.permute.xlu0 %1345
        %1348 = vset.pattern.permute.xlu0 2
        %1349 = vperm.xlu0 %1348, %v384
        %v1350 = vpop.permute.xlu0 %1349
        %1352 = vset.pattern.permute.xlu0 2
        %1353 = vperm.xlu0 %1352, %v385
        %v1354 = vpop.permute.xlu0 %1353
        %1356 = vset.pattern.permute.xlu0 2
        %1357 = vperm.xlu0 %1356, %v386
        %v1358 = vpop.permute.xlu0 %1357
        %1360 = vset.pattern.permute.xlu0 2
        %1361 = vperm.xlu0 %1360, %v387
        %v1362 = vpop.permute.xlu0 %1361
        %1364 = vset.pattern.permute.xlu0 2
        %1365 = vperm.xlu0 %1364, %v388
        %v1366 = vpop.permute.xlu0 %1365
        %1368 = vset.pattern.permute.xlu0 2
        %1369 = vperm.xlu0 %1368, %v389
        %v1370 = vpop.permute.xlu0 %1369
        %1372 = vset.pattern.permute.xlu0 2
        %1373 = vperm.xlu0 %1372, %v390
        %v1374 = vpop.permute.xlu0 %1373
        %1376 = vset.pattern.permute.xlu0 2
        %1377 = vperm.xlu0 %1376, %v391
        %v1378 = vpop.permute.xlu0 %1377
        %1380 = vset.pattern.permute.xlu0 2
        %1381 = vperm.xlu0 %1380, %v392
        %v1382 = vpop.permute.xlu0 %1381
        %1384 = vset.pattern.permute.xlu0 2
        %1385 = vperm.xlu0 %1384, %v393
        %v1386 = vpop.permute.xlu0 %1385
        %1388 = vset.pattern.permute.xlu0 2
        %1389 = vperm.xlu0 %1388, %v394
        %v1390 = vpop.permute.xlu0 %1389
        %1392 = vset.pattern.permute.xlu0 2
        %1393 = vperm.xlu0 %1392, %v395
        %v1394 = vpop.permute.xlu0 %1393
        %1396 = vset.pattern.permute.xlu0 2
        %1397 = vperm.xlu0 %1396, %v396
        %v1398 = vpop.permute.xlu0 %1397
        %1400 = vset.pattern.permute.xlu0 2
        %1401 = vperm.xlu0 %1400, %v397
        %v1402 = vpop.permute.xlu0 %1401
        %1404 = vset.pattern.permute.xlu0 2
        %1405 = vperm.xlu0 %1404, %v398
        %v1406 = vpop.permute.xlu0 %1405
        %1408 = vset.pattern.permute.xlu0 2
        %1409 = vperm.xlu0 %1408, %v399
        %v1410 = vpop.permute.xlu0 %1409
        %1412 = vset.pattern.permute.xlu0 2
        %1413 = vperm.xlu0 %1412, %v400
        %v1414 = vpop.permute.xlu0 %1413
        %1416 = vset.pattern.permute.xlu0 2
        %1417 = vperm.xlu0 %1416, %v401
        %v1418 = vpop.permute.xlu0 %1417
        %1420 = vset.pattern.permute.xlu0 2
        %1421 = vperm.xlu0 %1420, %v402
        %v1422 = vpop.permute.xlu0 %1421
        %1424 = vset.pattern.permute.xlu0 2
        %1425 = vperm.xlu0 %1424, %v403
        %v1426 = vpop.permute.xlu0 %1425
        %1428 = vset.pattern.permute.xlu0 2
        %1429 = vperm.xlu0 %1428, %v404
        %v1430 = vpop.permute.xlu0 %1429
        %1432 = vset.pattern.permute.xlu0 2
        %1433 = vperm.xlu0 %1432, %v405
        %v1434 = vpop.permute.xlu0 %1433
        %1436 = vset.pattern.permute.xlu0 2
        %1437 = vperm.xlu0 %1436, %v406
        %v1438 = vpop.permute.xlu0 %1437
        %1440 = vset.pattern.permute.xlu0 2
        %1441 = vperm.xlu0 %1440, %v407
        %v1442 = vpop.permute.xlu0 %1441
        %1444 = vset.pattern.permute.xlu0 2
        %1445 = vperm.xlu0 %1444, %v408
        %v1446 = vpop.permute.xlu0 %1445
        %1448 = vset.pattern.permute.xlu0 2
        %1449 = vperm.xlu0 %1448, %v409
        %v1450 = vpop.permute.xlu0 %1449
        %1452 = vset.pattern.permute.xlu0 2
        %1453 = vperm.xlu0 %1452, %v410
        %v1454 = vpop.permute.xlu0 %1453
        %1456 = vset.pattern.permute.xlu0 2
        %1457 = vperm.xlu0 %1456, %v411
        %v1458 = vpop.permute.xlu0 %1457
        %1460 = vset.pattern.permute.xlu0 2
        %1461 = vperm.xlu0 %1460, %v412
        %v1462 = vpop.permute.xlu0 %1461
        %1464 = vset.pattern.permute.xlu0 2
        %1465 = vperm.xlu0 %1464, %v413
        %v1466 = vpop.permute.xlu0 %1465
        %1468 = vset.pattern.permute.xlu0 2
        %1469 = vperm.xlu0 %1468, %v414
        %v1470 = vpop.permute.xlu0 %1469
        %1472 = vset.pattern.permute.xlu0 2
        %1473 = vperm.xlu0 %1472, %v415
        %v1474 = vpop.permute.xlu0 %1473
        %1476 = vset.pattern.permute.xlu0 2
        %1477 = vperm.xlu0 %1476, %v416
        %v1478 = vpop.permute.xlu0 %1477
        %1480 = vset.pattern.permute.xlu0 2
        %1481 = vperm.xlu0 %1480, %v417
        %v1482 = vpop.permute.xlu0 %1481
        %1484 = vset.pattern.permute.xlu0 2
        %1485 = vperm.xlu0 %1484, %v418
        %v1486 = vpop.permute.xlu0 %1485
        %1488 = vset.pattern.permute.xlu0 2
        %1489 = vperm.xlu0 %1488, %v419
        %v1490 = vpop.permute.xlu0 %1489
        %1492 = vset.pattern.permute.xlu0 2
        %1493 = vperm.xlu0 %1492, %v420
        %v1494 = vpop.permute.xlu0 %1493
        %1496 = vset.pattern.permute.xlu0 2
        %1497 = vperm.xlu0 %1496, %v421
        %v1498 = vpop.permute.xlu0 %1497
        %1500 = vset.pattern.permute.xlu0 2
        %1501 = vperm.xlu0 %1500, %v422
        %v1502 = vpop.permute.xlu0 %1501
        %1504 = vset.pattern.permute.xlu0 2
        %1505 = vperm.xlu0 %1504, %v423
        %v1506 = vpop.permute.xlu0 %1505
        %1508 = vset.pattern.permute.xlu0 2
        %1509 = vperm.xlu0 %1508, %v424
        %v1510 = vpop.permute.xlu0 %1509
        %1512 = vset.pattern.permute.xlu0 2
        %1513 = vperm.xlu0 %1512, %v425
        %v1514 = vpop.permute.xlu0 %1513
        %1516 = vset.pattern.permute.xlu0 2
        %1517 = vperm.xlu0 %1516, %v426
        %v1518 = vpop.permute.xlu0 %1517
        %1520 = vset.pattern.permute.xlu0 2
        %1521 = vperm.xlu0 %1520, %v427
        %v1522 = vpop.permute.xlu0 %1521
        %1524 = vset.pattern.permute.xlu0 2
        %1525 = vperm.xlu0 %1524, %v428
        %v1526 = vpop.permute.xlu0 %1525
        %v1528 = vlaneseq
        %v1529 = vshrl.u32 %v1528, 7
        %v1530 = vsub.s32 0, %v1529
        %v1531 = vrot.slane %v1271, %v1530
        %v1532 = vmul.f32 %v1274, %v1531
        %v1533 = vmul.f32 %v1278, %v1531
        %v1534 = vmul.f32 %v1282, %v1531
        %v1535 = vmul.f32 %v1286, %v1531
        %v1536 = vmul.f32 %v1290, %v1531
        %v1537 = vmul.f32 %v1294, %v1531
        %v1538 = vmul.f32 %v1298, %v1531
        %v1539 = vmul.f32 %v1302, %v1531
        %v1540 = vmul.f32 %v1306, %v1531
        %v1541 = vmul.f32 %v1310, %v1531
        %v1542 = vmul.f32 %v1314, %v1531
        %v1543 = vmul.f32 %v1318, %v1531
        %v1544 = vmul.f32 %v1322, %v1531
        %v1545 = vmul.f32 %v1326, %v1531
        %v1546 = vmul.f32 %v1330, %v1531
        %v1547 = vmul.f32 %v1334, %v1531
        %v1548 = vmul.f32 %v1338, %v1531
        %v1549 = vmul.f32 %v1342, %v1531
        %v1550 = vmul.f32 %v1346, %v1531
        %v1551 = vmul.f32 %v1350, %v1531
        %v1552 = vmul.f32 %v1354, %v1531
        %v1553 = vmul.f32 %v1358, %v1531
        %v1554 = vmul.f32 %v1362, %v1531
        %v1555 = vmul.f32 %v1366, %v1531
        %v1556 = vmul.f32 %v1370, %v1531
        %v1557 = vmul.f32 %v1374, %v1531
        %v1558 = vmul.f32 %v1378, %v1531
        %v1559 = vmul.f32 %v1382, %v1531
        %v1560 = vmul.f32 %v1386, %v1531
        %v1561 = vmul.f32 %v1390, %v1531
        %v1562 = vmul.f32 %v1394, %v1531
        %v1563 = vmul.f32 %v1398, %v1531
        %v1564 = vmul.f32 %v1402, %v1531
        %v1565 = vmul.f32 %v1406, %v1531
        %v1566 = vmul.f32 %v1410, %v1531
        %v1567 = vmul.f32 %v1414, %v1531
        %v1568 = vmul.f32 %v1418, %v1531
        %v1569 = vmul.f32 %v1422, %v1531
        %v1570 = vmul.f32 %v1426, %v1531
        %v1571 = vmul.f32 %v1430, %v1531
        %v1572 = vmul.f32 %v1434, %v1531
        %v1573 = vmul.f32 %v1438, %v1531
        %v1574 = vmul.f32 %v1442, %v1531
        %v1575 = vmul.f32 %v1446, %v1531
        %v1576 = vmul.f32 %v1450, %v1531
        %v1577 = vmul.f32 %v1454, %v1531
        %v1578 = vmul.f32 %v1458, %v1531
        %v1579 = vmul.f32 %v1462, %v1531
        %v1580 = vmul.f32 %v1466, %v1531
        %v1581 = vmul.f32 %v1470, %v1531
        %v1582 = vmul.f32 %v1474, %v1531
        %v1583 = vmul.f32 %v1478, %v1531
        %v1584 = vmul.f32 %v1482, %v1531
        %v1585 = vmul.f32 %v1486, %v1531
        %v1586 = vmul.f32 %v1490, %v1531
        %v1587 = vmul.f32 %v1494, %v1531
        %v1588 = vmul.f32 %v1498, %v1531
        %v1589 = vmul.f32 %v1502, %v1531
        %v1590 = vmul.f32 %v1506, %v1531
        %v1591 = vmul.f32 %v1510, %v1531
        %v1592 = vmul.f32 %v1514, %v1531
        %v1593 = vmul.f32 %v1518, %v1531
        %v1594 = vmul.f32 %v1522, %v1531
        %v1595 = vmul.f32 %v1526, %v1531
        %v1596 = vadd.f32 %v1207, %v1532
        %v1597 = vadd.f32 %v1208, %v1533
        %v1598 = vadd.f32 %v1209, %v1534
        %v1599 = vadd.f32 %v1210, %v1535
        %v1600 = vadd.f32 %v1211, %v1536
        %v1601 = vadd.f32 %v1212, %v1537
        %v1602 = vadd.f32 %v1213, %v1538
        %v1603 = vadd.f32 %v1214, %v1539
        %v1604 = vadd.f32 %v1215, %v1540
        %v1605 = vadd.f32 %v1216, %v1541
        %v1606 = vadd.f32 %v1217, %v1542
        %v1607 = vadd.f32 %v1218, %v1543
        %v1608 = vadd.f32 %v1219, %v1544
        %v1609 = vadd.f32 %v1220, %v1545
        %v1610 = vadd.f32 %v1221, %v1546
        %v1611 = vadd.f32 %v1222, %v1547
        %v1612 = vadd.f32 %v1223, %v1548
        %v1613 = vadd.f32 %v1224, %v1549
        %v1614 = vadd.f32 %v1225, %v1550
        %v1615 = vadd.f32 %v1226, %v1551
        %v1616 = vadd.f32 %v1227, %v1552
        %v1617 = vadd.f32 %v1228, %v1553
        %v1618 = vadd.f32 %v1229, %v1554
        %v1619 = vadd.f32 %v1230, %v1555
        %v1620 = vadd.f32 %v1231, %v1556
        %v1621 = vadd.f32 %v1232, %v1557
        %v1622 = vadd.f32 %v1233, %v1558
        %v1623 = vadd.f32 %v1234, %v1559
        %v1624 = vadd.f32 %v1235, %v1560
        %v1625 = vadd.f32 %v1236, %v1561
        %v1626 = vadd.f32 %v1237, %v1562
        %v1627 = vadd.f32 %v1238, %v1563
        %v1628 = vadd.f32 %v1239, %v1564
        %v1629 = vadd.f32 %v1240, %v1565
        %v1630 = vadd.f32 %v1241, %v1566
        %v1631 = vadd.f32 %v1242, %v1567
        %v1632 = vadd.f32 %v1243, %v1568
        %v1633 = vadd.f32 %v1244, %v1569
        %v1634 = vadd.f32 %v1245, %v1570
        %v1635 = vadd.f32 %v1246, %v1571
        %v1636 = vadd.f32 %v1247, %v1572
        %v1637 = vadd.f32 %v1248, %v1573
        %v1638 = vadd.f32 %v1249, %v1574
        %v1639 = vadd.f32 %v1250, %v1575
        %v1640 = vadd.f32 %v1251, %v1576
        %v1641 = vadd.f32 %v1252, %v1577
        %v1642 = vadd.f32 %v1253, %v1578
        %v1643 = vadd.f32 %v1254, %v1579
        %v1644 = vadd.f32 %v1255, %v1580
        %v1645 = vadd.f32 %v1256, %v1581
        %v1646 = vadd.f32 %v1257, %v1582
        %v1647 = vadd.f32 %v1258, %v1583
        %v1648 = vadd.f32 %v1259, %v1584
        %v1649 = vadd.f32 %v1260, %v1585
        %v1650 = vadd.f32 %v1261, %v1586
        %v1651 = vadd.f32 %v1262, %v1587
        %v1652 = vadd.f32 %v1263, %v1588
        %v1653 = vadd.f32 %v1264, %v1589
        %v1654 = vadd.f32 %v1265, %v1590
        %v1655 = vadd.f32 %v1266, %v1591
        %v1656 = vadd.f32 %v1267, %v1592
        %v1657 = vadd.f32 %v1268, %v1593
        %v1658 = vadd.f32 %v1269, %v1594
        %v1659 = vadd.f32 %v1270, %v1595
        %v1660 = vld [vmem:[%s2] sm:$0x1]
        %v1662 = vlaneseq
        %v1663 = vshrl.u32 %v1662, 7
        %v1664 = vsub.s32 0, %v1663
        %v1665 = vrot.slane %v1660, %v1664
        %v1667 = vadd.f32 %v1596, %v1665
        %v1668 = vadd.f32 %v1597, %v1665
        %v1669 = vadd.f32 %v1598, %v1665
        %v1670 = vadd.f32 %v1599, %v1665
        %v1671 = vadd.f32 %v1600, %v1665
        %v1672 = vadd.f32 %v1601, %v1665
        %v1673 = vadd.f32 %v1602, %v1665
        %v1674 = vadd.f32 %v1603, %v1665
        %v1675 = vadd.f32 %v1604, %v1665
        %v1676 = vadd.f32 %v1605, %v1665
        %v1677 = vadd.f32 %v1606, %v1665
        %v1678 = vadd.f32 %v1607, %v1665
        %v1679 = vadd.f32 %v1608, %v1665
        %v1680 = vadd.f32 %v1609, %v1665
        %v1681 = vadd.f32 %v1610, %v1665
        %v1682 = vadd.f32 %v1611, %v1665
        %v1683 = vadd.f32 %v1612, %v1665
        %v1684 = vadd.f32 %v1613, %v1665
        %v1685 = vadd.f32 %v1614, %v1665
        %v1686 = vadd.f32 %v1615, %v1665
        %v1687 = vadd.f32 %v1616, %v1665
        %v1688 = vadd.f32 %v1617, %v1665
        %v1689 = vadd.f32 %v1618, %v1665
        %v1690 = vadd.f32 %v1619, %v1665
        %v1691 = vadd.f32 %v1620, %v1665
        %v1692 = vadd.f32 %v1621, %v1665
        %v1693 = vadd.f32 %v1622, %v1665
        %v1694 = vadd.f32 %v1623, %v1665
        %v1695 = vadd.f32 %v1624, %v1665
        %v1696 = vadd.f32 %v1625, %v1665
        %v1697 = vadd.f32 %v1626, %v1665
        %v1698 = vadd.f32 %v1627, %v1665
        %v1699 = vadd.f32 %v1628, %v1665
        %v1700 = vadd.f32 %v1629, %v1665
        %v1701 = vadd.f32 %v1630, %v1665
        %v1702 = vadd.f32 %v1631, %v1665
        %v1703 = vadd.f32 %v1632, %v1665
        %v1704 = vadd.f32 %v1633, %v1665
        %v1705 = vadd.f32 %v1634, %v1665
        %v1706 = vadd.f32 %v1635, %v1665
        %v1707 = vadd.f32 %v1636, %v1665
        %v1708 = vadd.f32 %v1637, %v1665
        %v1709 = vadd.f32 %v1638, %v1665
        %v1710 = vadd.f32 %v1639, %v1665
        %v1711 = vadd.f32 %v1640, %v1665
        %v1712 = vadd.f32 %v1641, %v1665
        %v1713 = vadd.f32 %v1642, %v1665
        %v1714 = vadd.f32 %v1643, %v1665
        %v1715 = vadd.f32 %v1644, %v1665
        %v1716 = vadd.f32 %v1645, %v1665
        %v1717 = vadd.f32 %v1646, %v1665
        %v1718 = vadd.f32 %v1647, %v1665
        %v1719 = vadd.f32 %v1648, %v1665
        %v1720 = vadd.f32 %v1649, %v1665
        %v1721 = vadd.f32 %v1650, %v1665
        %v1722 = vadd.f32 %v1651, %v1665
        %v1723 = vadd.f32 %v1652, %v1665
        %v1724 = vadd.f32 %v1653, %v1665
        %v1725 = vadd.f32 %v1654, %v1665
        %v1726 = vadd.f32 %v1655, %v1665
        %v1727 = vadd.f32 %v1656, %v1665
        %v1728 = vadd.f32 %v1657, %v1665
        %v1729 = vadd.f32 %v1658, %v1665
        %v1730 = vadd.f32 %v1659, %v1665
        %v1731 = vmax.f32 %v1667, 0.0
        %v1732 = vmax.f32 %v1668, 0.0
        %v1733 = vmax.f32 %v1669, 0.0
        %v1734 = vmax.f32 %v1670, 0.0
        %v1735 = vmax.f32 %v1671, 0.0
        %v1736 = vmax.f32 %v1672, 0.0
        %v1737 = vmax.f32 %v1673, 0.0
        %v1738 = vmax.f32 %v1674, 0.0
        %v1739 = vmax.f32 %v1675, 0.0
        %v1740 = vmax.f32 %v1676, 0.0
        %v1741 = vmax.f32 %v1677, 0.0
        %v1742 = vmax.f32 %v1678, 0.0
        %v1743 = vmax.f32 %v1679, 0.0
        %v1744 = vmax.f32 %v1680, 0.0
        %v1745 = vmax.f32 %v1681, 0.0
        %v1746 = vmax.f32 %v1682, 0.0
        %v1747 = vmax.f32 %v1683, 0.0
        %v1748 = vmax.f32 %v1684, 0.0
        %v1749 = vmax.f32 %v1685, 0.0
        %v1750 = vmax.f32 %v1686, 0.0
        %v1751 = vmax.f32 %v1687, 0.0
        %v1752 = vmax.f32 %v1688, 0.0
        %v1753 = vmax.f32 %v1689, 0.0
        %v1754 = vmax.f32 %v1690, 0.0
        %v1755 = vmax.f32 %v1691, 0.0
        %v1756 = vmax.f32 %v1692, 0.0
        %v1757 = vmax.f32 %v1693, 0.0
        %v1758 = vmax.f32 %v1694, 0.0
        %v1759 = vmax.f32 %v1695, 0.0
        %v1760 = vmax.f32 %v1696, 0.0
        %v1761 = vmax.f32 %v1697, 0.0
        %v1762 = vmax.f32 %v1698, 0.0
        %v1763 = vmax.f32 %v1699, 0.0
        %v1764 = vmax.f32 %v1700, 0.0
        %v1765 = vmax.f32 %v1701, 0.0
        %v1766 = vmax.f32 %v1702, 0.0
        %v1767 = vmax.f32 %v1703, 0.0
        %v1768 = vmax.f32 %v1704, 0.0
        %v1769 = vmax.f32 %v1705, 0.0
        %v1770 = vmax.f32 %v1706, 0.0
        %v1771 = vmax.f32 %v1707, 0.0
        %v1772 = vmax.f32 %v1708, 0.0
        %v1773 = vmax.f32 %v1709, 0.0
        %v1774 = vmax.f32 %v1710, 0.0
        %v1775 = vmax.f32 %v1711, 0.0
        %v1776 = vmax.f32 %v1712, 0.0
        %v1777 = vmax.f32 %v1713, 0.0
        %v1778 = vmax.f32 %v1714, 0.0
        %v1779 = vmax.f32 %v1715, 0.0
        %v1780 = vmax.f32 %v1716, 0.0
        %v1781 = vmax.f32 %v1717, 0.0
        %v1782 = vmax.f32 %v1718, 0.0
        %v1783 = vmax.f32 %v1719, 0.0
        %v1784 = vmax.f32 %v1720, 0.0
        %v1785 = vmax.f32 %v1721, 0.0
        %v1786 = vmax.f32 %v1722, 0.0
        %v1787 = vmax.f32 %v1723, 0.0
        %v1788 = vmax.f32 %v1724, 0.0
        %v1789 = vmax.f32 %v1725, 0.0
        %v1790 = vmax.f32 %v1726, 0.0
        %v1791 = vmax.f32 %v1727, 0.0
        %v1792 = vmax.f32 %v1728, 0.0
        %v1793 = vmax.f32 %v1729, 0.0
        %v1794 = vmax.f32 %v1730, 0.0
        %v1795 = vpack.c.bf16 %v1732, %v1731
        %v1796 = vpack.c.bf16 %v1734, %v1733
        %v1797 = vpack.c.bf16 %v1736, %v1735
        %v1798 = vpack.c.bf16 %v1738, %v1737
        %v1799 = vpack.c.bf16 %v1740, %v1739
        %v1800 = vpack.c.bf16 %v1742, %v1741
        %v1801 = vpack.c.bf16 %v1744, %v1743
        %v1802 = vpack.c.bf16 %v1746, %v1745
        %v1803 = vpack.c.bf16 %v1748, %v1747
        %v1804 = vpack.c.bf16 %v1750, %v1749
        %v1805 = vpack.c.bf16 %v1752, %v1751
        %v1806 = vpack.c.bf16 %v1754, %v1753
        %v1807 = vpack.c.bf16 %v1756, %v1755
        %v1808 = vpack.c.bf16 %v1758, %v1757
        %v1809 = vpack.c.bf16 %v1760, %v1759
        %v1810 = vpack.c.bf16 %v1762, %v1761
        %v1811 = vpack.c.bf16 %v1764, %v1763
        %v1812 = vpack.c.bf16 %v1766, %v1765
        %v1813 = vpack.c.bf16 %v1768, %v1767
        %v1814 = vpack.c.bf16 %v1770, %v1769
        %v1815 = vpack.c.bf16 %v1772, %v1771
        %v1816 = vpack.c.bf16 %v1774, %v1773
        %v1817 = vpack.c.bf16 %v1776, %v1775
        %v1818 = vpack.c.bf16 %v1778, %v1777
        %v1819 = vpack.c.bf16 %v1780, %v1779
        %v1820 = vpack.c.bf16 %v1782, %v1781
        %v1821 = vpack.c.bf16 %v1784, %v1783
        %v1822 = vpack.c.bf16 %v1786, %v1785
        %v1823 = vpack.c.bf16 %v1788, %v1787
        %v1824 = vpack.c.bf16 %v1790, %v1789
        %v1825 = vpack.c.bf16 %v1792, %v1791
        %v1826 = vpack.c.bf16 %v1794, %v1793
        %v1827 = vld [vmem:[%s3] sm:$0xff]
        %v1828 = vld [vmem:[%s3 + $0x8] sm:$0xff]
        %v1829 = vld [vmem:[%s3 + $0x10] sm:$0xff]
        %v1830 = vld [vmem:[%s3 + $0x18] sm:$0xff]
        %v1831 = vld [vmem:[%s3 + $0x20] sm:$0xff]
        %v1832 = vld [vmem:[%s3 + $0x28] sm:$0xff]
        %v1833 = vld [vmem:[%s3 + $0x30] sm:$0xff]
        %v1834 = vld [vmem:[%s3 + $0x38] sm:$0xff]
        %v1835 = vld [vmem:[%s3 + $0x40] sm:$0xff]
        %v1836 = vld [vmem:[%s3 + $0x48] sm:$0xff]
        %v1837 = vld [vmem:[%s3 + $0x50] sm:$0xff]
        %v1838 = vld [vmem:[%s3 + $0x58] sm:$0xff]
        %v1839 = vld [vmem:[%s3 + $0x60] sm:$0xff]
        %v1840 = vld [vmem:[%s3 + $0x68] sm:$0xff]
        %v1841 = vld [vmem:[%s3 + $0x70] sm:$0xff]
        %v1842 = vld [vmem:[%s3 + $0x78] sm:$0xff]
        %v1843 = vld [vmem:[%s4] sm:$0x3]
        %v1845 = vlaneseq
        %v1846 = vshrl.u32 %v1845, 7
        %v1847 = vsub.s32 0, %v1846
        %v1848 = vrot.slane %v1843, %v1847
        %v1849 = vlaneseq
        %v1850 = vshrl.u32 %v1849, 7
        %v1851 = vsub.s32 1, %v1850
        %v1852 = vrot.slane %v1843, %v1851
        %v1871 = vunpack.c.l.b16 %v1827
        %v1872 = vunpack.c.h.b16 %v1827
        %v1873 = vunpack.c.l.b16 %v1828
        %v1874 = vunpack.c.h.b16 %v1828
        %v1875 = vunpack.c.l.b16 %v1829
        %v1876 = vunpack.c.h.b16 %v1829
        %v1877 = vunpack.c.l.b16 %v1830
        %v1878 = vunpack.c.h.b16 %v1830
        %v1879 = vunpack.c.l.b16 %v1831
        %v1880 = vunpack.c.h.b16 %v1831
        %v1881 = vunpack.c.l.b16 %v1832
        %v1882 = vunpack.c.h.b16 %v1832
        %v1883 = vunpack.c.l.b16 %v1833
        %v1884 = vunpack.c.h.b16 %v1833
        %v1885 = vunpack.c.l.b16 %v1834
        %v1886 = vunpack.c.h.b16 %v1834
        %v1887 = vunpack.c.l.b16 %v1835
        %v1888 = vunpack.c.h.b16 %v1835
        %v1889 = vunpack.c.l.b16 %v1836
        %v1890 = vunpack.c.h.b16 %v1836
        %v1891 = vunpack.c.l.b16 %v1837
        %v1892 = vunpack.c.h.b16 %v1837
        %v1893 = vunpack.c.l.b16 %v1838
        %v1894 = vunpack.c.h.b16 %v1838
        %v1895 = vunpack.c.l.b16 %v1839
        %v1896 = vunpack.c.h.b16 %v1839
        %v1897 = vunpack.c.l.b16 %v1840
        %v1898 = vunpack.c.h.b16 %v1840
        %v1899 = vunpack.c.l.b16 %v1841
        %v1900 = vunpack.c.h.b16 %v1841
        %v1901 = vunpack.c.l.b16 %v1842
        %v1902 = vunpack.c.h.b16 %v1842
        %v1903 = vpack.c.b16 %v1873, %v1871
        %v1904 = vpack.c.b16 %v1874, %v1872
        %v1905 = vpack.c.b16 %v1877, %v1875
        %v1906 = vpack.c.b16 %v1878, %v1876
        %v1907 = vpack.c.b16 %v1881, %v1879
        %v1908 = vpack.c.b16 %v1882, %v1880
        %v1909 = vpack.c.b16 %v1885, %v1883
        %v1910 = vpack.c.b16 %v1886, %v1884
        %v1911 = vpack.c.b16 %v1889, %v1887
        %v1912 = vpack.c.b16 %v1890, %v1888
        %v1913 = vpack.c.b16 %v1893, %v1891
        %v1914 = vpack.c.b16 %v1894, %v1892
        %v1915 = vpack.c.b16 %v1897, %v1895
        %v1916 = vpack.c.b16 %v1898, %v1896
        %v1917 = vpack.c.b16 %v1901, %v1899
        %v1918 = vpack.c.b16 %v1902, %v1900
        %1935 = vmatprep.subr.bf16.mxu0 %v1918
        %1936 = vmatpush1.bf16.msra.mxu0 %v1917
        %1937 = vmatprep.subr.bf16.mxu0 %v1916
        %1938 = vmatpush1.bf16.msra.mxu0 %v1915
        %1939 = vmatprep.subr.bf16.mxu0 %v1914
        %1940 = vmatpush1.bf16.msra.mxu0 %v1913
        %1941 = vmatprep.subr.bf16.mxu0 %v1912
        %1942 = vmatpush1.bf16.msra.mxu0 %v1911
        %1943 = vmatprep.subr.bf16.mxu0 %v1910
        %1944 = vmatpush1.bf16.msra.mxu0 %v1909
        %1945 = vmatprep.subr.bf16.mxu0 %v1908
        %1946 = vmatpush1.bf16.msra.mxu0 %v1907
        %1947 = vmatprep.subr.bf16.mxu0 %v1906
        %1948 = vmatpush1.bf16.msra.mxu0 %v1905
        %1949 = vmatprep.subr.bf16.mxu0 %v1904
        %1950 = vmatpush1.bf16.msra.mxu0 %v1903
        %1951 = vmatprep.subr.bf16.mxu0 0
        %1952 = vmatpush2.bf16.msra.mxu0 0
        %1953 = vmatprep.subr.bf16.mxu0 0
        %1954 = vmatpush2.bf16.msra.mxu0 0
        %1955 = vmatprep.subr.bf16.mxu0 0
        %1956 = vmatpush2.bf16.msra.mxu0 0
        %1957 = vmatprep.subr.bf16.mxu0 0
        %1958 = vmatpush2.bf16.msra.mxu0 0
        %1959 = vmatprep.subr.bf16.mxu0 0
        %1960 = vmatpush2.bf16.msra.mxu0 0
        %1961 = vmatprep.subr.bf16.mxu0 0
        %1962 = vmatpush2.bf16.msra.mxu0 0
        %1963 = vmatprep.subr.bf16.mxu0 0
        %1964 = vmatpush2.bf16.msra.mxu0 0
        %1965 = vmatprep.subr.bf16.mxu0 0
        %1966 = vmatpush2.bf16.msra.mxu0 0
        %1967 = vmatprep.mubr.bf16.mxu0 0
        %1968 = vmatmul.mubr.bf16.gmra.mxu0 %v1795
        %v1969 = vpop.f32.mrf.mxu0
        %v1970 = vadd.f32 %v1848, %v1969
        %v1971 = vpop.f32.mrf.mxu0
        %v1972 = vadd.f32 %v1852, %v1971
        %v1973 = vpop.f32.mrf.mxu0
        %v1974 = vadd.f32 %v1848, %v1973
        %v1975 = vpop.f32.mrf.mxu0
        %v1976 = vadd.f32 %v1852, %v1975
        %1977 = vmatprep.mubr.bf16.mxu0 0
        %1978 = vmatmul.mubr.bf16.gmra.mxu0 %v1796
        %v1979 = vpop.f32.mrf.mxu0
        %v1980 = vadd.f32 %v1848, %v1979
        %v1981 = vpop.f32.mrf.mxu0
        %v1982 = vadd.f32 %v1852, %v1981
        %v1983 = vpop.f32.mrf.mxu0
        %v1984 = vadd.f32 %v1848, %v1983
        %v1985 = vpop.f32.mrf.mxu0
        %v1986 = vadd.f32 %v1852, %v1985
        %1987 = vmatprep.mubr.bf16.mxu0 0
        %1988 = vmatmul.mubr.bf16.gmra.mxu0 %v1797
        %v1989 = vpop.f32.mrf.mxu0
        %v1990 = vadd.f32 %v1848, %v1989
        %v1991 = vpop.f32.mrf.mxu0
        %v1992 = vadd.f32 %v1852, %v1991
        %v1993 = vpop.f32.mrf.mxu0
        %v1994 = vadd.f32 %v1848, %v1993
        %v1995 = vpop.f32.mrf.mxu0
        %v1996 = vadd.f32 %v1852, %v1995
        %1997 = vmatprep.mubr.bf16.mxu0 0
        %1998 = vmatmul.mubr.bf16.gmra.mxu0 %v1798
        %v1999 = vpop.f32.mrf.mxu0
        %v2000 = vadd.f32 %v1848, %v1999
        %v2001 = vpop.f32.mrf.mxu0
        %v2002 = vadd.f32 %v1852, %v2001
        %v2003 = vpop.f32.mrf.mxu0
        %v2004 = vadd.f32 %v1848, %v2003
        %v2005 = vpop.f32.mrf.mxu0
        %v2006 = vadd.f32 %v1852, %v2005
        %2007 = vmatprep.mubr.bf16.mxu0 0
        %2008 = vmatmul.mubr.bf16.gmra.mxu0 %v1799
        %v2009 = vpop.f32.mrf.mxu0
        %v2010 = vadd.f32 %v1848, %v2009
        %v2011 = vpop.f32.mrf.mxu0
        %v2012 = vadd.f32 %v1852, %v2011
        %v2013 = vpop.f32.mrf.mxu0
        %v2014 = vadd.f32 %v1848, %v2013
        %v2015 = vpop.f32.mrf.mxu0
        %v2016 = vadd.f32 %v1852, %v2015
        %2017 = vmatprep.mubr.bf16.mxu0 0
        %2018 = vmatmul.mubr.bf16.gmra.mxu0 %v1800
        %v2019 = vpop.f32.mrf.mxu0
        %v2020 = vadd.f32 %v1848, %v2019
        %v2021 = vpop.f32.mrf.mxu0
        %v2022 = vadd.f32 %v1852, %v2021
        %v2023 = vpop.f32.mrf.mxu0
        %v2024 = vadd.f32 %v1848, %v2023
        %v2025 = vpop.f32.mrf.mxu0
        %v2026 = vadd.f32 %v1852, %v2025
        %2027 = vmatprep.mubr.bf16.mxu0 0
        %2028 = vmatmul.mubr.bf16.gmra.mxu0 %v1801
        %v2029 = vpop.f32.mrf.mxu0
        %v2030 = vadd.f32 %v1848, %v2029
        %v2031 = vpop.f32.mrf.mxu0
        %v2032 = vadd.f32 %v1852, %v2031
        %v2033 = vpop.f32.mrf.mxu0
        %v2034 = vadd.f32 %v1848, %v2033
        %v2035 = vpop.f32.mrf.mxu0
        %v2036 = vadd.f32 %v1852, %v2035
        %2037 = vmatprep.mubr.bf16.mxu0 0
        %2038 = vmatmul.mubr.bf16.gmra.mxu0 %v1802
        %v2039 = vpop.f32.mrf.mxu0
        %v2040 = vadd.f32 %v1848, %v2039
        %v2041 = vpop.f32.mrf.mxu0
        %v2042 = vadd.f32 %v1852, %v2041
        %v2043 = vpop.f32.mrf.mxu0
        %v2044 = vadd.f32 %v1848, %v2043
        %v2045 = vpop.f32.mrf.mxu0
        %v2046 = vadd.f32 %v1852, %v2045
        %2047 = vmatprep.mubr.bf16.mxu0 0
        %2048 = vmatmul.mubr.bf16.gmra.mxu0 %v1803
        %v2049 = vpop.f32.mrf.mxu0
        %v2050 = vadd.f32 %v1848, %v2049
        %v2051 = vpop.f32.mrf.mxu0
        %v2052 = vadd.f32 %v1852, %v2051
        %v2053 = vpop.f32.mrf.mxu0
        %v2054 = vadd.f32 %v1848, %v2053
        %v2055 = vpop.f32.mrf.mxu0
        %v2056 = vadd.f32 %v1852, %v2055
        %2057 = vmatprep.mubr.bf16.mxu0 0
        %2058 = vmatmul.mubr.bf16.gmra.mxu0 %v1804
        %v2059 = vpop.f32.mrf.mxu0
        %v2060 = vadd.f32 %v1848, %v2059
        %v2061 = vpop.f32.mrf.mxu0
        %v2062 = vadd.f32 %v1852, %v2061
        %v2063 = vpop.f32.mrf.mxu0
        %v2064 = vadd.f32 %v1848, %v2063
        %v2065 = vpop.f32.mrf.mxu0
        %v2066 = vadd.f32 %v1852, %v2065
        %2067 = vmatprep.mubr.bf16.mxu0 0
        %2068 = vmatmul.mubr.bf16.gmra.mxu0 %v1805
        %v2069 = vpop.f32.mrf.mxu0
        %v2070 = vadd.f32 %v1848, %v2069
        %v2071 = vpop.f32.mrf.mxu0
        %v2072 = vadd.f32 %v1852, %v2071
        %v2073 = vpop.f32.mrf.mxu0
        %v2074 = vadd.f32 %v1848, %v2073
        %v2075 = vpop.f32.mrf.mxu0
        %v2076 = vadd.f32 %v1852, %v2075
        %2077 = vmatprep.mubr.bf16.mxu0 0
        %2078 = vmatmul.mubr.bf16.gmra.mxu0 %v1806
        %v2079 = vpop.f32.mrf.mxu0
        %v2080 = vadd.f32 %v1848, %v2079
        %v2081 = vpop.f32.mrf.mxu0
        %v2082 = vadd.f32 %v1852, %v2081
        %v2083 = vpop.f32.mrf.mxu0
        %v2084 = vadd.f32 %v1848, %v2083
        %v2085 = vpop.f32.mrf.mxu0
        %v2086 = vadd.f32 %v1852, %v2085
        %2087 = vmatprep.mubr.bf16.mxu0 0
        %2088 = vmatmul.mubr.bf16.gmra.mxu0 %v1807
        %v2089 = vpop.f32.mrf.mxu0
        %v2090 = vadd.f32 %v1848, %v2089
        %v2091 = vpop.f32.mrf.mxu0
        %v2092 = vadd.f32 %v1852, %v2091
        %v2093 = vpop.f32.mrf.mxu0
        %v2094 = vadd.f32 %v1848, %v2093
        %v2095 = vpop.f32.mrf.mxu0
        %v2096 = vadd.f32 %v1852, %v2095
        %2097 = vmatprep.mubr.bf16.mxu0 0
        %2098 = vmatmul.mubr.bf16.gmra.mxu0 %v1808
        %v2099 = vpop.f32.mrf.mxu0
        %v2100 = vadd.f32 %v1848, %v2099
        %v2101 = vpop.f32.mrf.mxu0
        %v2102 = vadd.f32 %v1852, %v2101
        %v2103 = vpop.f32.mrf.mxu0
        %v2104 = vadd.f32 %v1848, %v2103
        %v2105 = vpop.f32.mrf.mxu0
        %v2106 = vadd.f32 %v1852, %v2105
        %2107 = vmatprep.mubr.bf16.mxu0 0
        %2108 = vmatmul.mubr.bf16.gmra.mxu0 %v1809
        %v2109 = vpop.f32.mrf.mxu0
        %v2110 = vadd.f32 %v1848, %v2109
        %v2111 = vpop.f32.mrf.mxu0
        %v2112 = vadd.f32 %v1852, %v2111
        %v2113 = vpop.f32.mrf.mxu0
        %v2114 = vadd.f32 %v1848, %v2113
        %v2115 = vpop.f32.mrf.mxu0
        %v2116 = vadd.f32 %v1852, %v2115
        %2117 = vmatprep.mubr.bf16.mxu0 0
        %2118 = vmatmul.mubr.bf16.gmra.mxu0 %v1810
        %v2119 = vpop.f32.mrf.mxu0
        %v2120 = vadd.f32 %v1848, %v2119
        %v2121 = vpop.f32.mrf.mxu0
        %v2122 = vadd.f32 %v1852, %v2121
        %v2123 = vpop.f32.mrf.mxu0
        %v2124 = vadd.f32 %v1848, %v2123
        %v2125 = vpop.f32.mrf.mxu0
        %v2126 = vadd.f32 %v1852, %v2125
        %2127 = vmatprep.mubr.bf16.mxu0 0
        %2128 = vmatmul.mubr.bf16.gmra.mxu0 %v1811
        %v2129 = vpop.f32.mrf.mxu0
        %v2130 = vadd.f32 %v1848, %v2129
        %v2131 = vpop.f32.mrf.mxu0
        %v2132 = vadd.f32 %v1852, %v2131
        %v2133 = vpop.f32.mrf.mxu0
        %v2134 = vadd.f32 %v1848, %v2133
        %v2135 = vpop.f32.mrf.mxu0
        %v2136 = vadd.f32 %v1852, %v2135
        %2137 = vmatprep.mubr.bf16.mxu0 0
        %2138 = vmatmul.mubr.bf16.gmra.mxu0 %v1812
        %v2139 = vpop.f32.mrf.mxu0
        %v2140 = vadd.f32 %v1848, %v2139
        %v2141 = vpop.f32.mrf.mxu0
        %v2142 = vadd.f32 %v1852, %v2141
        %v2143 = vpop.f32.mrf.mxu0
        %v2144 = vadd.f32 %v1848, %v2143
        %v2145 = vpop.f32.mrf.mxu0
        %v2146 = vadd.f32 %v1852, %v2145
        %2147 = vmatprep.mubr.bf16.mxu0 0
        %2148 = vmatmul.mubr.bf16.gmra.mxu0 %v1813
        %v2149 = vpop.f32.mrf.mxu0
        %v2150 = vadd.f32 %v1848, %v2149
        %v2151 = vpop.f32.mrf.mxu0
        %v2152 = vadd.f32 %v1852, %v2151
        %v2153 = vpop.f32.mrf.mxu0
        %v2154 = vadd.f32 %v1848, %v2153
        %v2155 = vpop.f32.mrf.mxu0
        %v2156 = vadd.f32 %v1852, %v2155
        %2157 = vmatprep.mubr.bf16.mxu0 0
        %2158 = vmatmul.mubr.bf16.gmra.mxu0 %v1814
        %v2159 = vpop.f32.mrf.mxu0
        %v2160 = vadd.f32 %v1848, %v2159
        %v2161 = vpop.f32.mrf.mxu0
        %v2162 = vadd.f32 %v1852, %v2161
        %v2163 = vpop.f32.mrf.mxu0
        %v2164 = vadd.f32 %v1848, %v2163
        %v2165 = vpop.f32.mrf.mxu0
        %v2166 = vadd.f32 %v1852, %v2165
        %2167 = vmatprep.mubr.bf16.mxu0 0
        %2168 = vmatmul.mubr.bf16.gmra.mxu0 %v1815
        %v2169 = vpop.f32.mrf.mxu0
        %v2170 = vadd.f32 %v1848, %v2169
        %v2171 = vpop.f32.mrf.mxu0
        %v2172 = vadd.f32 %v1852, %v2171
        %v2173 = vpop.f32.mrf.mxu0
        %v2174 = vadd.f32 %v1848, %v2173
        %v2175 = vpop.f32.mrf.mxu0
        %v2176 = vadd.f32 %v1852, %v2175
        %2177 = vmatprep.mubr.bf16.mxu0 0
        %2178 = vmatmul.mubr.bf16.gmra.mxu0 %v1816
        %v2179 = vpop.f32.mrf.mxu0
        %v2180 = vadd.f32 %v1848, %v2179
        %v2181 = vpop.f32.mrf.mxu0
        %v2182 = vadd.f32 %v1852, %v2181
        %v2183 = vpop.f32.mrf.mxu0
        %v2184 = vadd.f32 %v1848, %v2183
        %v2185 = vpop.f32.mrf.mxu0
        %v2186 = vadd.f32 %v1852, %v2185
        %2187 = vmatprep.mubr.bf16.mxu0 0
        %2188 = vmatmul.mubr.bf16.gmra.mxu0 %v1817
        %v2189 = vpop.f32.mrf.mxu0
        %v2190 = vadd.f32 %v1848, %v2189
        %v2191 = vpop.f32.mrf.mxu0
        %v2192 = vadd.f32 %v1852, %v2191
        %v2193 = vpop.f32.mrf.mxu0
        %v2194 = vadd.f32 %v1848, %v2193
        %v2195 = vpop.f32.mrf.mxu0
        %v2196 = vadd.f32 %v1852, %v2195
        %2197 = vmatprep.mubr.bf16.mxu0 0
        %2198 = vmatmul.mubr.bf16.gmra.mxu0 %v1818
        %v2199 = vpop.f32.mrf.mxu0
        %v2200 = vadd.f32 %v1848, %v2199
        %v2201 = vpop.f32.mrf.mxu0
        %v2202 = vadd.f32 %v1852, %v2201
        %v2203 = vpop.f32.mrf.mxu0
        %v2204 = vadd.f32 %v1848, %v2203
        %v2205 = vpop.f32.mrf.mxu0
        %v2206 = vadd.f32 %v1852, %v2205
        %2207 = vmatprep.mubr.bf16.mxu0 0
        %2208 = vmatmul.mubr.bf16.gmra.mxu0 %v1819
        %v2209 = vpop.f32.mrf.mxu0
        %v2210 = vadd.f32 %v1848, %v2209
        %v2211 = vpop.f32.mrf.mxu0
        %v2212 = vadd.f32 %v1852, %v2211
        %v2213 = vpop.f32.mrf.mxu0
        %v2214 = vadd.f32 %v1848, %v2213
        %v2215 = vpop.f32.mrf.mxu0
        %v2216 = vadd.f32 %v1852, %v2215
        %2217 = vmatprep.mubr.bf16.mxu0 0
        %2218 = vmatmul.mubr.bf16.gmra.mxu0 %v1820
        %v2219 = vpop.f32.mrf.mxu0
        %v2220 = vadd.f32 %v1848, %v2219
        %v2221 = vpop.f32.mrf.mxu0
        %v2222 = vadd.f32 %v1852, %v2221
        %v2223 = vpop.f32.mrf.mxu0
        %v2224 = vadd.f32 %v1848, %v2223
        %v2225 = vpop.f32.mrf.mxu0
        %v2226 = vadd.f32 %v1852, %v2225
        %2227 = vmatprep.mubr.bf16.mxu0 0
        %2228 = vmatmul.mubr.bf16.gmra.mxu0 %v1821
        %v2229 = vpop.f32.mrf.mxu0
        %v2230 = vadd.f32 %v1848, %v2229
        %v2231 = vpop.f32.mrf.mxu0
        %v2232 = vadd.f32 %v1852, %v2231
        %v2233 = vpop.f32.mrf.mxu0
        %v2234 = vadd.f32 %v1848, %v2233
        %v2235 = vpop.f32.mrf.mxu0
        %v2236 = vadd.f32 %v1852, %v2235
        %2237 = vmatprep.mubr.bf16.mxu0 0
        %2238 = vmatmul.mubr.bf16.gmra.mxu0 %v1822
        %v2239 = vpop.f32.mrf.mxu0
        %v2240 = vadd.f32 %v1848, %v2239
        %v2241 = vpop.f32.mrf.mxu0
        %v2242 = vadd.f32 %v1852, %v2241
        %v2243 = vpop.f32.mrf.mxu0
        %v2244 = vadd.f32 %v1848, %v2243
        %v2245 = vpop.f32.mrf.mxu0
        %v2246 = vadd.f32 %v1852, %v2245
        %2247 = vmatprep.mubr.bf16.mxu0 0
        %2248 = vmatmul.mubr.bf16.gmra.mxu0 %v1823
        %v2249 = vpop.f32.mrf.mxu0
        %v2250 = vadd.f32 %v1848, %v2249
        %v2251 = vpop.f32.mrf.mxu0
        %v2252 = vadd.f32 %v1852, %v2251
        %v2253 = vpop.f32.mrf.mxu0
        %v2254 = vadd.f32 %v1848, %v2253
        %v2255 = vpop.f32.mrf.mxu0
        %v2256 = vadd.f32 %v1852, %v2255
        %2257 = vmatprep.mubr.bf16.mxu0 0
        %2258 = vmatmul.mubr.bf16.gmra.mxu0 %v1824
        %v2259 = vpop.f32.mrf.mxu0
        %v2260 = vadd.f32 %v1848, %v2259
        %v2261 = vpop.f32.mrf.mxu0
        %v2262 = vadd.f32 %v1852, %v2261
        %v2263 = vpop.f32.mrf.mxu0
        %v2264 = vadd.f32 %v1848, %v2263
        %v2265 = vpop.f32.mrf.mxu0
        %v2266 = vadd.f32 %v1852, %v2265
        %2267 = vmatprep.mubr.bf16.mxu0 0
        %2268 = vmatmul.mubr.bf16.gmra.mxu0 %v1825
        %v2269 = vpop.f32.mrf.mxu0
        %v2270 = vadd.f32 %v1848, %v2269
        %v2271 = vpop.f32.mrf.mxu0
        %v2272 = vadd.f32 %v1852, %v2271
        %v2273 = vpop.f32.mrf.mxu0
        %v2274 = vadd.f32 %v1848, %v2273
        %v2275 = vpop.f32.mrf.mxu0
        %v2276 = vadd.f32 %v1852, %v2275
        %2277 = vmatprep.mubr.bf16.mxu0 0
        %2278 = vmatmul.mubr.bf16.gmra.mxu0 %v1826
        %v2279 = vpop.f32.mrf.mxu0
        %v2280 = vadd.f32 %v1848, %v2279
        %v2281 = vpop.f32.mrf.mxu0
        %v2282 = vadd.f32 %v1852, %v2281
        %v2283 = vpop.f32.mrf.mxu0
        %v2284 = vadd.f32 %v1848, %v2283
        %v2285 = vpop.f32.mrf.mxu0
        %v2286 = vadd.f32 %v1852, %v2285
        %2287 = vdwg.mxu0
        %v2288 = vmax.f32 %v1970, %v1974
        %v2289 = vmax.f32 %v2288, %v1980
        %v2290 = vmax.f32 %v2289, %v1984
        %v2291 = vrot.slane %v2290, 4
        %v2292 = vmax.f32 %v2290, %v2291
        %v2293 = vrot.slane %v2292, 2
        %v2294 = vmax.f32 %v2292, %v2293
        %v2295 = vrot.slane %v2294, 1
        %v2296 = vmax.f32 %v2294, %v2295
        %v2297 = vmax.f32 %v1972, %v1976
        %v2298 = vmax.f32 %v2297, %v1982
        %v2299 = vmax.f32 %v2298, %v1986
        %v2300 = vrot.slane %v2299, 4
        %v2301 = vmax.f32 %v2299, %v2300
        %v2302 = vrot.slane %v2301, 2
        %v2303 = vmax.f32 %v2301, %v2302
        %v2304 = vrot.slane %v2303, 1
        %v2305 = vmax.f32 %v2303, %v2304
        %v2306 = vmax.f32 %v1990, %v1994
        %v2307 = vmax.f32 %v2306, %v2000
        %v2308 = vmax.f32 %v2307, %v2004
        %v2309 = vrot.slane %v2308, 4
        %v2310 = vmax.f32 %v2308, %v2309
        %v2311 = vrot.slane %v2310, 2
        %v2312 = vmax.f32 %v2310, %v2311
        %v2313 = vrot.slane %v2312, 1
        %v2314 = vmax.f32 %v2312, %v2313
        %v2315 = vmax.f32 %v1992, %v1996
        %v2316 = vmax.f32 %v2315, %v2002
        %v2317 = vmax.f32 %v2316, %v2006
        %v2318 = vrot.slane %v2317, 4
        %v2319 = vmax.f32 %v2317, %v2318
        %v2320 = vrot.slane %v2319, 2
        %v2321 = vmax.f32 %v2319, %v2320
        %v2322 = vrot.slane %v2321, 1
        %v2323 = vmax.f32 %v2321, %v2322
        %v2324 = vmax.f32 %v2010, %v2014
        %v2325 = vmax.f32 %v2324, %v2020
        %v2326 = vmax.f32 %v2325, %v2024
        %v2327 = vrot.slane %v2326, 4
        %v2328 = vmax.f32 %v2326, %v2327
        %v2329 = vrot.slane %v2328, 2
        %v2330 = vmax.f32 %v2328, %v2329
        %v2331 = vrot.slane %v2330, 1
        %v2332 = vmax.f32 %v2330, %v2331
        %v2333 = vmax.f32 %v2012, %v2016
        %v2334 = vmax.f32 %v2333, %v2022
        %v2335 = vmax.f32 %v2334, %v2026
        %v2336 = vrot.slane %v2335, 4
        %v2337 = vmax.f32 %v2335, %v2336
        %v2338 = vrot.slane %v2337, 2
        %v2339 = vmax.f32 %v2337, %v2338
        %v2340 = vrot.slane %v2339, 1
        %v2341 = vmax.f32 %v2339, %v2340
        %v2342 = vmax.f32 %v2030, %v2034
        %v2343 = vmax.f32 %v2342, %v2040
        %v2344 = vmax.f32 %v2343, %v2044
        %v2345 = vrot.slane %v2344, 4
        %v2346 = vmax.f32 %v2344, %v2345
        %v2347 = vrot.slane %v2346, 2
        %v2348 = vmax.f32 %v2346, %v2347
        %v2349 = vrot.slane %v2348, 1
        %v2350 = vmax.f32 %v2348, %v2349
        %v2351 = vmax.f32 %v2032, %v2036
        %v2352 = vmax.f32 %v2351, %v2042
        %v2353 = vmax.f32 %v2352, %v2046
        %v2354 = vrot.slane %v2353, 4
        %v2355 = vmax.f32 %v2353, %v2354
        %v2356 = vrot.slane %v2355, 2
        %v2357 = vmax.f32 %v2355, %v2356
        %v2358 = vrot.slane %v2357, 1
        %v2359 = vmax.f32 %v2357, %v2358
        %v2360 = vmax.f32 %v2050, %v2054
        %v2361 = vmax.f32 %v2360, %v2060
        %v2362 = vmax.f32 %v2361, %v2064
        %v2363 = vrot.slane %v2362, 4
        %v2364 = vmax.f32 %v2362, %v2363
        %v2365 = vrot.slane %v2364, 2
        %v2366 = vmax.f32 %v2364, %v2365
        %v2367 = vrot.slane %v2366, 1
        %v2368 = vmax.f32 %v2366, %v2367
        %v2369 = vmax.f32 %v2052, %v2056
        %v2370 = vmax.f32 %v2369, %v2062
        %v2371 = vmax.f32 %v2370, %v2066
        %v2372 = vrot.slane %v2371, 4
        %v2373 = vmax.f32 %v2371, %v2372
        %v2374 = vrot.slane %v2373, 2
        %v2375 = vmax.f32 %v2373, %v2374
        %v2376 = vrot.slane %v2375, 1
        %v2377 = vmax.f32 %v2375, %v2376
        %v2378 = vmax.f32 %v2070, %v2074
        %v2379 = vmax.f32 %v2378, %v2080
        %v2380 = vmax.f32 %v2379, %v2084
        %v2381 = vrot.slane %v2380, 4
        %v2382 = vmax.f32 %v2380, %v2381
        %v2383 = vrot.slane %v2382, 2
        %v2384 = vmax.f32 %v2382, %v2383
        %v2385 = vrot.slane %v2384, 1
        %v2386 = vmax.f32 %v2384, %v2385
        %v2387 = vmax.f32 %v2072, %v2076
        %v2388 = vmax.f32 %v2387, %v2082
        %v2389 = vmax.f32 %v2388, %v2086
        %v2390 = vrot.slane %v2389, 4
        %v2391 = vmax.f32 %v2389, %v2390
        %v2392 = vrot.slane %v2391, 2
        %v2393 = vmax.f32 %v2391, %v2392
        %v2394 = vrot.slane %v2393, 1
        %v2395 = vmax.f32 %v2393, %v2394
        %v2396 = vmax.f32 %v2090, %v2094
        %v2397 = vmax.f32 %v2396, %v2100
        %v2398 = vmax.f32 %v2397, %v2104
        %v2399 = vrot.slane %v2398, 4
        %v2400 = vmax.f32 %v2398, %v2399
        %v2401 = vrot.slane %v2400, 2
        %v2402 = vmax.f32 %v2400, %v2401
        %v2403 = vrot.slane %v2402, 1
        %v2404 = vmax.f32 %v2402, %v2403
        %v2405 = vmax.f32 %v2092, %v2096
        %v2406 = vmax.f32 %v2405, %v2102
        %v2407 = vmax.f32 %v2406, %v2106
        %v2408 = vrot.slane %v2407, 4
        %v2409 = vmax.f32 %v2407, %v2408
        %v2410 = vrot.slane %v2409, 2
        %v2411 = vmax.f32 %v2409, %v2410
        %v2412 = vrot.slane %v2411, 1
        %v2413 = vmax.f32 %v2411, %v2412
        %v2414 = vmax.f32 %v2110, %v2114
        %v2415 = vmax.f32 %v2414, %v2120
        %v2416 = vmax.f32 %v2415, %v2124
        %v2417 = vrot.slane %v2416, 4
        %v2418 = vmax.f32 %v2416, %v2417
        %v2419 = vrot.slane %v2418, 2
        %v2420 = vmax.f32 %v2418, %v2419
        %v2421 = vrot.slane %v2420, 1
        %v2422 = vmax.f32 %v2420, %v2421
        %v2423 = vmax.f32 %v2112, %v2116
        %v2424 = vmax.f32 %v2423, %v2122
        %v2425 = vmax.f32 %v2424, %v2126
        %v2426 = vrot.slane %v2425, 4
        %v2427 = vmax.f32 %v2425, %v2426
        %v2428 = vrot.slane %v2427, 2
        %v2429 = vmax.f32 %v2427, %v2428
        %v2430 = vrot.slane %v2429, 1
        %v2431 = vmax.f32 %v2429, %v2430
        %v2432 = vmax.f32 %v2130, %v2134
        %v2433 = vmax.f32 %v2432, %v2140
        %v2434 = vmax.f32 %v2433, %v2144
        %v2435 = vrot.slane %v2434, 4
        %v2436 = vmax.f32 %v2434, %v2435
        %v2437 = vrot.slane %v2436, 2
        %v2438 = vmax.f32 %v2436, %v2437
        %v2439 = vrot.slane %v2438, 1
        %v2440 = vmax.f32 %v2438, %v2439
        %v2441 = vmax.f32 %v2132, %v2136
        %v2442 = vmax.f32 %v2441, %v2142
        %v2443 = vmax.f32 %v2442, %v2146
        %v2444 = vrot.slane %v2443, 4
        %v2445 = vmax.f32 %v2443, %v2444
        %v2446 = vrot.slane %v2445, 2
        %v2447 = vmax.f32 %v2445, %v2446
        %v2448 = vrot.slane %v2447, 1
        %v2449 = vmax.f32 %v2447, %v2448
        %v2450 = vmax.f32 %v2150, %v2154
        %v2451 = vmax.f32 %v2450, %v2160
        %v2452 = vmax.f32 %v2451, %v2164
        %v2453 = vrot.slane %v2452, 4
        %v2454 = vmax.f32 %v2452, %v2453
        %v2455 = vrot.slane %v2454, 2
        %v2456 = vmax.f32 %v2454, %v2455
        %v2457 = vrot.slane %v2456, 1
        %v2458 = vmax.f32 %v2456, %v2457
        %v2459 = vmax.f32 %v2152, %v2156
        %v2460 = vmax.f32 %v2459, %v2162
        %v2461 = vmax.f32 %v2460, %v2166
        %v2462 = vrot.slane %v2461, 4
        %v2463 = vmax.f32 %v2461, %v2462
        %v2464 = vrot.slane %v2463, 2
        %v2465 = vmax.f32 %v2463, %v2464
        %v2466 = vrot.slane %v2465, 1
        %v2467 = vmax.f32 %v2465, %v2466
        %v2468 = vmax.f32 %v2170, %v2174
        %v2469 = vmax.f32 %v2468, %v2180
        %v2470 = vmax.f32 %v2469, %v2184
        %v2471 = vrot.slane %v2470, 4
        %v2472 = vmax.f32 %v2470, %v2471
        %v2473 = vrot.slane %v2472, 2
        %v2474 = vmax.f32 %v2472, %v2473
        %v2475 = vrot.slane %v2474, 1
        %v2476 = vmax.f32 %v2474, %v2475
        %v2477 = vmax.f32 %v2172, %v2176
        %v2478 = vmax.f32 %v2477, %v2182
        %v2479 = vmax.f32 %v2478, %v2186
        %v2480 = vrot.slane %v2479, 4
        %v2481 = vmax.f32 %v2479, %v2480
        %v2482 = vrot.slane %v2481, 2
        %v2483 = vmax.f32 %v2481, %v2482
        %v2484 = vrot.slane %v2483, 1
        %v2485 = vmax.f32 %v2483, %v2484
        %v2486 = vmax.f32 %v2190, %v2194
        %v2487 = vmax.f32 %v2486, %v2200
        %v2488 = vmax.f32 %v2487, %v2204
        %v2489 = vrot.slane %v2488, 4
        %v2490 = vmax.f32 %v2488, %v2489
        %v2491 = vrot.slane %v2490, 2
        %v2492 = vmax.f32 %v2490, %v2491
        %v2493 = vrot.slane %v2492, 1
        %v2494 = vmax.f32 %v2492, %v2493
        %v2495 = vmax.f32 %v2192, %v2196
        %v2496 = vmax.f32 %v2495, %v2202
        %v2497 = vmax.f32 %v2496, %v2206
        %v2498 = vrot.slane %v2497, 4
        %v2499 = vmax.f32 %v2497, %v2498
        %v2500 = vrot.slane %v2499, 2
        %v2501 = vmax.f32 %v2499, %v2500
        %v2502 = vrot.slane %v2501, 1
        %v2503 = vmax.f32 %v2501, %v2502
        %v2504 = vmax.f32 %v2210, %v2214
        %v2505 = vmax.f32 %v2504, %v2220
        %v2506 = vmax.f32 %v2505, %v2224
        %v2507 = vrot.slane %v2506, 4
        %v2508 = vmax.f32 %v2506, %v2507
        %v2509 = vrot.slane %v2508, 2
        %v2510 = vmax.f32 %v2508, %v2509
        %v2511 = vrot.slane %v2510, 1
        %v2512 = vmax.f32 %v2510, %v2511
        %v2513 = vmax.f32 %v2212, %v2216
        %v2514 = vmax.f32 %v2513, %v2222
        %v2515 = vmax.f32 %v2514, %v2226
        %v2516 = vrot.slane %v2515, 4
        %v2517 = vmax.f32 %v2515, %v2516
        %v2518 = vrot.slane %v2517, 2
        %v2519 = vmax.f32 %v2517, %v2518
        %v2520 = vrot.slane %v2519, 1
        %v2521 = vmax.f32 %v2519, %v2520
        %v2522 = vmax.f32 %v2230, %v2234
        %v2523 = vmax.f32 %v2522, %v2240
        %v2524 = vmax.f32 %v2523, %v2244
        %v2525 = vrot.slane %v2524, 4
        %v2526 = vmax.f32 %v2524, %v2525
        %v2527 = vrot.slane %v2526, 2
        %v2528 = vmax.f32 %v2526, %v2527
        %v2529 = vrot.slane %v2528, 1
        %v2530 = vmax.f32 %v2528, %v2529
        %v2531 = vmax.f32 %v2232, %v2236
        %v2532 = vmax.f32 %v2531, %v2242
        %v2533 = vmax.f32 %v2532, %v2246
        %v2534 = vrot.slane %v2533, 4
        %v2535 = vmax.f32 %v2533, %v2534
        %v2536 = vrot.slane %v2535, 2
        %v2537 = vmax.f32 %v2535, %v2536
        %v2538 = vrot.slane %v2537, 1
        %v2539 = vmax.f32 %v2537, %v2538
        %v2540 = vmax.f32 %v2250, %v2254
        %v2541 = vmax.f32 %v2540, %v2260
        %v2542 = vmax.f32 %v2541, %v2264
        %v2543 = vrot.slane %v2542, 4
        %v2544 = vmax.f32 %v2542, %v2543
        %v2545 = vrot.slane %v2544, 2
        %v2546 = vmax.f32 %v2544, %v2545
        %v2547 = vrot.slane %v2546, 1
        %v2548 = vmax.f32 %v2546, %v2547
        %v2549 = vmax.f32 %v2252, %v2256
        %v2550 = vmax.f32 %v2549, %v2262
        %v2551 = vmax.f32 %v2550, %v2266
        %v2552 = vrot.slane %v2551, 4
        %v2553 = vmax.f32 %v2551, %v2552
        %v2554 = vrot.slane %v2553, 2
        %v2555 = vmax.f32 %v2553, %v2554
        %v2556 = vrot.slane %v2555, 1
        %v2557 = vmax.f32 %v2555, %v2556
        %v2558 = vmax.f32 %v2270, %v2274
        %v2559 = vmax.f32 %v2558, %v2280
        %v2560 = vmax.f32 %v2559, %v2284
        %v2561 = vrot.slane %v2560, 4
        %v2562 = vmax.f32 %v2560, %v2561
        %v2563 = vrot.slane %v2562, 2
        %v2564 = vmax.f32 %v2562, %v2563
        %v2565 = vrot.slane %v2564, 1
        %v2566 = vmax.f32 %v2564, %v2565
        %v2567 = vmax.f32 %v2272, %v2276
        %v2568 = vmax.f32 %v2567, %v2282
        %v2569 = vmax.f32 %v2568, %v2286
        %v2570 = vrot.slane %v2569, 4
        %v2571 = vmax.f32 %v2569, %v2570
        %v2572 = vrot.slane %v2571, 2
        %v2573 = vmax.f32 %v2571, %v2572
        %v2574 = vrot.slane %v2573, 1
        %v2575 = vmax.f32 %v2573, %v2574
        %v2576 = vpack.c.bf16 %v2296, %v2296
        %v2577 = vpack.c.bf16 %v2305, %v2305
        %v2578 = vpack.c.bf16 %v2314, %v2314
        %v2579 = vpack.c.bf16 %v2323, %v2323
        %v2580 = vpack.c.bf16 %v2332, %v2332
        %v2581 = vpack.c.bf16 %v2341, %v2341
        %v2582 = vpack.c.bf16 %v2350, %v2350
        %v2583 = vpack.c.bf16 %v2359, %v2359
        %v2584 = vpack.c.bf16 %v2368, %v2368
        %v2585 = vpack.c.bf16 %v2377, %v2377
        %v2586 = vpack.c.bf16 %v2386, %v2386
        %v2587 = vpack.c.bf16 %v2395, %v2395
        %v2588 = vpack.c.bf16 %v2404, %v2404
        %v2589 = vpack.c.bf16 %v2413, %v2413
        %v2590 = vpack.c.bf16 %v2422, %v2422
        %v2591 = vpack.c.bf16 %v2431, %v2431
        %v2592 = vpack.c.bf16 %v2440, %v2440
        %v2593 = vpack.c.bf16 %v2449, %v2449
        %v2594 = vpack.c.bf16 %v2458, %v2458
        %v2595 = vpack.c.bf16 %v2467, %v2467
        %v2596 = vpack.c.bf16 %v2476, %v2476
        %v2597 = vpack.c.bf16 %v2485, %v2485
        %v2598 = vpack.c.bf16 %v2494, %v2494
        %v2599 = vpack.c.bf16 %v2503, %v2503
        %v2600 = vpack.c.bf16 %v2512, %v2512
        %v2601 = vpack.c.bf16 %v2521, %v2521
        %v2602 = vpack.c.bf16 %v2530, %v2530
        %v2603 = vpack.c.bf16 %v2539, %v2539
        %v2604 = vpack.c.bf16 %v2548, %v2548
        %v2605 = vpack.c.bf16 %v2557, %v2557
        %v2606 = vpack.c.bf16 %v2566, %v2566
        %v2607 = vpack.c.bf16 %v2575, %v2575
        %v2608 = vld [vmem:[%s5] sm:$0xff]
        %v2609 = vld [vmem:[%s5 + $0x8] sm:$0xff]
        %v2610 = vld [vmem:[%s5 + $0x10] sm:$0xff]
        %v2611 = vld [vmem:[%s5 + $0x18] sm:$0xff]
        %v2612 = vld [vmem:[%s5 + $0x20] sm:$0xff]
        %v2613 = vld [vmem:[%s5 + $0x28] sm:$0xff]
        %v2614 = vld [vmem:[%s5 + $0x30] sm:$0xff]
        %v2615 = vld [vmem:[%s5 + $0x38] sm:$0xff]
        %v2616 = vld [vmem:[%s5 + $0x40] sm:$0xff]
        %v2617 = vld [vmem:[%s5 + $0x48] sm:$0xff]
        %v2618 = vld [vmem:[%s5 + $0x50] sm:$0xff]
        %v2619 = vld [vmem:[%s5 + $0x58] sm:$0xff]
        %v2620 = vld [vmem:[%s5 + $0x60] sm:$0xff]
        %v2621 = vld [vmem:[%s5 + $0x68] sm:$0xff]
        %v2622 = vld [vmem:[%s5 + $0x70] sm:$0xff]
        %v2623 = vld [vmem:[%s5 + $0x78] sm:$0xff]
        %v2624 = vld [vmem:[%s5 + $0x80] sm:$0xff]
        %v2625 = vld [vmem:[%s5 + $0x88] sm:$0xff]
        %v2626 = vld [vmem:[%s5 + $0x90] sm:$0xff]
        %v2627 = vld [vmem:[%s5 + $0x98] sm:$0xff]
        %v2628 = vld [vmem:[%s5 + $0xa0] sm:$0xff]
        %v2629 = vld [vmem:[%s5 + $0xa8] sm:$0xff]
        %v2630 = vld [vmem:[%s5 + $0xb0] sm:$0xff]
        %v2631 = vld [vmem:[%s5 + $0xb8] sm:$0xff]
        %v2632 = vld [vmem:[%s5 + $0xc0] sm:$0xff]
        %v2633 = vld [vmem:[%s5 + $0xc8] sm:$0xff]
        %v2634 = vld [vmem:[%s5 + $0xd0] sm:$0xff]
        %v2635 = vld [vmem:[%s5 + $0xd8] sm:$0xff]
        %v2636 = vld [vmem:[%s5 + $0xe0] sm:$0xff]
        %v2637 = vld [vmem:[%s5 + $0xe8] sm:$0xff]
        %v2638 = vld [vmem:[%s5 + $0xf0] sm:$0xff]
        %v2639 = vld [vmem:[%s5 + $0xf8] sm:$0xff]
        %v2640 = vld [vmem:[%s5 + $0x100] sm:$0xff]
        %v2641 = vld [vmem:[%s5 + $0x108] sm:$0xff]
        %v2642 = vld [vmem:[%s5 + $0x110] sm:$0xff]
        %v2643 = vld [vmem:[%s5 + $0x118] sm:$0xff]
        %v2644 = vld [vmem:[%s5 + $0x120] sm:$0xff]
        %v2645 = vld [vmem:[%s5 + $0x128] sm:$0xff]
        %v2646 = vld [vmem:[%s5 + $0x130] sm:$0xff]
        %v2647 = vld [vmem:[%s5 + $0x138] sm:$0xff]
        %v2648 = vld [vmem:[%s5 + $0x140] sm:$0xff]
        %v2649 = vld [vmem:[%s5 + $0x148] sm:$0xff]
        %v2650 = vld [vmem:[%s5 + $0x150] sm:$0xff]
        %v2651 = vld [vmem:[%s5 + $0x158] sm:$0xff]
        %v2652 = vld [vmem:[%s5 + $0x160] sm:$0xff]
        %v2653 = vld [vmem:[%s5 + $0x168] sm:$0xff]
        %v2654 = vld [vmem:[%s5 + $0x170] sm:$0xff]
        %v2655 = vld [vmem:[%s5 + $0x178] sm:$0xff]
        %v2656 = vld [vmem:[%s5 + $0x180] sm:$0xff]
        %v2657 = vld [vmem:[%s5 + $0x188] sm:$0xff]
        %v2658 = vld [vmem:[%s5 + $0x190] sm:$0xff]
        %v2659 = vld [vmem:[%s5 + $0x198] sm:$0xff]
        %v2660 = vld [vmem:[%s5 + $0x1a0] sm:$0xff]
        %v2661 = vld [vmem:[%s5 + $0x1a8] sm:$0xff]
        %v2662 = vld [vmem:[%s5 + $0x1b0] sm:$0xff]
        %v2663 = vld [vmem:[%s5 + $0x1b8] sm:$0xff]
        %v2664 = vld [vmem:[%s5 + $0x1c0] sm:$0xff]
        %v2665 = vld [vmem:[%s5 + $0x1c8] sm:$0xff]
        %v2666 = vld [vmem:[%s5 + $0x1d0] sm:$0xff]
        %v2667 = vld [vmem:[%s5 + $0x1d8] sm:$0xff]
        %v2668 = vld [vmem:[%s5 + $0x1e0] sm:$0xff]
        %v2669 = vld [vmem:[%s5 + $0x1e8] sm:$0xff]
        %v2670 = vld [vmem:[%s5 + $0x1f0] sm:$0xff]
        %v2671 = vld [vmem:[%s5 + $0x1f8] sm:$0xff]
        %v2704 = vunpack.c.l.b16 %v2576
        %v2705 = vunpack.c.l.b16 %v2577
        %v2706 = vunpack.c.l.b16 %v2578
        %v2707 = vunpack.c.l.b16 %v2579
        %v2708 = vunpack.c.l.b16 %v2580
        %v2709 = vunpack.c.l.b16 %v2581
        %v2710 = vunpack.c.l.b16 %v2582
        %v2711 = vunpack.c.l.b16 %v2583
        %v2712 = vunpack.c.l.b16 %v2584
        %v2713 = vunpack.c.l.b16 %v2585
        %v2714 = vunpack.c.l.b16 %v2586
        %v2715 = vunpack.c.l.b16 %v2587
        %v2716 = vunpack.c.l.b16 %v2588
        %v2717 = vunpack.c.l.b16 %v2589
        %v2718 = vunpack.c.l.b16 %v2590
        %v2719 = vunpack.c.l.b16 %v2591
        %v2720 = vunpack.c.l.b16 %v2592
        %v2721 = vunpack.c.l.b16 %v2593
        %v2722 = vunpack.c.l.b16 %v2594
        %v2723 = vunpack.c.l.b16 %v2595
        %v2724 = vunpack.c.l.b16 %v2596
        %v2725 = vunpack.c.l.b16 %v2597
        %v2726 = vunpack.c.l.b16 %v2598
        %v2727 = vunpack.c.l.b16 %v2599
        %v2728 = vunpack.c.l.b16 %v2600
        %v2729 = vunpack.c.l.b16 %v2601
        %v2730 = vunpack.c.l.b16 %v2602
        %v2731 = vunpack.c.l.b16 %v2603
        %v2732 = vunpack.c.l.b16 %v2604
        %v2733 = vunpack.c.l.b16 %v2605
        %v2734 = vunpack.c.l.b16 %v2606
        %v2735 = vunpack.c.l.b16 %v2607
        %vm2736 = vcmask 1041409
        %v2737 = vsel %vm2736, %v2706, %v2704
        %vm2738 = vcmask 1042434
        %v2739 = vsel %vm2738, %v2708, %v2737
        %vm2740 = vcmask 1043459
        %v2741 = vsel %vm2740, %v2710, %v2739
        %vm2742 = vcmask 1044484
        %v2743 = vsel %vm2742, %v2712, %v2741
        %vm2744 = vcmask 1045509
        %v2745 = vsel %vm2744, %v2714, %v2743
        %vm2746 = vcmask 1046534
        %v2747 = vsel %vm2746, %v2716, %v2745
        %vm2748 = vcmask 1047559
        %v2749 = vsel %vm2748, %v2718, %v2747
        %v2750 = vsel %vm2736, %v2707, %v2705
        %v2751 = vsel %vm2738, %v2709, %v2750
        %v2752 = vsel %vm2740, %v2711, %v2751
        %v2753 = vsel %vm2742, %v2713, %v2752
        %v2754 = vsel %vm2744, %v2715, %v2753
        %v2755 = vsel %vm2746, %v2717, %v2754
        %v2756 = vsel %vm2748, %v2719, %v2755
        %v2757 = vsel %vm2736, %v2722, %v2720
        %v2758 = vsel %vm2738, %v2724, %v2757
        %v2759 = vsel %vm2740, %v2726, %v2758
        %v2760 = vsel %vm2742, %v2728, %v2759
        %v2761 = vsel %vm2744, %v2730, %v2760
        %v2762 = vsel %vm2746, %v2732, %v2761
        %v2763 = vsel %vm2748, %v2734, %v2762
        %v2764 = vsel %vm2736, %v2723, %v2721
        %v2765 = vsel %vm2738, %v2725, %v2764
        %v2766 = vsel %vm2740, %v2727, %v2765
        %v2767 = vsel %vm2742, %v2729, %v2766
        %v2768 = vsel %vm2744, %v2731, %v2767
        %v2769 = vsel %vm2746, %v2733, %v2768
        %v2770 = vsel %vm2748, %v2735, %v2769
        %v2771 = vpack.c.b16 %v2763, %v2749
        %v2772 = vpack.c.b16 %v2770, %v2756
        %v2839 = vunpack.c.l.b16 %v2608
        %v2840 = vunpack.c.h.b16 %v2608
        %v2841 = vunpack.c.l.b16 %v2609
        %v2842 = vunpack.c.h.b16 %v2609
        %v2843 = vunpack.c.l.b16 %v2610
        %v2844 = vunpack.c.h.b16 %v2610
        %v2845 = vunpack.c.l.b16 %v2611
        %v2846 = vunpack.c.h.b16 %v2611
        %v2847 = vunpack.c.l.b16 %v2612
        %v2848 = vunpack.c.h.b16 %v2612
        %v2849 = vunpack.c.l.b16 %v2613
        %v2850 = vunpack.c.h.b16 %v2613
        %v2851 = vunpack.c.l.b16 %v2614
        %v2852 = vunpack.c.h.b16 %v2614
        %v2853 = vunpack.c.l.b16 %v2615
        %v2854 = vunpack.c.h.b16 %v2615
        %v2855 = vunpack.c.l.b16 %v2616
        %v2856 = vunpack.c.h.b16 %v2616
        %v2857 = vunpack.c.l.b16 %v2617
        %v2858 = vunpack.c.h.b16 %v2617
        %v2859 = vunpack.c.l.b16 %v2618
        %v2860 = vunpack.c.h.b16 %v2618
        %v2861 = vunpack.c.l.b16 %v2619
        %v2862 = vunpack.c.h.b16 %v2619
        %v2863 = vunpack.c.l.b16 %v2620
        %v2864 = vunpack.c.h.b16 %v2620
        %v2865 = vunpack.c.l.b16 %v2621
        %v2866 = vunpack.c.h.b16 %v2621
        %v2867 = vunpack.c.l.b16 %v2622
        %v2868 = vunpack.c.h.b16 %v2622
        %v2869 = vunpack.c.l.b16 %v2623
        %v2870 = vunpack.c.h.b16 %v2623
        %v2871 = vunpack.c.l.b16 %v2624
        %v2872 = vunpack.c.h.b16 %v2624
        %v2873 = vunpack.c.l.b16 %v2625
        %v2874 = vunpack.c.h.b16 %v2625
        %v2875 = vunpack.c.l.b16 %v2626
        %v2876 = vunpack.c.h.b16 %v2626
        %v2877 = vunpack.c.l.b16 %v2627
        %v2878 = vunpack.c.h.b16 %v2627
        %v2879 = vunpack.c.l.b16 %v2628
        %v2880 = vunpack.c.h.b16 %v2628
        %v2881 = vunpack.c.l.b16 %v2629
        %v2882 = vunpack.c.h.b16 %v2629
        %v2883 = vunpack.c.l.b16 %v2630
        %v2884 = vunpack.c.h.b16 %v2630
        %v2885 = vunpack.c.l.b16 %v2631
        %v2886 = vunpack.c.h.b16 %v2631
        %v2887 = vunpack.c.l.b16 %v2632
        %v2888 = vunpack.c.h.b16 %v2632
        %v2889 = vunpack.c.l.b16 %v2633
        %v2890 = vunpack.c.h.b16 %v2633
        %v2891 = vunpack.c.l.b16 %v2634
        %v2892 = vunpack.c.h.b16 %v2634
        %v2893 = vunpack.c.l.b16 %v2635
        %v2894 = vunpack.c.h.b16 %v2635
        %v2895 = vunpack.c.l.b16 %v2636
        %v2896 = vunpack.c.h.b16 %v2636
        %v2897 = vunpack.c.l.b16 %v2637
        %v2898 = vunpack.c.h.b16 %v2637
        %v2899 = vunpack.c.l.b16 %v2638
        %v2900 = vunpack.c.h.b16 %v2638
        %v2901 = vunpack.c.l.b16 %v2639
        %v2902 = vunpack.c.h.b16 %v2639
        %v2903 = vunpack.c.l.b16 %v2640
        %v2904 = vunpack.c.h.b16 %v2640
        %v2905 = vunpack.c.l.b16 %v2641
        %v2906 = vunpack.c.h.b16 %v2641
        %v2907 = vunpack.c.l.b16 %v2642
        %v2908 = vunpack.c.h.b16 %v2642
        %v2909 = vunpack.c.l.b16 %v2643
        %v2910 = vunpack.c.h.b16 %v2643
        %v2911 = vunpack.c.l.b16 %v2644
        %v2912 = vunpack.c.h.b16 %v2644
        %v2913 = vunpack.c.l.b16 %v2645
        %v2914 = vunpack.c.h.b16 %v2645
        %v2915 = vunpack.c.l.b16 %v2646
        %v2916 = vunpack.c.h.b16 %v2646
        %v2917 = vunpack.c.l.b16 %v2647
        %v2918 = vunpack.c.h.b16 %v2647
        %v2919 = vunpack.c.l.b16 %v2648
        %v2920 = vunpack.c.h.b16 %v2648
        %v2921 = vunpack.c.l.b16 %v2649
        %v2922 = vunpack.c.h.b16 %v2649
        %v2923 = vunpack.c.l.b16 %v2650
        %v2924 = vunpack.c.h.b16 %v2650
        %v2925 = vunpack.c.l.b16 %v2651
        %v2926 = vunpack.c.h.b16 %v2651
        %v2927 = vunpack.c.l.b16 %v2652
        %v2928 = vunpack.c.h.b16 %v2652
        %v2929 = vunpack.c.l.b16 %v2653
        %v2930 = vunpack.c.h.b16 %v2653
        %v2931 = vunpack.c.l.b16 %v2654
        %v2932 = vunpack.c.h.b16 %v2654
        %v2933 = vunpack.c.l.b16 %v2655
        %v2934 = vunpack.c.h.b16 %v2655
        %v2935 = vunpack.c.l.b16 %v2656
        %v2936 = vunpack.c.h.b16 %v2656
        %v2937 = vunpack.c.l.b16 %v2657
        %v2938 = vunpack.c.h.b16 %v2657
        %v2939 = vunpack.c.l.b16 %v2658
        %v2940 = vunpack.c.h.b16 %v2658
        %v2941 = vunpack.c.l.b16 %v2659
        %v2942 = vunpack.c.h.b16 %v2659
        %v2943 = vunpack.c.l.b16 %v2660
        %v2944 = vunpack.c.h.b16 %v2660
        %v2945 = vunpack.c.l.b16 %v2661
        %v2946 = vunpack.c.h.b16 %v2661
        %v2947 = vunpack.c.l.b16 %v2662
        %v2948 = vunpack.c.h.b16 %v2662
        %v2949 = vunpack.c.l.b16 %v2663
        %v2950 = vunpack.c.h.b16 %v2663
        %v2951 = vunpack.c.l.b16 %v2664
        %v2952 = vunpack.c.h.b16 %v2664
        %v2953 = vunpack.c.l.b16 %v2665
        %v2954 = vunpack.c.h.b16 %v2665
        %v2955 = vunpack.c.l.b16 %v2666
        %v2956 = vunpack.c.h.b16 %v2666
        %v2957 = vunpack.c.l.b16 %v2667
        %v2958 = vunpack.c.h.b16 %v2667
        %v2959 = vunpack.c.l.b16 %v2668
        %v2960 = vunpack.c.h.b16 %v2668
        %v2961 = vunpack.c.l.b16 %v2669
        %v2962 = vunpack.c.h.b16 %v2669
        %v2963 = vunpack.c.l.b16 %v2670
        %v2964 = vunpack.c.h.b16 %v2670
        %v2965 = vunpack.c.l.b16 %v2671
        %v2966 = vunpack.c.h.b16 %v2671
        %v2967 = vpack.c.b16 %v2843, %v2839
        %v2968 = vpack.c.b16 %v2844, %v2840
        %v2969 = vpack.c.b16 %v2845, %v2841
        %v2970 = vpack.c.b16 %v2846, %v2842
        %v2971 = vpack.c.b16 %v2851, %v2847
        %v2972 = vpack.c.b16 %v2852, %v2848
        %v2973 = vpack.c.b16 %v2853, %v2849
        %v2974 = vpack.c.b16 %v2854, %v2850
        %v2975 = vpack.c.b16 %v2859, %v2855
        %v2976 = vpack.c.b16 %v2860, %v2856
        %v2977 = vpack.c.b16 %v2861, %v2857
        %v2978 = vpack.c.b16 %v2862, %v2858
        %v2979 = vpack.c.b16 %v2867, %v2863
        %v2980 = vpack.c.b16 %v2868, %v2864
        %v2981 = vpack.c.b16 %v2869, %v2865
        %v2982 = vpack.c.b16 %v2870, %v2866
        %v2983 = vpack.c.b16 %v2875, %v2871
        %v2984 = vpack.c.b16 %v2876, %v2872
        %v2985 = vpack.c.b16 %v2877, %v2873
        %v2986 = vpack.c.b16 %v2878, %v2874
        %v2987 = vpack.c.b16 %v2883, %v2879
        %v2988 = vpack.c.b16 %v2884, %v2880
        %v2989 = vpack.c.b16 %v2885, %v2881
        %v2990 = vpack.c.b16 %v2886, %v2882
        %v2991 = vpack.c.b16 %v2891, %v2887
        %v2992 = vpack.c.b16 %v2892, %v2888
        %v2993 = vpack.c.b16 %v2893, %v2889
        %v2994 = vpack.c.b16 %v2894, %v2890
        %v2995 = vpack.c.b16 %v2899, %v2895
        %v2996 = vpack.c.b16 %v2900, %v2896
        %v2997 = vpack.c.b16 %v2901, %v2897
        %v2998 = vpack.c.b16 %v2902, %v2898
        %v2999 = vpack.c.b16 %v2907, %v2903
        %v3000 = vpack.c.b16 %v2908, %v2904
        %v3001 = vpack.c.b16 %v2909, %v2905
        %v3002 = vpack.c.b16 %v2910, %v2906
        %v3003 = vpack.c.b16 %v2915, %v2911
        %v3004 = vpack.c.b16 %v2916, %v2912
        %v3005 = vpack.c.b16 %v2917, %v2913
        %v3006 = vpack.c.b16 %v2918, %v2914
        %v3007 = vpack.c.b16 %v2923, %v2919
        %v3008 = vpack.c.b16 %v2924, %v2920
        %v3009 = vpack.c.b16 %v2925, %v2921
        %v3010 = vpack.c.b16 %v2926, %v2922
        %v3011 = vpack.c.b16 %v2931, %v2927
        %v3012 = vpack.c.b16 %v2932, %v2928
        %v3013 = vpack.c.b16 %v2933, %v2929
        %v3014 = vpack.c.b16 %v2934, %v2930
        %v3015 = vpack.c.b16 %v2939, %v2935
        %v3016 = vpack.c.b16 %v2940, %v2936
        %v3017 = vpack.c.b16 %v2941, %v2937
        %v3018 = vpack.c.b16 %v2942, %v2938
        %v3019 = vpack.c.b16 %v2947, %v2943
        %v3020 = vpack.c.b16 %v2948, %v2944
        %v3021 = vpack.c.b16 %v2949, %v2945
        %v3022 = vpack.c.b16 %v2950, %v2946
        %v3023 = vpack.c.b16 %v2955, %v2951
        %v3024 = vpack.c.b16 %v2956, %v2952
        %v3025 = vpack.c.b16 %v2957, %v2953
        %v3026 = vpack.c.b16 %v2958, %v2954
        %v3027 = vpack.c.b16 %v2963, %v2959
        %v3028 = vpack.c.b16 %v2964, %v2960
        %v3029 = vpack.c.b16 %v2965, %v2961
        %v3030 = vpack.c.b16 %v2966, %v2962
        %3095 = vmatprep.subr.bf16.mxu0 %v2996
        %3096 = vmatpush1.bf16.msra.mxu0 %v2995
        %3097 = vmatprep.subr.bf16.mxu0 %v2992
        %3098 = vmatpush1.bf16.msra.mxu0 %v2991
        %3099 = vmatprep.subr.bf16.mxu0 %v2988
        %3100 = vmatpush1.bf16.msra.mxu0 %v2987
        %3101 = vmatprep.subr.bf16.mxu0 %v2984
        %3102 = vmatpush1.bf16.msra.mxu0 %v2983
        %3103 = vmatprep.subr.bf16.mxu0 %v2980
        %3104 = vmatpush1.bf16.msra.mxu0 %v2979
        %3105 = vmatprep.subr.bf16.mxu0 %v2976
        %3106 = vmatpush1.bf16.msra.mxu0 %v2975
        %3107 = vmatprep.subr.bf16.mxu0 %v2972
        %3108 = vmatpush1.bf16.msra.mxu0 %v2971
        %3109 = vmatprep.subr.bf16.mxu0 %v2968
        %3110 = vmatpush1.bf16.msra.mxu0 %v2967
        %3111 = vmatprep.subr.bf16.mxu0 %v3028
        %3112 = vmatpush2.bf16.msra.mxu0 %v3027
        %3113 = vmatprep.subr.bf16.mxu0 %v3024
        %3114 = vmatpush2.bf16.msra.mxu0 %v3023
        %3115 = vmatprep.subr.bf16.mxu0 %v3020
        %3116 = vmatpush2.bf16.msra.mxu0 %v3019
        %3117 = vmatprep.subr.bf16.mxu0 %v3016
        %3118 = vmatpush2.bf16.msra.mxu0 %v3015
        %3119 = vmatprep.subr.bf16.mxu0 %v3012
        %3120 = vmatpush2.bf16.msra.mxu0 %v3011
        %3121 = vmatprep.subr.bf16.mxu0 %v3008
        %3122 = vmatpush2.bf16.msra.mxu0 %v3007
        %3123 = vmatprep.subr.bf16.mxu0 %v3004
        %3124 = vmatpush2.bf16.msra.mxu0 %v3003
        %3125 = vmatprep.subr.bf16.mxu0 %v3000
        %3126 = vmatpush2.bf16.msra.mxu0 %v2999
        %3127 = vmatprep.mubr.bf16.mxu0 %v2772
        %3128 = vmatmul.mubr.bf16.gmra.mxu0 %v2771
        %v3129 = vpop.f32.mrf.mxu0
        %v3130 = vadd.f32 0.0, %v3129
        %v3131 = vpop.f32.mrf.mxu0
        %v3132 = vadd.f32 0.0, %v3131
        %v3133 = vpop.f32.mrf.mxu0
        %v3134 = vadd.f32 0.0, %v3133
        %v3135 = vpop.f32.mrf.mxu0
        %v3136 = vadd.f32 0.0, %v3135
        %3137 = vdwg.mxu0
        %3138 = vmatprep.subr.bf16.mxu0 %v2998
        %3139 = vmatpush1.bf16.msra.mxu0 %v2997
        %3140 = vmatprep.subr.bf16.mxu0 %v2994
        %3141 = vmatpush1.bf16.msra.mxu0 %v2993
        %3142 = vmatprep.subr.bf16.mxu0 %v2990
        %3143 = vmatpush1.bf16.msra.mxu0 %v2989
        %3144 = vmatprep.subr.bf16.mxu0 %v2986
        %3145 = vmatpush1.bf16.msra.mxu0 %v2985
        %3146 = vmatprep.subr.bf16.mxu0 %v2982
        %3147 = vmatpush1.bf16.msra.mxu0 %v2981
        %3148 = vmatprep.subr.bf16.mxu0 %v2978
        %3149 = vmatpush1.bf16.msra.mxu0 %v2977
        %3150 = vmatprep.subr.bf16.mxu0 %v2974
        %3151 = vmatpush1.bf16.msra.mxu0 %v2973
        %3152 = vmatprep.subr.bf16.mxu0 %v2970
        %3153 = vmatpush1.bf16.msra.mxu0 %v2969
        %3154 = vmatprep.subr.bf16.mxu0 %v3030
        %3155 = vmatpush2.bf16.msra.mxu0 %v3029
        %3156 = vmatprep.subr.bf16.mxu0 %v3026
        %3157 = vmatpush2.bf16.msra.mxu0 %v3025
        %3158 = vmatprep.subr.bf16.mxu0 %v3022
        %3159 = vmatpush2.bf16.msra.mxu0 %v3021
        %3160 = vmatprep.subr.bf16.mxu0 %v3018
        %3161 = vmatpush2.bf16.msra.mxu0 %v3017
        %3162 = vmatprep.subr.bf16.mxu0 %v3014
        %3163 = vmatpush2.bf16.msra.mxu0 %v3013
        %3164 = vmatprep.subr.bf16.mxu0 %v3010
        %3165 = vmatpush2.bf16.msra.mxu0 %v3009
        %3166 = vmatprep.subr.bf16.mxu0 %v3006
        %3167 = vmatpush2.bf16.msra.mxu0 %v3005
        %3168 = vmatprep.subr.bf16.mxu0 %v3002
        %3169 = vmatpush2.bf16.msra.mxu0 %v3001
        %3170 = vmatprep.mubr.bf16.mxu0 %v2772
        %3171 = vmatmul.mubr.bf16.gmra.mxu0 %v2771
        %v3172 = vpop.f32.mrf.mxu0
        %v3173 = vadd.f32 0.0, %v3172
        %v3174 = vpop.f32.mrf.mxu0
        %v3175 = vadd.f32 0.0, %v3174
        %v3176 = vpop.f32.mrf.mxu0
        %v3177 = vadd.f32 0.0, %v3176
        %v3178 = vpop.f32.mrf.mxu0
        %v3179 = vadd.f32 0.0, %v3178
        %3180 = vdwg.mxu0
        %v3181 = vpack.c.bf16 %v1974, %v1970
        %v3182 = vpack.c.bf16 %v1976, %v1972
        %v3183 = vpack.c.bf16 %v1984, %v1980
        %v3184 = vpack.c.bf16 %v1986, %v1982
        %v3185 = vpack.c.bf16 %v1994, %v1990
        %v3186 = vpack.c.bf16 %v1996, %v1992
        %v3187 = vpack.c.bf16 %v2004, %v2000
        %v3188 = vpack.c.bf16 %v2006, %v2002
        %v3189 = vpack.c.bf16 %v2014, %v2010
        %v3190 = vpack.c.bf16 %v2016, %v2012
        %v3191 = vpack.c.bf16 %v2024, %v2020
        %v3192 = vpack.c.bf16 %v2026, %v2022
        %v3193 = vpack.c.bf16 %v2034, %v2030
        %v3194 = vpack.c.bf16 %v2036, %v2032
        %v3195 = vpack.c.bf16 %v2044, %v2040
        %v3196 = vpack.c.bf16 %v2046, %v2042
        %v3197 = vpack.c.bf16 %v2054, %v2050
        %v3198 = vpack.c.bf16 %v2056, %v2052
        %v3199 = vpack.c.bf16 %v2064, %v2060
        %v3200 = vpack.c.bf16 %v2066, %v2062
        %v3201 = vpack.c.bf16 %v2074, %v2070
        %v3202 = vpack.c.bf16 %v2076, %v2072
        %v3203 = vpack.c.bf16 %v2084, %v2080
        %v3204 = vpack.c.bf16 %v2086, %v2082
        %v3205 = vpack.c.bf16 %v2094, %v2090
        %v3206 = vpack.c.bf16 %v2096, %v2092
        %v3207 = vpack.c.bf16 %v2104, %v2100
        %v3208 = vpack.c.bf16 %v2106, %v2102
        %v3209 = vpack.c.bf16 %v2114, %v2110
        %v3210 = vpack.c.bf16 %v2116, %v2112
        %v3211 = vpack.c.bf16 %v2124, %v2120
        %v3212 = vpack.c.bf16 %v2126, %v2122
        %v3213 = vpack.c.bf16 %v2134, %v2130
        %v3214 = vpack.c.bf16 %v2136, %v2132
        %v3215 = vpack.c.bf16 %v2144, %v2140
        %v3216 = vpack.c.bf16 %v2146, %v2142
        %v3217 = vpack.c.bf16 %v2154, %v2150
        %v3218 = vpack.c.bf16 %v2156, %v2152
        %v3219 = vpack.c.bf16 %v2164, %v2160
        %v3220 = vpack.c.bf16 %v2166, %v2162
        %v3221 = vpack.c.bf16 %v2174, %v2170
        %v3222 = vpack.c.bf16 %v2176, %v2172
        %v3223 = vpack.c.bf16 %v2184, %v2180
        %v3224 = vpack.c.bf16 %v2186, %v2182
        %v3225 = vpack.c.bf16 %v2194, %v2190
        %v3226 = vpack.c.bf16 %v2196, %v2192
        %v3227 = vpack.c.bf16 %v2204, %v2200
        %v3228 = vpack.c.bf16 %v2206, %v2202
        %v3229 = vpack.c.bf16 %v2214, %v2210
        %v3230 = vpack.c.bf16 %v2216, %v2212
        %v3231 = vpack.c.bf16 %v2224, %v2220
        %v3232 = vpack.c.bf16 %v2226, %v2222
        %v3233 = vpack.c.bf16 %v2234, %v2230
        %v3234 = vpack.c.bf16 %v2236, %v2232
        %v3235 = vpack.c.bf16 %v2244, %v2240
        %v3236 = vpack.c.bf16 %v2246, %v2242
        %v3237 = vpack.c.bf16 %v2254, %v2250
        %v3238 = vpack.c.bf16 %v2256, %v2252
        %v3239 = vpack.c.bf16 %v2264, %v2260
        %v3240 = vpack.c.bf16 %v2266, %v2262
        %v3241 = vpack.c.bf16 %v2274, %v2270
        %v3242 = vpack.c.bf16 %v2276, %v2272
        %v3243 = vpack.c.bf16 %v2284, %v2280
        %v3244 = vpack.c.bf16 %v2286, %v2282
        %v3245 = vld [vmem:[%s6] sm:$0xff]
        %v3246 = vld [vmem:[%s6 + $0x8] sm:$0xff]
        %v3247 = vld [vmem:[%s6 + $0x10] sm:$0xff]
        %v3248 = vld [vmem:[%s6 + $0x18] sm:$0xff]
        %v3249 = vld [vmem:[%s6 + $0x20] sm:$0xff]
        %v3250 = vld [vmem:[%s6 + $0x28] sm:$0xff]
        %v3251 = vld [vmem:[%s6 + $0x30] sm:$0xff]
        %v3252 = vld [vmem:[%s6 + $0x38] sm:$0xff]
        %v3253 = vld [vmem:[%s6 + $0x40] sm:$0xff]
        %v3254 = vld [vmem:[%s6 + $0x48] sm:$0xff]
        %v3255 = vld [vmem:[%s6 + $0x50] sm:$0xff]
        %v3256 = vld [vmem:[%s6 + $0x58] sm:$0xff]
        %v3257 = vld [vmem:[%s6 + $0x60] sm:$0xff]
        %v3258 = vld [vmem:[%s6 + $0x68] sm:$0xff]
        %v3259 = vld [vmem:[%s6 + $0x70] sm:$0xff]
        %v3260 = vld [vmem:[%s6 + $0x78] sm:$0xff]
        %v3261 = vld [vmem:[%s6 + $0x80] sm:$0xff]
        %v3262 = vld [vmem:[%s6 + $0x88] sm:$0xff]
        %v3263 = vld [vmem:[%s6 + $0x90] sm:$0xff]
        %v3264 = vld [vmem:[%s6 + $0x98] sm:$0xff]
        %v3265 = vld [vmem:[%s6 + $0xa0] sm:$0xff]
        %v3266 = vld [vmem:[%s6 + $0xa8] sm:$0xff]
        %v3267 = vld [vmem:[%s6 + $0xb0] sm:$0xff]
        %v3268 = vld [vmem:[%s6 + $0xb8] sm:$0xff]
        %v3269 = vld [vmem:[%s6 + $0xc0] sm:$0xff]
        %v3270 = vld [vmem:[%s6 + $0xc8] sm:$0xff]
        %v3271 = vld [vmem:[%s6 + $0xd0] sm:$0xff]
        %v3272 = vld [vmem:[%s6 + $0xd8] sm:$0xff]
        %v3273 = vld [vmem:[%s6 + $0xe0] sm:$0xff]
        %v3274 = vld [vmem:[%s6 + $0xe8] sm:$0xff]
        %v3275 = vld [vmem:[%s6 + $0xf0] sm:$0xff]
        %v3276 = vld [vmem:[%s6 + $0xf8] sm:$0xff]
        %v3277 = vld [vmem:[%s6 + $0x100] sm:$0xff]
        %v3278 = vld [vmem:[%s6 + $0x108] sm:$0xff]
        %v3279 = vld [vmem:[%s6 + $0x110] sm:$0xff]
        %v3280 = vld [vmem:[%s6 + $0x118] sm:$0xff]
        %v3281 = vld [vmem:[%s6 + $0x120] sm:$0xff]
        %v3282 = vld [vmem:[%s6 + $0x128] sm:$0xff]
        %v3283 = vld [vmem:[%s6 + $0x130] sm:$0xff]
        %v3284 = vld [vmem:[%s6 + $0x138] sm:$0xff]
        %v3285 = vld [vmem:[%s6 + $0x140] sm:$0xff]
        %v3286 = vld [vmem:[%s6 + $0x148] sm:$0xff]
        %v3287 = vld [vmem:[%s6 + $0x150] sm:$0xff]
        %v3288 = vld [vmem:[%s6 + $0x158] sm:$0xff]
        %v3289 = vld [vmem:[%s6 + $0x160] sm:$0xff]
        %v3290 = vld [vmem:[%s6 + $0x168] sm:$0xff]
        %v3291 = vld [vmem:[%s6 + $0x170] sm:$0xff]
        %v3292 = vld [vmem:[%s6 + $0x178] sm:$0xff]
        %v3293 = vld [vmem:[%s6 + $0x180] sm:$0xff]
        %v3294 = vld [vmem:[%s6 + $0x188] sm:$0xff]
        %v3295 = vld [vmem:[%s6 + $0x190] sm:$0xff]
        %v3296 = vld [vmem:[%s6 + $0x198] sm:$0xff]
        %v3297 = vld [vmem:[%s6 + $0x1a0] sm:$0xff]
        %v3298 = vld [vmem:[%s6 + $0x1a8] sm:$0xff]
        %v3299 = vld [vmem:[%s6 + $0x1b0] sm:$0xff]
        %v3300 = vld [vmem:[%s6 + $0x1b8] sm:$0xff]
        %v3301 = vld [vmem:[%s6 + $0x1c0] sm:$0xff]
        %v3302 = vld [vmem:[%s6 + $0x1c8] sm:$0xff]
        %v3303 = vld [vmem:[%s6 + $0x1d0] sm:$0xff]
        %v3304 = vld [vmem:[%s6 + $0x1d8] sm:$0xff]
        %v3305 = vld [vmem:[%s6 + $0x1e0] sm:$0xff]
        %v3306 = vld [vmem:[%s6 + $0x1e8] sm:$0xff]
        %v3307 = vld [vmem:[%s6 + $0x1f0] sm:$0xff]
        %v3308 = vld [vmem:[%s6 + $0x1f8] sm:$0xff]
        %v3373 = vunpack.c.l.b16 %v3245
        %v3374 = vunpack.c.h.b16 %v3245
        %v3375 = vunpack.c.l.b16 %v3246
        %v3376 = vunpack.c.h.b16 %v3246
        %v3377 = vunpack.c.l.b16 %v3247
        %v3378 = vunpack.c.h.b16 %v3247
        %v3379 = vunpack.c.l.b16 %v3248
        %v3380 = vunpack.c.h.b16 %v3248
        %v3381 = vunpack.c.l.b16 %v3249
        %v3382 = vunpack.c.h.b16 %v3249
        %v3383 = vunpack.c.l.b16 %v3250
        %v3384 = vunpack.c.h.b16 %v3250
        %v3385 = vunpack.c.l.b16 %v3251
        %v3386 = vunpack.c.h.b16 %v3251
        %v3387 = vunpack.c.l.b16 %v3252
        %v3388 = vunpack.c.h.b16 %v3252
        %v3389 = vunpack.c.l.b16 %v3253
        %v3390 = vunpack.c.h.b16 %v3253
        %v3391 = vunpack.c.l.b16 %v3254
        %v3392 = vunpack.c.h.b16 %v3254
        %v3393 = vunpack.c.l.b16 %v3255
        %v3394 = vunpack.c.h.b16 %v3255
        %v3395 = vunpack.c.l.b16 %v3256
        %v3396 = vunpack.c.h.b16 %v3256
        %v3397 = vunpack.c.l.b16 %v3257
        %v3398 = vunpack.c.h.b16 %v3257
        %v3399 = vunpack.c.l.b16 %v3258
        %v3400 = vunpack.c.h.b16 %v3258
        %v3401 = vunpack.c.l.b16 %v3259
        %v3402 = vunpack.c.h.b16 %v3259
        %v3403 = vunpack.c.l.b16 %v3260
        %v3404 = vunpack.c.h.b16 %v3260
        %v3405 = vunpack.c.l.b16 %v3261
        %v3406 = vunpack.c.h.b16 %v3261
        %v3407 = vunpack.c.l.b16 %v3262
        %v3408 = vunpack.c.h.b16 %v3262
        %v3409 = vunpack.c.l.b16 %v3263
        %v3410 = vunpack.c.h.b16 %v3263
        %v3411 = vunpack.c.l.b16 %v3264
        %v3412 = vunpack.c.h.b16 %v3264
        %v3413 = vunpack.c.l.b16 %v3265
        %v3414 = vunpack.c.h.b16 %v3265
        %v3415 = vunpack.c.l.b16 %v3266
        %v3416 = vunpack.c.h.b16 %v3266
        %v3417 = vunpack.c.l.b16 %v3267
        %v3418 = vunpack.c.h.b16 %v3267
        %v3419 = vunpack.c.l.b16 %v3268
        %v3420 = vunpack.c.h.b16 %v3268
        %v3421 = vunpack.c.l.b16 %v3269
        %v3422 = vunpack.c.h.b16 %v3269
        %v3423 = vunpack.c.l.b16 %v3270
        %v3424 = vunpack.c.h.b16 %v3270
        %v3425 = vunpack.c.l.b16 %v3271
        %v3426 = vunpack.c.h.b16 %v3271
        %v3427 = vunpack.c.l.b16 %v3272
        %v3428 = vunpack.c.h.b16 %v3272
        %v3429 = vunpack.c.l.b16 %v3273
        %v3430 = vunpack.c.h.b16 %v3273
        %v3431 = vunpack.c.l.b16 %v3274
        %v3432 = vunpack.c.h.b16 %v3274
        %v3433 = vunpack.c.l.b16 %v3275
        %v3434 = vunpack.c.h.b16 %v3275
        %v3435 = vunpack.c.l.b16 %v3276
        %v3436 = vunpack.c.h.b16 %v3276
        %v3437 = vunpack.c.l.b16 %v3277
        %v3438 = vunpack.c.h.b16 %v3277
        %v3439 = vunpack.c.l.b16 %v3278
        %v3440 = vunpack.c.h.b16 %v3278
        %v3441 = vunpack.c.l.b16 %v3279
        %v3442 = vunpack.c.h.b16 %v3279
        %v3443 = vunpack.c.l.b16 %v3280
        %v3444 = vunpack.c.h.b16 %v3280
        %v3445 = vunpack.c.l.b16 %v3281
        %v3446 = vunpack.c.h.b16 %v3281
        %v3447 = vunpack.c.l.b16 %v3282
        %v3448 = vunpack.c.h.b16 %v3282
        %v3449 = vunpack.c.l.b16 %v3283
        %v3450 = vunpack.c.h.b16 %v3283
        %v3451 = vunpack.c.l.b16 %v3284
        %v3452 = vunpack.c.h.b16 %v3284
        %v3453 = vunpack.c.l.b16 %v3285
        %v3454 = vunpack.c.h.b16 %v3285
        %v3455 = vunpack.c.l.b16 %v3286
        %v3456 = vunpack.c.h.b16 %v3286
        %v3457 = vunpack.c.l.b16 %v3287
        %v3458 = vunpack.c.h.b16 %v3287
        %v3459 = vunpack.c.l.b16 %v3288
        %v3460 = vunpack.c.h.b16 %v3288
        %v3461 = vunpack.c.l.b16 %v3289
        %v3462 = vunpack.c.h.b16 %v3289
        %v3463 = vunpack.c.l.b16 %v3290
        %v3464 = vunpack.c.h.b16 %v3290
        %v3465 = vunpack.c.l.b16 %v3291
        %v3466 = vunpack.c.h.b16 %v3291
        %v3467 = vunpack.c.l.b16 %v3292
        %v3468 = vunpack.c.h.b16 %v3292
        %v3469 = vunpack.c.l.b16 %v3293
        %v3470 = vunpack.c.h.b16 %v3293
        %v3471 = vunpack.c.l.b16 %v3294
        %v3472 = vunpack.c.h.b16 %v3294
        %v3473 = vunpack.c.l.b16 %v3295
        %v3474 = vunpack.c.h.b16 %v3295
        %v3475 = vunpack.c.l.b16 %v3296
        %v3476 = vunpack.c.h.b16 %v3296
        %v3477 = vunpack.c.l.b16 %v3297
        %v3478 = vunpack.c.h.b16 %v3297
        %v3479 = vunpack.c.l.b16 %v3298
        %v3480 = vunpack.c.h.b16 %v3298
        %v3481 = vunpack.c.l.b16 %v3299
        %v3482 = vunpack.c.h.b16 %v3299
        %v3483 = vunpack.c.l.b16 %v3300
        %v3484 = vunpack.c.h.b16 %v3300
        %v3485 = vunpack.c.l.b16 %v3301
        %v3486 = vunpack.c.h.b16 %v3301
        %v3487 = vunpack.c.l.b16 %v3302
        %v3488 = vunpack.c.h.b16 %v3302
        %v3489 = vunpack.c.l.b16 %v3303
        %v3490 = vunpack.c.h.b16 %v3303
        %v3491 = vunpack.c.l.b16 %v3304
        %v3492 = vunpack.c.h.b16 %v3304
        %v3493 = vunpack.c.l.b16 %v3305
        %v3494 = vunpack.c.h.b16 %v3305
        %v3495 = vunpack.c.l.b16 %v3306
        %v3496 = vunpack.c.h.b16 %v3306
        %v3497 = vunpack.c.l.b16 %v3307
        %v3498 = vunpack.c.h.b16 %v3307
        %v3499 = vunpack.c.l.b16 %v3308
        %v3500 = vunpack.c.h.b16 %v3308
        %v3501 = vpack.c.b16 %v3377, %v3373
        %v3502 = vpack.c.b16 %v3378, %v3374
        %v3503 = vpack.c.b16 %v3379, %v3375
        %v3504 = vpack.c.b16 %v3380, %v3376
        %v3505 = vpack.c.b16 %v3385, %v3381
        %v3506 = vpack.c.b16 %v3386, %v3382
        %v3507 = vpack.c.b16 %v3387, %v3383
        %v3508 = vpack.c.b16 %v3388, %v3384
        %v3509 = vpack.c.b16 %v3393, %v3389
        %v3510 = vpack.c.b16 %v3394, %v3390
        %v3511 = vpack.c.b16 %v3395, %v3391
        %v3512 = vpack.c.b16 %v3396, %v3392
        %v3513 = vpack.c.b16 %v3401, %v3397
        %v3514 = vpack.c.b16 %v3402, %v3398
        %v3515 = vpack.c.b16 %v3403, %v3399
        %v3516 = vpack.c.b16 %v3404, %v3400
        %v3517 = vpack.c.b16 %v3409, %v3405
        %v3518 = vpack.c.b16 %v3410, %v3406
        %v3519 = vpack.c.b16 %v3411, %v3407
        %v3520 = vpack.c.b16 %v3412, %v3408
        %v3521 = vpack.c.b16 %v3417, %v3413
        %v3522 = vpack.c.b16 %v3418, %v3414
        %v3523 = vpack.c.b16 %v3419, %v3415
        %v3524 = vpack.c.b16 %v3420, %v3416
        %v3525 = vpack.c.b16 %v3425, %v3421
        %v3526 = vpack.c.b16 %v3426, %v3422
        %v3527 = vpack.c.b16 %v3427, %v3423
        %v3528 = vpack.c.b16 %v3428, %v3424
        %v3529 = vpack.c.b16 %v3433, %v3429
        %v3530 = vpack.c.b16 %v3434, %v3430
        %v3531 = vpack.c.b16 %v3435, %v3431
        %v3532 = vpack.c.b16 %v3436, %v3432
        %v3533 = vpack.c.b16 %v3441, %v3437
        %v3534 = vpack.c.b16 %v3442, %v3438
        %v3535 = vpack.c.b16 %v3443, %v3439
        %v3536 = vpack.c.b16 %v3444, %v3440
        %v3537 = vpack.c.b16 %v3449, %v3445
        %v3538 = vpack.c.b16 %v3450, %v3446
        %v3539 = vpack.c.b16 %v3451, %v3447
        %v3540 = vpack.c.b16 %v3452, %v3448
        %v3541 = vpack.c.b16 %v3457, %v3453
        %v3542 = vpack.c.b16 %v3458, %v3454
        %v3543 = vpack.c.b16 %v3459, %v3455
        %v3544 = vpack.c.b16 %v3460, %v3456
        %v3545 = vpack.c.b16 %v3465, %v3461
        %v3546 = vpack.c.b16 %v3466, %v3462
        %v3547 = vpack.c.b16 %v3467, %v3463
        %v3548 = vpack.c.b16 %v3468, %v3464
        %v3549 = vpack.c.b16 %v3473, %v3469
        %v3550 = vpack.c.b16 %v3474, %v3470
        %v3551 = vpack.c.b16 %v3475, %v3471
        %v3552 = vpack.c.b16 %v3476, %v3472
        %v3553 = vpack.c.b16 %v3481, %v3477
        %v3554 = vpack.c.b16 %v3482, %v3478
        %v3555 = vpack.c.b16 %v3483, %v3479
        %v3556 = vpack.c.b16 %v3484, %v3480
        %v3557 = vpack.c.b16 %v3489, %v3485
        %v3558 = vpack.c.b16 %v3490, %v3486
        %v3559 = vpack.c.b16 %v3491, %v3487
        %v3560 = vpack.c.b16 %v3492, %v3488
        %v3561 = vpack.c.b16 %v3497, %v3493
        %v3562 = vpack.c.b16 %v3498, %v3494
        %v3563 = vpack.c.b16 %v3499, %v3495
        %v3564 = vpack.c.b16 %v3500, %v3496
        %3629 = vmatprep.subr.bf16.mxu0 %v3530
        %3630 = vmatpush1.bf16.msra.mxu0 %v3529
        %3631 = vmatprep.subr.bf16.mxu0 %v3526
        %3632 = vmatpush1.bf16.msra.mxu0 %v3525
        %3633 = vmatprep.subr.bf16.mxu0 %v3522
        %3634 = vmatpush1.bf16.msra.mxu0 %v3521
        %3635 = vmatprep.subr.bf16.mxu0 %v3518
        %3636 = vmatpush1.bf16.msra.mxu0 %v3517
        %3637 = vmatprep.subr.bf16.mxu0 %v3514
        %3638 = vmatpush1.bf16.msra.mxu0 %v3513
        %3639 = vmatprep.subr.bf16.mxu0 %v3510
        %3640 = vmatpush1.bf16.msra.mxu0 %v3509
        %3641 = vmatprep.subr.bf16.mxu0 %v3506
        %3642 = vmatpush1.bf16.msra.mxu0 %v3505
        %3643 = vmatprep.subr.bf16.mxu0 %v3502
        %3644 = vmatpush1.bf16.msra.mxu0 %v3501
        %3645 = vmatprep.subr.bf16.mxu0 %v3562
        %3646 = vmatpush2.bf16.msra.mxu0 %v3561
        %3647 = vmatprep.subr.bf16.mxu0 %v3558
        %3648 = vmatpush2.bf16.msra.mxu0 %v3557
        %3649 = vmatprep.subr.bf16.mxu0 %v3554
        %3650 = vmatpush2.bf16.msra.mxu0 %v3553
        %3651 = vmatprep.subr.bf16.mxu0 %v3550
        %3652 = vmatpush2.bf16.msra.mxu0 %v3549
        %3653 = vmatprep.subr.bf16.mxu0 %v3546
        %3654 = vmatpush2.bf16.msra.mxu0 %v3545
        %3655 = vmatprep.subr.bf16.mxu0 %v3542
        %3656 = vmatpush2.bf16.msra.mxu0 %v3541
        %3657 = vmatprep.subr.bf16.mxu0 %v3538
        %3658 = vmatpush2.bf16.msra.mxu0 %v3537
        %3659 = vmatprep.subr.bf16.mxu0 %v3534
        %3660 = vmatpush2.bf16.msra.mxu0 %v3533
        %3661 = vmatprep.mubr.bf16.mxu0 %v3182
        %3662 = vmatmul.mubr.bf16.gmra.mxu0 %v3181
        %v3663 = vpop.f32.mrf.mxu0
        %v3664 = vadd.f32 0.0, %v3663
        %v3665 = vpop.f32.mrf.mxu0
        %v3666 = vadd.f32 0.0, %v3665
        %v3667 = vpop.f32.mrf.mxu0
        %v3668 = vadd.f32 0.0, %v3667
        %v3669 = vpop.f32.mrf.mxu0
        %v3670 = vadd.f32 0.0, %v3669
        %3671 = vmatprep.mubr.bf16.mxu0 %v3184
        %3672 = vmatmul.mubr.bf16.gmra.mxu0 %v3183
        %v3673 = vpop.f32.mrf.mxu0
        %v3674 = vadd.f32 0.0, %v3673
        %v3675 = vpop.f32.mrf.mxu0
        %v3676 = vadd.f32 0.0, %v3675
        %v3677 = vpop.f32.mrf.mxu0
        %v3678 = vadd.f32 0.0, %v3677
        %v3679 = vpop.f32.mrf.mxu0
        %v3680 = vadd.f32 0.0, %v3679
        %3681 = vmatprep.mubr.bf16.mxu0 %v3186
        %3682 = vmatmul.mubr.bf16.gmra.mxu0 %v3185
        %v3683 = vpop.f32.mrf.mxu0
        %v3684 = vadd.f32 0.0, %v3683
        %v3685 = vpop.f32.mrf.mxu0
        %v3686 = vadd.f32 0.0, %v3685
        %v3687 = vpop.f32.mrf.mxu0
        %v3688 = vadd.f32 0.0, %v3687
        %v3689 = vpop.f32.mrf.mxu0
        %v3690 = vadd.f32 0.0, %v3689
        %3691 = vmatprep.mubr.bf16.mxu0 %v3188
        %3692 = vmatmul.mubr.bf16.gmra.mxu0 %v3187
        %v3693 = vpop.f32.mrf.mxu0
        %v3694 = vadd.f32 0.0, %v3693
        %v3695 = vpop.f32.mrf.mxu0
        %v3696 = vadd.f32 0.0, %v3695
        %v3697 = vpop.f32.mrf.mxu0
        %v3698 = vadd.f32 0.0, %v3697
        %v3699 = vpop.f32.mrf.mxu0
        %v3700 = vadd.f32 0.0, %v3699
        %3701 = vmatprep.mubr.bf16.mxu0 %v3190
        %3702 = vmatmul.mubr.bf16.gmra.mxu0 %v3189
        %v3703 = vpop.f32.mrf.mxu0
        %v3704 = vadd.f32 0.0, %v3703
        %v3705 = vpop.f32.mrf.mxu0
        %v3706 = vadd.f32 0.0, %v3705
        %v3707 = vpop.f32.mrf.mxu0
        %v3708 = vadd.f32 0.0, %v3707
        %v3709 = vpop.f32.mrf.mxu0
        %v3710 = vadd.f32 0.0, %v3709
        %3711 = vmatprep.mubr.bf16.mxu0 %v3192
        %3712 = vmatmul.mubr.bf16.gmra.mxu0 %v3191
        %v3713 = vpop.f32.mrf.mxu0
        %v3714 = vadd.f32 0.0, %v3713
        %v3715 = vpop.f32.mrf.mxu0
        %v3716 = vadd.f32 0.0, %v3715
        %v3717 = vpop.f32.mrf.mxu0
        %v3718 = vadd.f32 0.0, %v3717
        %v3719 = vpop.f32.mrf.mxu0
        %v3720 = vadd.f32 0.0, %v3719
        %3721 = vmatprep.mubr.bf16.mxu0 %v3194
        %3722 = vmatmul.mubr.bf16.gmra.mxu0 %v3193
        %v3723 = vpop.f32.mrf.mxu0
        %v3724 = vadd.f32 0.0, %v3723
        %v3725 = vpop.f32.mrf.mxu0
        %v3726 = vadd.f32 0.0, %v3725
        %v3727 = vpop.f32.mrf.mxu0
        %v3728 = vadd.f32 0.0, %v3727
        %v3729 = vpop.f32.mrf.mxu0
        %v3730 = vadd.f32 0.0, %v3729
        %3731 = vmatprep.mubr.bf16.mxu0 %v3196
        %3732 = vmatmul.mubr.bf16.gmra.mxu0 %v3195
        %v3733 = vpop.f32.mrf.mxu0
        %v3734 = vadd.f32 0.0, %v3733
        %v3735 = vpop.f32.mrf.mxu0
        %v3736 = vadd.f32 0.0, %v3735
        %v3737 = vpop.f32.mrf.mxu0
        %v3738 = vadd.f32 0.0, %v3737
        %v3739 = vpop.f32.mrf.mxu0
        %v3740 = vadd.f32 0.0, %v3739
        %3741 = vmatprep.mubr.bf16.mxu0 %v3198
        %3742 = vmatmul.mubr.bf16.gmra.mxu0 %v3197
        %v3743 = vpop.f32.mrf.mxu0
        %v3744 = vadd.f32 0.0, %v3743
        %v3745 = vpop.f32.mrf.mxu0
        %v3746 = vadd.f32 0.0, %v3745
        %v3747 = vpop.f32.mrf.mxu0
        %v3748 = vadd.f32 0.0, %v3747
        %v3749 = vpop.f32.mrf.mxu0
        %v3750 = vadd.f32 0.0, %v3749
        %3751 = vmatprep.mubr.bf16.mxu0 %v3200
        %3752 = vmatmul.mubr.bf16.gmra.mxu0 %v3199
        %v3753 = vpop.f32.mrf.mxu0
        %v3754 = vadd.f32 0.0, %v3753
        %v3755 = vpop.f32.mrf.mxu0
        %v3756 = vadd.f32 0.0, %v3755
        %v3757 = vpop.f32.mrf.mxu0
        %v3758 = vadd.f32 0.0, %v3757
        %v3759 = vpop.f32.mrf.mxu0
        %v3760 = vadd.f32 0.0, %v3759
        %3761 = vmatprep.mubr.bf16.mxu0 %v3202
        %3762 = vmatmul.mubr.bf16.gmra.mxu0 %v3201
        %v3763 = vpop.f32.mrf.mxu0
        %v3764 = vadd.f32 0.0, %v3763
        %v3765 = vpop.f32.mrf.mxu0
        %v3766 = vadd.f32 0.0, %v3765
        %v3767 = vpop.f32.mrf.mxu0
        %v3768 = vadd.f32 0.0, %v3767
        %v3769 = vpop.f32.mrf.mxu0
        %v3770 = vadd.f32 0.0, %v3769
        %3771 = vmatprep.mubr.bf16.mxu0 %v3204
        %3772 = vmatmul.mubr.bf16.gmra.mxu0 %v3203
        %v3773 = vpop.f32.mrf.mxu0
        %v3774 = vadd.f32 0.0, %v3773
        %v3775 = vpop.f32.mrf.mxu0
        %v3776 = vadd.f32 0.0, %v3775
        %v3777 = vpop.f32.mrf.mxu0
        %v3778 = vadd.f32 0.0, %v3777
        %v3779 = vpop.f32.mrf.mxu0
        %v3780 = vadd.f32 0.0, %v3779
        %3781 = vmatprep.mubr.bf16.mxu0 %v3206
        %3782 = vmatmul.mubr.bf16.gmra.mxu0 %v3205
        %v3783 = vpop.f32.mrf.mxu0
        %v3784 = vadd.f32 0.0, %v3783
        %v3785 = vpop.f32.mrf.mxu0
        %v3786 = vadd.f32 0.0, %v3785
        %v3787 = vpop.f32.mrf.mxu0
        %v3788 = vadd.f32 0.0, %v3787
        %v3789 = vpop.f32.mrf.mxu0
        %v3790 = vadd.f32 0.0, %v3789
        %3791 = vmatprep.mubr.bf16.mxu0 %v3208
        %3792 = vmatmul.mubr.bf16.gmra.mxu0 %v3207
        %v3793 = vpop.f32.mrf.mxu0
        %v3794 = vadd.f32 0.0, %v3793
        %v3795 = vpop.f32.mrf.mxu0
        %v3796 = vadd.f32 0.0, %v3795
        %v3797 = vpop.f32.mrf.mxu0
        %v3798 = vadd.f32 0.0, %v3797
        %v3799 = vpop.f32.mrf.mxu0
        %v3800 = vadd.f32 0.0, %v3799
        %3801 = vmatprep.mubr.bf16.mxu0 %v3210
        %3802 = vmatmul.mubr.bf16.gmra.mxu0 %v3209
        %v3803 = vpop.f32.mrf.mxu0
        %v3804 = vadd.f32 0.0, %v3803
        %v3805 = vpop.f32.mrf.mxu0
        %v3806 = vadd.f32 0.0, %v3805
        %v3807 = vpop.f32.mrf.mxu0
        %v3808 = vadd.f32 0.0, %v3807
        %v3809 = vpop.f32.mrf.mxu0
        %v3810 = vadd.f32 0.0, %v3809
        %3811 = vmatprep.mubr.bf16.mxu0 %v3212
        %3812 = vmatmul.mubr.bf16.gmra.mxu0 %v3211
        %v3813 = vpop.f32.mrf.mxu0
        %v3814 = vadd.f32 0.0, %v3813
        %v3815 = vpop.f32.mrf.mxu0
        %v3816 = vadd.f32 0.0, %v3815
        %v3817 = vpop.f32.mrf.mxu0
        %v3818 = vadd.f32 0.0, %v3817
        %v3819 = vpop.f32.mrf.mxu0
        %v3820 = vadd.f32 0.0, %v3819
        %3821 = vmatprep.mubr.bf16.mxu0 %v3214
        %3822 = vmatmul.mubr.bf16.gmra.mxu0 %v3213
        %v3823 = vpop.f32.mrf.mxu0
        %v3824 = vadd.f32 0.0, %v3823
        %v3825 = vpop.f32.mrf.mxu0
        %v3826 = vadd.f32 0.0, %v3825
        %v3827 = vpop.f32.mrf.mxu0
        %v3828 = vadd.f32 0.0, %v3827
        %v3829 = vpop.f32.mrf.mxu0
        %v3830 = vadd.f32 0.0, %v3829
        %3831 = vmatprep.mubr.bf16.mxu0 %v3216
        %3832 = vmatmul.mubr.bf16.gmra.mxu0 %v3215
        %v3833 = vpop.f32.mrf.mxu0
        %v3834 = vadd.f32 0.0, %v3833
        %v3835 = vpop.f32.mrf.mxu0
        %v3836 = vadd.f32 0.0, %v3835
        %v3837 = vpop.f32.mrf.mxu0
        %v3838 = vadd.f32 0.0, %v3837
        %v3839 = vpop.f32.mrf.mxu0
        %v3840 = vadd.f32 0.0, %v3839
        %3841 = vmatprep.mubr.bf16.mxu0 %v3218
        %3842 = vmatmul.mubr.bf16.gmra.mxu0 %v3217
        %v3843 = vpop.f32.mrf.mxu0
        %v3844 = vadd.f32 0.0, %v3843
        %v3845 = vpop.f32.mrf.mxu0
        %v3846 = vadd.f32 0.0, %v3845
        %v3847 = vpop.f32.mrf.mxu0
        %v3848 = vadd.f32 0.0, %v3847
        %v3849 = vpop.f32.mrf.mxu0
        %v3850 = vadd.f32 0.0, %v3849
        %3851 = vmatprep.mubr.bf16.mxu0 %v3220
        %3852 = vmatmul.mubr.bf16.gmra.mxu0 %v3219
        %v3853 = vpop.f32.mrf.mxu0
        %v3854 = vadd.f32 0.0, %v3853
        %v3855 = vpop.f32.mrf.mxu0
        %v3856 = vadd.f32 0.0, %v3855
        %v3857 = vpop.f32.mrf.mxu0
        %v3858 = vadd.f32 0.0, %v3857
        %v3859 = vpop.f32.mrf.mxu0
        %v3860 = vadd.f32 0.0, %v3859
        %3861 = vmatprep.mubr.bf16.mxu0 %v3222
        %3862 = vmatmul.mubr.bf16.gmra.mxu0 %v3221
        %v3863 = vpop.f32.mrf.mxu0
        %v3864 = vadd.f32 0.0, %v3863
        %v3865 = vpop.f32.mrf.mxu0
        %v3866 = vadd.f32 0.0, %v3865
        %v3867 = vpop.f32.mrf.mxu0
        %v3868 = vadd.f32 0.0, %v3867
        %v3869 = vpop.f32.mrf.mxu0
        %v3870 = vadd.f32 0.0, %v3869
        %3871 = vmatprep.mubr.bf16.mxu0 %v3224
        %3872 = vmatmul.mubr.bf16.gmra.mxu0 %v3223
        %v3873 = vpop.f32.mrf.mxu0
        %v3874 = vadd.f32 0.0, %v3873
        %v3875 = vpop.f32.mrf.mxu0
        %v3876 = vadd.f32 0.0, %v3875
        %v3877 = vpop.f32.mrf.mxu0
        %v3878 = vadd.f32 0.0, %v3877
        %v3879 = vpop.f32.mrf.mxu0
        %v3880 = vadd.f32 0.0, %v3879
        %3881 = vmatprep.mubr.bf16.mxu0 %v3226
        %3882 = vmatmul.mubr.bf16.gmra.mxu0 %v3225
        %v3883 = vpop.f32.mrf.mxu0
        %v3884 = vadd.f32 0.0, %v3883
        %v3885 = vpop.f32.mrf.mxu0
        %v3886 = vadd.f32 0.0, %v3885
        %v3887 = vpop.f32.mrf.mxu0
        %v3888 = vadd.f32 0.0, %v3887
        %v3889 = vpop.f32.mrf.mxu0
        %v3890 = vadd.f32 0.0, %v3889
        %3891 = vmatprep.mubr.bf16.mxu0 %v3228
        %3892 = vmatmul.mubr.bf16.gmra.mxu0 %v3227
        %v3893 = vpop.f32.mrf.mxu0
        %v3894 = vadd.f32 0.0, %v3893
        %v3895 = vpop.f32.mrf.mxu0
        %v3896 = vadd.f32 0.0, %v3895
        %v3897 = vpop.f32.mrf.mxu0
        %v3898 = vadd.f32 0.0, %v3897
        %v3899 = vpop.f32.mrf.mxu0
        %v3900 = vadd.f32 0.0, %v3899
        %3901 = vmatprep.mubr.bf16.mxu0 %v3230
        %3902 = vmatmul.mubr.bf16.gmra.mxu0 %v3229
        %v3903 = vpop.f32.mrf.mxu0
        %v3904 = vadd.f32 0.0, %v3903
        %v3905 = vpop.f32.mrf.mxu0
        %v3906 = vadd.f32 0.0, %v3905
        %v3907 = vpop.f32.mrf.mxu0
        %v3908 = vadd.f32 0.0, %v3907
        %v3909 = vpop.f32.mrf.mxu0
        %v3910 = vadd.f32 0.0, %v3909
        %3911 = vmatprep.mubr.bf16.mxu0 %v3232
        %3912 = vmatmul.mubr.bf16.gmra.mxu0 %v3231
        %v3913 = vpop.f32.mrf.mxu0
        %v3914 = vadd.f32 0.0, %v3913
        %v3915 = vpop.f32.mrf.mxu0
        %v3916 = vadd.f32 0.0, %v3915
        %v3917 = vpop.f32.mrf.mxu0
        %v3918 = vadd.f32 0.0, %v3917
        %v3919 = vpop.f32.mrf.mxu0
        %v3920 = vadd.f32 0.0, %v3919
        %3921 = vmatprep.mubr.bf16.mxu0 %v3234
        %3922 = vmatmul.mubr.bf16.gmra.mxu0 %v3233
        %v3923 = vpop.f32.mrf.mxu0
        %v3924 = vadd.f32 0.0, %v3923
        %v3925 = vpop.f32.mrf.mxu0
        %v3926 = vadd.f32 0.0, %v3925
        %v3927 = vpop.f32.mrf.mxu0
        %v3928 = vadd.f32 0.0, %v3927
        %v3929 = vpop.f32.mrf.mxu0
        %v3930 = vadd.f32 0.0, %v3929
        %3931 = vmatprep.mubr.bf16.mxu0 %v3236
        %3932 = vmatmul.mubr.bf16.gmra.mxu0 %v3235
        %v3933 = vpop.f32.mrf.mxu0
        %v3934 = vadd.f32 0.0, %v3933
        %v3935 = vpop.f32.mrf.mxu0
        %v3936 = vadd.f32 0.0, %v3935
        %v3937 = vpop.f32.mrf.mxu0
        %v3938 = vadd.f32 0.0, %v3937
        %v3939 = vpop.f32.mrf.mxu0
        %v3940 = vadd.f32 0.0, %v3939
        %3941 = vmatprep.mubr.bf16.mxu0 %v3238
        %3942 = vmatmul.mubr.bf16.gmra.mxu0 %v3237
        %v3943 = vpop.f32.mrf.mxu0
        %v3944 = vadd.f32 0.0, %v3943
        %v3945 = vpop.f32.mrf.mxu0
        %v3946 = vadd.f32 0.0, %v3945
        %v3947 = vpop.f32.mrf.mxu0
        %v3948 = vadd.f32 0.0, %v3947
        %v3949 = vpop.f32.mrf.mxu0
        %v3950 = vadd.f32 0.0, %v3949
        %3951 = vmatprep.mubr.bf16.mxu0 %v3240
        %3952 = vmatmul.mubr.bf16.gmra.mxu0 %v3239
        %v3953 = vpop.f32.mrf.mxu0
        %v3954 = vadd.f32 0.0, %v3953
        %v3955 = vpop.f32.mrf.mxu0
        %v3956 = vadd.f32 0.0, %v3955
        %v3957 = vpop.f32.mrf.mxu0
        %v3958 = vadd.f32 0.0, %v3957
        %v3959 = vpop.f32.mrf.mxu0
        %v3960 = vadd.f32 0.0, %v3959
        %3961 = vmatprep.mubr.bf16.mxu0 %v3242
        %3962 = vmatmul.mubr.bf16.gmra.mxu0 %v3241
        %v3963 = vpop.f32.mrf.mxu0
        %v3964 = vadd.f32 0.0, %v3963
        %v3965 = vpop.f32.mrf.mxu0
        %v3966 = vadd.f32 0.0, %v3965
        %v3967 = vpop.f32.mrf.mxu0
        %v3968 = vadd.f32 0.0, %v3967
        %v3969 = vpop.f32.mrf.mxu0
        %v3970 = vadd.f32 0.0, %v3969
        %3971 = vmatprep.mubr.bf16.mxu0 %v3244
        %3972 = vmatmul.mubr.bf16.gmra.mxu0 %v3243
        %v3973 = vpop.f32.mrf.mxu0
        %v3974 = vadd.f32 0.0, %v3973
        %v3975 = vpop.f32.mrf.mxu0
        %v3976 = vadd.f32 0.0, %v3975
        %v3977 = vpop.f32.mrf.mxu0
        %v3978 = vadd.f32 0.0, %v3977
        %v3979 = vpop.f32.mrf.mxu0
        %v3980 = vadd.f32 0.0, %v3979
        %3981 = vdwg.mxu0
        %3982 = vmatprep.subr.bf16.mxu0 %v3532
        %3983 = vmatpush1.bf16.msra.mxu0 %v3531
        %3984 = vmatprep.subr.bf16.mxu0 %v3528
        %3985 = vmatpush1.bf16.msra.mxu0 %v3527
        %3986 = vmatprep.subr.bf16.mxu0 %v3524
        %3987 = vmatpush1.bf16.msra.mxu0 %v3523
        %3988 = vmatprep.subr.bf16.mxu0 %v3520
        %3989 = vmatpush1.bf16.msra.mxu0 %v3519
        %3990 = vmatprep.subr.bf16.mxu0 %v3516
        %3991 = vmatpush1.bf16.msra.mxu0 %v3515
        %3992 = vmatprep.subr.bf16.mxu0 %v3512
        %3993 = vmatpush1.bf16.msra.mxu0 %v3511
        %3994 = vmatprep.subr.bf16.mxu0 %v3508
        %3995 = vmatpush1.bf16.msra.mxu0 %v3507
        %3996 = vmatprep.subr.bf16.mxu0 %v3504
        %3997 = vmatpush1.bf16.msra.mxu0 %v3503
        %3998 = vmatprep.subr.bf16.mxu0 %v3564
        %3999 = vmatpush2.bf16.msra.mxu0 %v3563
        %4000 = vmatprep.subr.bf16.mxu0 %v3560
        %4001 = vmatpush2.bf16.msra.mxu0 %v3559
        %4002 = vmatprep.subr.bf16.mxu0 %v3556
        %4003 = vmatpush2.bf16.msra.mxu0 %v3555
        %4004 = vmatprep.subr.bf16.mxu0 %v3552
        %4005 = vmatpush2.bf16.msra.mxu0 %v3551
        %4006 = vmatprep.subr.bf16.mxu0 %v3548
        %4007 = vmatpush2.bf16.msra.mxu0 %v3547
        %4008 = vmatprep.subr.bf16.mxu0 %v3544
        %4009 = vmatpush2.bf16.msra.mxu0 %v3543
        %4010 = vmatprep.subr.bf16.mxu0 %v3540
        %4011 = vmatpush2.bf16.msra.mxu0 %v3539
        %4012 = vmatprep.subr.bf16.mxu0 %v3536
        %4013 = vmatpush2.bf16.msra.mxu0 %v3535
        %4014 = vmatprep.mubr.bf16.mxu0 %v3182
        %4015 = vmatmul.mubr.bf16.gmra.mxu0 %v3181
        %v4016 = vpop.f32.mrf.mxu0
        %v4017 = vadd.f32 0.0, %v4016
        %v4018 = vpop.f32.mrf.mxu0
        %v4019 = vadd.f32 0.0, %v4018
        %v4020 = vpop.f32.mrf.mxu0
        %v4021 = vadd.f32 0.0, %v4020
        %v4022 = vpop.f32.mrf.mxu0
        %v4023 = vadd.f32 0.0, %v4022
        %4024 = vmatprep.mubr.bf16.mxu0 %v3184
        %4025 = vmatmul.mubr.bf16.gmra.mxu0 %v3183
        %v4026 = vpop.f32.mrf.mxu0
        %v4027 = vadd.f32 0.0, %v4026
        %v4028 = vpop.f32.mrf.mxu0
        %v4029 = vadd.f32 0.0, %v4028
        %v4030 = vpop.f32.mrf.mxu0
        %v4031 = vadd.f32 0.0, %v4030
        %v4032 = vpop.f32.mrf.mxu0
        %v4033 = vadd.f32 0.0, %v4032
        %4034 = vmatprep.mubr.bf16.mxu0 %v3186
        %4035 = vmatmul.mubr.bf16.gmra.mxu0 %v3185
        %v4036 = vpop.f32.mrf.mxu0
        %v4037 = vadd.f32 0.0, %v4036
        %v4038 = vpop.f32.mrf.mxu0
        %v4039 = vadd.f32 0.0, %v4038
        %v4040 = vpop.f32.mrf.mxu0
        %v4041 = vadd.f32 0.0, %v4040
        %v4042 = vpop.f32.mrf.mxu0
        %v4043 = vadd.f32 0.0, %v4042
        %4044 = vmatprep.mubr.bf16.mxu0 %v3188
        %4045 = vmatmul.mubr.bf16.gmra.mxu0 %v3187
        %v4046 = vpop.f32.mrf.mxu0
        %v4047 = vadd.f32 0.0, %v4046
        %v4048 = vpop.f32.mrf.mxu0
        %v4049 = vadd.f32 0.0, %v4048
        %v4050 = vpop.f32.mrf.mxu0
        %v4051 = vadd.f32 0.0, %v4050
        %v4052 = vpop.f32.mrf.mxu0
        %v4053 = vadd.f32 0.0, %v4052
        %4054 = vmatprep.mubr.bf16.mxu0 %v3190
        %4055 = vmatmul.mubr.bf16.gmra.mxu0 %v3189
        %v4056 = vpop.f32.mrf.mxu0
        %v4057 = vadd.f32 0.0, %v4056
        %v4058 = vpop.f32.mrf.mxu0
        %v4059 = vadd.f32 0.0, %v4058
        %v4060 = vpop.f32.mrf.mxu0
        %v4061 = vadd.f32 0.0, %v4060
        %v4062 = vpop.f32.mrf.mxu0
        %v4063 = vadd.f32 0.0, %v4062
        %4064 = vmatprep.mubr.bf16.mxu0 %v3192
        %4065 = vmatmul.mubr.bf16.gmra.mxu0 %v3191
        %v4066 = vpop.f32.mrf.mxu0
        %v4067 = vadd.f32 0.0, %v4066
        %v4068 = vpop.f32.mrf.mxu0
        %v4069 = vadd.f32 0.0, %v4068
        %v4070 = vpop.f32.mrf.mxu0
        %v4071 = vadd.f32 0.0, %v4070
        %v4072 = vpop.f32.mrf.mxu0
        %v4073 = vadd.f32 0.0, %v4072
        %4074 = vmatprep.mubr.bf16.mxu0 %v3194
        %4075 = vmatmul.mubr.bf16.gmra.mxu0 %v3193
        %v4076 = vpop.f32.mrf.mxu0
        %v4077 = vadd.f32 0.0, %v4076
        %v4078 = vpop.f32.mrf.mxu0
        %v4079 = vadd.f32 0.0, %v4078
        %v4080 = vpop.f32.mrf.mxu0
        %v4081 = vadd.f32 0.0, %v4080
        %v4082 = vpop.f32.mrf.mxu0
        %v4083 = vadd.f32 0.0, %v4082
        %4084 = vmatprep.mubr.bf16.mxu0 %v3196
        %4085 = vmatmul.mubr.bf16.gmra.mxu0 %v3195
        %v4086 = vpop.f32.mrf.mxu0
        %v4087 = vadd.f32 0.0, %v4086
        %v4088 = vpop.f32.mrf.mxu0
        %v4089 = vadd.f32 0.0, %v4088
        %v4090 = vpop.f32.mrf.mxu0
        %v4091 = vadd.f32 0.0, %v4090
        %v4092 = vpop.f32.mrf.mxu0
        %v4093 = vadd.f32 0.0, %v4092
        %4094 = vmatprep.mubr.bf16.mxu0 %v3198
        %4095 = vmatmul.mubr.bf16.gmra.mxu0 %v3197
        %v4096 = vpop.f32.mrf.mxu0
        %v4097 = vadd.f32 0.0, %v4096
        %v4098 = vpop.f32.mrf.mxu0
        %v4099 = vadd.f32 0.0, %v4098
        %v4100 = vpop.f32.mrf.mxu0
        %v4101 = vadd.f32 0.0, %v4100
        %v4102 = vpop.f32.mrf.mxu0
        %v4103 = vadd.f32 0.0, %v4102
        %4104 = vmatprep.mubr.bf16.mxu0 %v3200
        %4105 = vmatmul.mubr.bf16.gmra.mxu0 %v3199
        %v4106 = vpop.f32.mrf.mxu0
        %v4107 = vadd.f32 0.0, %v4106
        %v4108 = vpop.f32.mrf.mxu0
        %v4109 = vadd.f32 0.0, %v4108
        %v4110 = vpop.f32.mrf.mxu0
        %v4111 = vadd.f32 0.0, %v4110
        %v4112 = vpop.f32.mrf.mxu0
        %v4113 = vadd.f32 0.0, %v4112
        %4114 = vmatprep.mubr.bf16.mxu0 %v3202
        %4115 = vmatmul.mubr.bf16.gmra.mxu0 %v3201
        %v4116 = vpop.f32.mrf.mxu0
        %v4117 = vadd.f32 0.0, %v4116
        %v4118 = vpop.f32.mrf.mxu0
        %v4119 = vadd.f32 0.0, %v4118
        %v4120 = vpop.f32.mrf.mxu0
        %v4121 = vadd.f32 0.0, %v4120
        %v4122 = vpop.f32.mrf.mxu0
        %v4123 = vadd.f32 0.0, %v4122
        %4124 = vmatprep.mubr.bf16.mxu0 %v3204
        %4125 = vmatmul.mubr.bf16.gmra.mxu0 %v3203
        %v4126 = vpop.f32.mrf.mxu0
        %v4127 = vadd.f32 0.0, %v4126
        %v4128 = vpop.f32.mrf.mxu0
        %v4129 = vadd.f32 0.0, %v4128
        %v4130 = vpop.f32.mrf.mxu0
        %v4131 = vadd.f32 0.0, %v4130
        %v4132 = vpop.f32.mrf.mxu0
        %v4133 = vadd.f32 0.0, %v4132
        %4134 = vmatprep.mubr.bf16.mxu0 %v3206
        %4135 = vmatmul.mubr.bf16.gmra.mxu0 %v3205
        %v4136 = vpop.f32.mrf.mxu0
        %v4137 = vadd.f32 0.0, %v4136
        %v4138 = vpop.f32.mrf.mxu0
        %v4139 = vadd.f32 0.0, %v4138
        %v4140 = vpop.f32.mrf.mxu0
        %v4141 = vadd.f32 0.0, %v4140
        %v4142 = vpop.f32.mrf.mxu0
        %v4143 = vadd.f32 0.0, %v4142
        %4144 = vmatprep.mubr.bf16.mxu0 %v3208
        %4145 = vmatmul.mubr.bf16.gmra.mxu0 %v3207
        %v4146 = vpop.f32.mrf.mxu0
        %v4147 = vadd.f32 0.0, %v4146
        %v4148 = vpop.f32.mrf.mxu0
        %v4149 = vadd.f32 0.0, %v4148
        %v4150 = vpop.f32.mrf.mxu0
        %v4151 = vadd.f32 0.0, %v4150
        %v4152 = vpop.f32.mrf.mxu0
        %v4153 = vadd.f32 0.0, %v4152
        %4154 = vmatprep.mubr.bf16.mxu0 %v3210
        %4155 = vmatmul.mubr.bf16.gmra.mxu0 %v3209
        %v4156 = vpop.f32.mrf.mxu0
        %v4157 = vadd.f32 0.0, %v4156
        %v4158 = vpop.f32.mrf.mxu0
        %v4159 = vadd.f32 0.0, %v4158
        %v4160 = vpop.f32.mrf.mxu0
        %v4161 = vadd.f32 0.0, %v4160
        %v4162 = vpop.f32.mrf.mxu0
        %v4163 = vadd.f32 0.0, %v4162
        %4164 = vmatprep.mubr.bf16.mxu0 %v3212
        %4165 = vmatmul.mubr.bf16.gmra.mxu0 %v3211
        %v4166 = vpop.f32.mrf.mxu0
        %v4167 = vadd.f32 0.0, %v4166
        %v4168 = vpop.f32.mrf.mxu0
        %v4169 = vadd.f32 0.0, %v4168
        %v4170 = vpop.f32.mrf.mxu0
        %v4171 = vadd.f32 0.0, %v4170
        %v4172 = vpop.f32.mrf.mxu0
        %v4173 = vadd.f32 0.0, %v4172
        %4174 = vmatprep.mubr.bf16.mxu0 %v3214
        %4175 = vmatmul.mubr.bf16.gmra.mxu0 %v3213
        %v4176 = vpop.f32.mrf.mxu0
        %v4177 = vadd.f32 0.0, %v4176
        %v4178 = vpop.f32.mrf.mxu0
        %v4179 = vadd.f32 0.0, %v4178
        %v4180 = vpop.f32.mrf.mxu0
        %v4181 = vadd.f32 0.0, %v4180
        %v4182 = vpop.f32.mrf.mxu0
        %v4183 = vadd.f32 0.0, %v4182
        %4184 = vmatprep.mubr.bf16.mxu0 %v3216
        %4185 = vmatmul.mubr.bf16.gmra.mxu0 %v3215
        %v4186 = vpop.f32.mrf.mxu0
        %v4187 = vadd.f32 0.0, %v4186
        %v4188 = vpop.f32.mrf.mxu0
        %v4189 = vadd.f32 0.0, %v4188
        %v4190 = vpop.f32.mrf.mxu0
        %v4191 = vadd.f32 0.0, %v4190
        %v4192 = vpop.f32.mrf.mxu0
        %v4193 = vadd.f32 0.0, %v4192
        %4194 = vmatprep.mubr.bf16.mxu0 %v3218
        %4195 = vmatmul.mubr.bf16.gmra.mxu0 %v3217
        %v4196 = vpop.f32.mrf.mxu0
        %v4197 = vadd.f32 0.0, %v4196
        %v4198 = vpop.f32.mrf.mxu0
        %v4199 = vadd.f32 0.0, %v4198
        %v4200 = vpop.f32.mrf.mxu0
        %v4201 = vadd.f32 0.0, %v4200
        %v4202 = vpop.f32.mrf.mxu0
        %v4203 = vadd.f32 0.0, %v4202
        %4204 = vmatprep.mubr.bf16.mxu0 %v3220
        %4205 = vmatmul.mubr.bf16.gmra.mxu0 %v3219
        %v4206 = vpop.f32.mrf.mxu0
        %v4207 = vadd.f32 0.0, %v4206
        %v4208 = vpop.f32.mrf.mxu0
        %v4209 = vadd.f32 0.0, %v4208
        %v4210 = vpop.f32.mrf.mxu0
        %v4211 = vadd.f32 0.0, %v4210
        %v4212 = vpop.f32.mrf.mxu0
        %v4213 = vadd.f32 0.0, %v4212
        %4214 = vmatprep.mubr.bf16.mxu0 %v3222
        %4215 = vmatmul.mubr.bf16.gmra.mxu0 %v3221
        %v4216 = vpop.f32.mrf.mxu0
        %v4217 = vadd.f32 0.0, %v4216
        %v4218 = vpop.f32.mrf.mxu0
        %v4219 = vadd.f32 0.0, %v4218
        %v4220 = vpop.f32.mrf.mxu0
        %v4221 = vadd.f32 0.0, %v4220
        %v4222 = vpop.f32.mrf.mxu0
        %v4223 = vadd.f32 0.0, %v4222
        %4224 = vmatprep.mubr.bf16.mxu0 %v3224
        %4225 = vmatmul.mubr.bf16.gmra.mxu0 %v3223
        %v4226 = vpop.f32.mrf.mxu0
        %v4227 = vadd.f32 0.0, %v4226
        %v4228 = vpop.f32.mrf.mxu0
        %v4229 = vadd.f32 0.0, %v4228
        %v4230 = vpop.f32.mrf.mxu0
        %v4231 = vadd.f32 0.0, %v4230
        %v4232 = vpop.f32.mrf.mxu0
        %v4233 = vadd.f32 0.0, %v4232
        %4234 = vmatprep.mubr.bf16.mxu0 %v3226
        %4235 = vmatmul.mubr.bf16.gmra.mxu0 %v3225
        %v4236 = vpop.f32.mrf.mxu0
        %v4237 = vadd.f32 0.0, %v4236
        %v4238 = vpop.f32.mrf.mxu0
        %v4239 = vadd.f32 0.0, %v4238
        %v4240 = vpop.f32.mrf.mxu0
        %v4241 = vadd.f32 0.0, %v4240
        %v4242 = vpop.f32.mrf.mxu0
        %v4243 = vadd.f32 0.0, %v4242
        %4244 = vmatprep.mubr.bf16.mxu0 %v3228
        %4245 = vmatmul.mubr.bf16.gmra.mxu0 %v3227
        %v4246 = vpop.f32.mrf.mxu0
        %v4247 = vadd.f32 0.0, %v4246
        %v4248 = vpop.f32.mrf.mxu0
        %v4249 = vadd.f32 0.0, %v4248
        %v4250 = vpop.f32.mrf.mxu0
        %v4251 = vadd.f32 0.0, %v4250
        %v4252 = vpop.f32.mrf.mxu0
        %v4253 = vadd.f32 0.0, %v4252
        %4254 = vmatprep.mubr.bf16.mxu0 %v3230
        %4255 = vmatmul.mubr.bf16.gmra.mxu0 %v3229
        %v4256 = vpop.f32.mrf.mxu0
        %v4257 = vadd.f32 0.0, %v4256
        %v4258 = vpop.f32.mrf.mxu0
        %v4259 = vadd.f32 0.0, %v4258
        %v4260 = vpop.f32.mrf.mxu0
        %v4261 = vadd.f32 0.0, %v4260
        %v4262 = vpop.f32.mrf.mxu0
        %v4263 = vadd.f32 0.0, %v4262
        %4264 = vmatprep.mubr.bf16.mxu0 %v3232
        %4265 = vmatmul.mubr.bf16.gmra.mxu0 %v3231
        %v4266 = vpop.f32.mrf.mxu0
        %v4267 = vadd.f32 0.0, %v4266
        %v4268 = vpop.f32.mrf.mxu0
        %v4269 = vadd.f32 0.0, %v4268
        %v4270 = vpop.f32.mrf.mxu0
        %v4271 = vadd.f32 0.0, %v4270
        %v4272 = vpop.f32.mrf.mxu0
        %v4273 = vadd.f32 0.0, %v4272
        %4274 = vmatprep.mubr.bf16.mxu0 %v3234
        %4275 = vmatmul.mubr.bf16.gmra.mxu0 %v3233
        %v4276 = vpop.f32.mrf.mxu0
        %v4277 = vadd.f32 0.0, %v4276
        %v4278 = vpop.f32.mrf.mxu0
        %v4279 = vadd.f32 0.0, %v4278
        %v4280 = vpop.f32.mrf.mxu0
        %v4281 = vadd.f32 0.0, %v4280
        %v4282 = vpop.f32.mrf.mxu0
        %v4283 = vadd.f32 0.0, %v4282
        %4284 = vmatprep.mubr.bf16.mxu0 %v3236
        %4285 = vmatmul.mubr.bf16.gmra.mxu0 %v3235
        %v4286 = vpop.f32.mrf.mxu0
        %v4287 = vadd.f32 0.0, %v4286
        %v4288 = vpop.f32.mrf.mxu0
        %v4289 = vadd.f32 0.0, %v4288
        %v4290 = vpop.f32.mrf.mxu0
        %v4291 = vadd.f32 0.0, %v4290
        %v4292 = vpop.f32.mrf.mxu0
        %v4293 = vadd.f32 0.0, %v4292
        %4294 = vmatprep.mubr.bf16.mxu0 %v3238
        %4295 = vmatmul.mubr.bf16.gmra.mxu0 %v3237
        %v4296 = vpop.f32.mrf.mxu0
        %v4297 = vadd.f32 0.0, %v4296
        %v4298 = vpop.f32.mrf.mxu0
        %v4299 = vadd.f32 0.0, %v4298
        %v4300 = vpop.f32.mrf.mxu0
        %v4301 = vadd.f32 0.0, %v4300
        %v4302 = vpop.f32.mrf.mxu0
        %v4303 = vadd.f32 0.0, %v4302
        %4304 = vmatprep.mubr.bf16.mxu0 %v3240
        %4305 = vmatmul.mubr.bf16.gmra.mxu0 %v3239
        %v4306 = vpop.f32.mrf.mxu0
        %v4307 = vadd.f32 0.0, %v4306
        %v4308 = vpop.f32.mrf.mxu0
        %v4309 = vadd.f32 0.0, %v4308
        %v4310 = vpop.f32.mrf.mxu0
        %v4311 = vadd.f32 0.0, %v4310
        %v4312 = vpop.f32.mrf.mxu0
        %v4313 = vadd.f32 0.0, %v4312
        %4314 = vmatprep.mubr.bf16.mxu0 %v3242
        %4315 = vmatmul.mubr.bf16.gmra.mxu0 %v3241
        %v4316 = vpop.f32.mrf.mxu0
        %v4317 = vadd.f32 0.0, %v4316
        %v4318 = vpop.f32.mrf.mxu0
        %v4319 = vadd.f32 0.0, %v4318
        %v4320 = vpop.f32.mrf.mxu0
        %v4321 = vadd.f32 0.0, %v4320
        %v4322 = vpop.f32.mrf.mxu0
        %v4323 = vadd.f32 0.0, %v4322
        %4324 = vmatprep.mubr.bf16.mxu0 %v3244
        %4325 = vmatmul.mubr.bf16.gmra.mxu0 %v3243
        %v4326 = vpop.f32.mrf.mxu0
        %v4327 = vadd.f32 0.0, %v4326
        %v4328 = vpop.f32.mrf.mxu0
        %v4329 = vadd.f32 0.0, %v4328
        %v4330 = vpop.f32.mrf.mxu0
        %v4331 = vadd.f32 0.0, %v4330
        %v4332 = vpop.f32.mrf.mxu0
        %v4333 = vadd.f32 0.0, %v4332
        %4334 = vdwg.mxu0
        %v4343 = vcombine.low %v3130, %v3132
        %v4344 = vcombine.high %v3130, %v3132
        %v4345 = vcombine.low %v3173, %v3175
        %v4346 = vcombine.high %v3173, %v3175
        %v4348 = vunpack.c.l.s4 1966171168
        %v4349 = vunpack.c.0.s8 %v4348
        %v4350 = vlaneseq
        %v4351 = vshrl.u32 %v4350, 7
        %v4352 = vsub.s32 %v4349, %v4351
        %v4353 = vrot.slane %v4343, %v4352
        %v4355 = vunpack.c.l.s4 1966171168
        %v4356 = vunpack.c.0.s8 %v4355
        %v4357 = vlaneseq
        %v4358 = vshrl.u32 %v4357, 7
        %v4359 = vsub.s32 %v4356, %v4358
        %v4360 = vrot.slane %v4344, %v4359
        %v4362 = vunpack.c.l.s4 1966171168
        %v4363 = vunpack.c.0.s8 %v4362
        %v4364 = vlaneseq
        %v4365 = vshrl.u32 %v4364, 7
        %v4366 = vsub.s32 %v4363, %v4365
        %v4367 = vrot.slane %v4345, %v4366
        %v4369 = vunpack.c.l.s4 1966171168
        %v4370 = vunpack.c.0.s8 %v4369
        %v4371 = vlaneseq
        %v4372 = vshrl.u32 %v4371, 7
        %v4373 = vsub.s32 %v4370, %v4372
        %v4374 = vrot.slane %v4346, %v4373
        %v4375 = vcombine.low %v4353, %v4367
        %v4376 = vcombine.high %v4353, %v4367
        %v4377 = vcombine.low %v4360, %v4374
        %v4378 = vcombine.high %v4360, %v4374
        %v4380 = vunpack.c.l.s4 1966171168
        %v4381 = vunpack.c.0.s8 %v4380
        %v4382 = vlaneseq
        %v4383 = vshrl.u32 %v4382, 7
        %v4384 = vsub.s32 %v4381, %v4383
        %v4385 = vrot.slane %v4375, %v4384
        %v4387 = vunpack.c.l.s4 1966171168
        %v4388 = vunpack.c.0.s8 %v4387
        %v4389 = vlaneseq
        %v4390 = vshrl.u32 %v4389, 7
        %v4391 = vsub.s32 %v4388, %v4390
        %v4392 = vrot.slane %v4377, %v4391
        %v4394 = vunpack.c.l.s4 1966171168
        %v4395 = vunpack.c.0.s8 %v4394
        %v4396 = vlaneseq
        %v4397 = vshrl.u32 %v4396, 7
        %v4398 = vsub.s32 %v4395, %v4397
        %v4399 = vrot.slane %v4376, %v4398
        %v4401 = vunpack.c.l.s4 1966171168
        %v4402 = vunpack.c.0.s8 %v4401
        %v4403 = vlaneseq
        %v4404 = vshrl.u32 %v4403, 7
        %v4405 = vsub.s32 %v4402, %v4404
        %v4406 = vrot.slane %v4378, %v4405
        %v4407 = vcombine.high %v4385, %v4385
        %v4408 = vcombine.high %v4392, %v4392
        %v4409 = vcombine.high %v4399, %v4399
        %v4410 = vcombine.high %v4406, %v4406
        %v4411 = vcombine.low %v3134, %v3136
        %v4412 = vcombine.high %v3134, %v3136
        %v4413 = vcombine.low %v3177, %v3179
        %v4414 = vcombine.high %v3177, %v3179
        %v4416 = vunpack.c.l.s4 1966171168
        %v4417 = vunpack.c.0.s8 %v4416
        %v4418 = vlaneseq
        %v4419 = vshrl.u32 %v4418, 7
        %v4420 = vsub.s32 %v4417, %v4419
        %v4421 = vrot.slane %v4411, %v4420
        %v4423 = vunpack.c.l.s4 1966171168
        %v4424 = vunpack.c.0.s8 %v4423
        %v4425 = vlaneseq
        %v4426 = vshrl.u32 %v4425, 7
        %v4427 = vsub.s32 %v4424, %v4426
        %v4428 = vrot.slane %v4412, %v4427
        %v4430 = vunpack.c.l.s4 1966171168
        %v4431 = vunpack.c.0.s8 %v4430
        %v4432 = vlaneseq
        %v4433 = vshrl.u32 %v4432, 7
        %v4434 = vsub.s32 %v4431, %v4433
        %v4435 = vrot.slane %v4413, %v4434
        %v4437 = vunpack.c.l.s4 1966171168
        %v4438 = vunpack.c.0.s8 %v4437
        %v4439 = vlaneseq
        %v4440 = vshrl.u32 %v4439, 7
        %v4441 = vsub.s32 %v4438, %v4440
        %v4442 = vrot.slane %v4414, %v4441
        %v4443 = vcombine.low %v4421, %v4435
        %v4444 = vcombine.high %v4421, %v4435
        %v4445 = vcombine.low %v4428, %v4442
        %v4446 = vcombine.high %v4428, %v4442
        %v4448 = vunpack.c.l.s4 1966171168
        %v4449 = vunpack.c.0.s8 %v4448
        %v4450 = vlaneseq
        %v4451 = vshrl.u32 %v4450, 7
        %v4452 = vsub.s32 %v4449, %v4451
        %v4453 = vrot.slane %v4443, %v4452
        %v4455 = vunpack.c.l.s4 1966171168
        %v4456 = vunpack.c.0.s8 %v4455
        %v4457 = vlaneseq
        %v4458 = vshrl.u32 %v4457, 7
        %v4459 = vsub.s32 %v4456, %v4458
        %v4460 = vrot.slane %v4445, %v4459
        %v4462 = vunpack.c.l.s4 1966171168
        %v4463 = vunpack.c.0.s8 %v4462
        %v4464 = vlaneseq
        %v4465 = vshrl.u32 %v4464, 7
        %v4466 = vsub.s32 %v4463, %v4465
        %v4467 = vrot.slane %v4444, %v4466
        %v4469 = vunpack.c.l.s4 1966171168
        %v4470 = vunpack.c.0.s8 %v4469
        %v4471 = vlaneseq
        %v4472 = vshrl.u32 %v4471, 7
        %v4473 = vsub.s32 %v4470, %v4472
        %v4474 = vrot.slane %v4446, %v4473
        %v4475 = vcombine.high %v4453, %v4453
        %v4476 = vcombine.high %v4460, %v4460
        %v4477 = vcombine.high %v4467, %v4467
        %v4478 = vcombine.high %v4474, %v4474
        %v4479 = vlaneseq
        %v4480 = vshrl.u32 %v4479, 7
        %v4481 = vsub.s32 0, %v4480
        %v4482 = vrot.slane %v4385, %v4481
        %v4483 = vlaneseq
        %v4484 = vshrl.u32 %v4483, 7
        %v4485 = vsub.s32 1, %v4484
        %v4486 = vrot.slane %v4385, %v4485
        %v4487 = vlaneseq
        %v4488 = vshrl.u32 %v4487, 7
        %v4489 = vsub.s32 2, %v4488
        %v4490 = vrot.slane %v4385, %v4489
        %v4491 = vlaneseq
        %v4492 = vshrl.u32 %v4491, 7
        %v4493 = vsub.s32 3, %v4492
        %v4494 = vrot.slane %v4385, %v4493
        %v4495 = vlaneseq
        %v4496 = vshrl.u32 %v4495, 7
        %v4497 = vsub.s32 0, %v4496
        %v4498 = vrot.slane %v4399, %v4497
        %v4499 = vlaneseq
        %v4500 = vshrl.u32 %v4499, 7
        %v4501 = vsub.s32 1, %v4500
        %v4502 = vrot.slane %v4399, %v4501
        %v4503 = vlaneseq
        %v4504 = vshrl.u32 %v4503, 7
        %v4505 = vsub.s32 2, %v4504
        %v4506 = vrot.slane %v4399, %v4505
        %v4507 = vlaneseq
        %v4508 = vshrl.u32 %v4507, 7
        %v4509 = vsub.s32 3, %v4508
        %v4510 = vrot.slane %v4399, %v4509
        %v4511 = vlaneseq
        %v4512 = vshrl.u32 %v4511, 7
        %v4513 = vsub.s32 0, %v4512
        %v4514 = vrot.slane %v4407, %v4513
        %v4515 = vlaneseq
        %v4516 = vshrl.u32 %v4515, 7
        %v4517 = vsub.s32 1, %v4516
        %v4518 = vrot.slane %v4407, %v4517
        %v4519 = vlaneseq
        %v4520 = vshrl.u32 %v4519, 7
        %v4521 = vsub.s32 2, %v4520
        %v4522 = vrot.slane %v4407, %v4521
        %v4523 = vlaneseq
        %v4524 = vshrl.u32 %v4523, 7
        %v4525 = vsub.s32 3, %v4524
        %v4526 = vrot.slane %v4407, %v4525
        %v4527 = vlaneseq
        %v4528 = vshrl.u32 %v4527, 7
        %v4529 = vsub.s32 0, %v4528
        %v4530 = vrot.slane %v4409, %v4529
        %v4531 = vlaneseq
        %v4532 = vshrl.u32 %v4531, 7
        %v4533 = vsub.s32 1, %v4532
        %v4534 = vrot.slane %v4409, %v4533
        %v4535 = vlaneseq
        %v4536 = vshrl.u32 %v4535, 7
        %v4537 = vsub.s32 2, %v4536
        %v4538 = vrot.slane %v4409, %v4537
        %v4539 = vlaneseq
        %v4540 = vshrl.u32 %v4539, 7
        %v4541 = vsub.s32 3, %v4540
        %v4542 = vrot.slane %v4409, %v4541
        %v4543 = vlaneseq
        %v4544 = vshrl.u32 %v4543, 7
        %v4545 = vsub.s32 0, %v4544
        %v4546 = vrot.slane %v4392, %v4545
        %v4547 = vlaneseq
        %v4548 = vshrl.u32 %v4547, 7
        %v4549 = vsub.s32 1, %v4548
        %v4550 = vrot.slane %v4392, %v4549
        %v4551 = vlaneseq
        %v4552 = vshrl.u32 %v4551, 7
        %v4553 = vsub.s32 2, %v4552
        %v4554 = vrot.slane %v4392, %v4553
        %v4555 = vlaneseq
        %v4556 = vshrl.u32 %v4555, 7
        %v4557 = vsub.s32 3, %v4556
        %v4558 = vrot.slane %v4392, %v4557
        %v4559 = vlaneseq
        %v4560 = vshrl.u32 %v4559, 7
        %v4561 = vsub.s32 0, %v4560
        %v4562 = vrot.slane %v4406, %v4561
        %v4563 = vlaneseq
        %v4564 = vshrl.u32 %v4563, 7
        %v4565 = vsub.s32 1, %v4564
        %v4566 = vrot.slane %v4406, %v4565
        %v4567 = vlaneseq
        %v4568 = vshrl.u32 %v4567, 7
        %v4569 = vsub.s32 2, %v4568
        %v4570 = vrot.slane %v4406, %v4569
        %v4571 = vlaneseq
        %v4572 = vshrl.u32 %v4571, 7
        %v4573 = vsub.s32 3, %v4572
        %v4574 = vrot.slane %v4406, %v4573
        %v4575 = vlaneseq
        %v4576 = vshrl.u32 %v4575, 7
        %v4577 = vsub.s32 0, %v4576
        %v4578 = vrot.slane %v4408, %v4577
        %v4579 = vlaneseq
        %v4580 = vshrl.u32 %v4579, 7
        %v4581 = vsub.s32 1, %v4580
        %v4582 = vrot.slane %v4408, %v4581
        %v4583 = vlaneseq
        %v4584 = vshrl.u32 %v4583, 7
        %v4585 = vsub.s32 2, %v4584
        %v4586 = vrot.slane %v4408, %v4585
        %v4587 = vlaneseq
        %v4588 = vshrl.u32 %v4587, 7
        %v4589 = vsub.s32 3, %v4588
        %v4590 = vrot.slane %v4408, %v4589
        %v4591 = vlaneseq
        %v4592 = vshrl.u32 %v4591, 7
        %v4593 = vsub.s32 0, %v4592
        %v4594 = vrot.slane %v4410, %v4593
        %v4595 = vlaneseq
        %v4596 = vshrl.u32 %v4595, 7
        %v4597 = vsub.s32 1, %v4596
        %v4598 = vrot.slane %v4410, %v4597
        %v4599 = vlaneseq
        %v4600 = vshrl.u32 %v4599, 7
        %v4601 = vsub.s32 2, %v4600
        %v4602 = vrot.slane %v4410, %v4601
        %v4603 = vlaneseq
        %v4604 = vshrl.u32 %v4603, 7
        %v4605 = vsub.s32 3, %v4604
        %v4606 = vrot.slane %v4410, %v4605
        %v4607 = vlaneseq
        %v4608 = vshrl.u32 %v4607, 7
        %v4609 = vsub.s32 0, %v4608
        %v4610 = vrot.slane %v4453, %v4609
        %v4611 = vlaneseq
        %v4612 = vshrl.u32 %v4611, 7
        %v4613 = vsub.s32 1, %v4612
        %v4614 = vrot.slane %v4453, %v4613
        %v4615 = vlaneseq
        %v4616 = vshrl.u32 %v4615, 7
        %v4617 = vsub.s32 2, %v4616
        %v4618 = vrot.slane %v4453, %v4617
        %v4619 = vlaneseq
        %v4620 = vshrl.u32 %v4619, 7
        %v4621 = vsub.s32 3, %v4620
        %v4622 = vrot.slane %v4453, %v4621
        %v4623 = vlaneseq
        %v4624 = vshrl.u32 %v4623, 7
        %v4625 = vsub.s32 0, %v4624
        %v4626 = vrot.slane %v4467, %v4625
        %v4627 = vlaneseq
        %v4628 = vshrl.u32 %v4627, 7
        %v4629 = vsub.s32 1, %v4628
        %v4630 = vrot.slane %v4467, %v4629
        %v4631 = vlaneseq
        %v4632 = vshrl.u32 %v4631, 7
        %v4633 = vsub.s32 2, %v4632
        %v4634 = vrot.slane %v4467, %v4633
        %v4635 = vlaneseq
        %v4636 = vshrl.u32 %v4635, 7
        %v4637 = vsub.s32 3, %v4636
        %v4638 = vrot.slane %v4467, %v4637
        %v4639 = vlaneseq
        %v4640 = vshrl.u32 %v4639, 7
        %v4641 = vsub.s32 0, %v4640
        %v4642 = vrot.slane %v4475, %v4641
        %v4643 = vlaneseq
        %v4644 = vshrl.u32 %v4643, 7
        %v4645 = vsub.s32 1, %v4644
        %v4646 = vrot.slane %v4475, %v4645
        %v4647 = vlaneseq
        %v4648 = vshrl.u32 %v4647, 7
        %v4649 = vsub.s32 2, %v4648
        %v4650 = vrot.slane %v4475, %v4649
        %v4651 = vlaneseq
        %v4652 = vshrl.u32 %v4651, 7
        %v4653 = vsub.s32 3, %v4652
        %v4654 = vrot.slane %v4475, %v4653
        %v4655 = vlaneseq
        %v4656 = vshrl.u32 %v4655, 7
        %v4657 = vsub.s32 0, %v4656
        %v4658 = vrot.slane %v4477, %v4657
        %v4659 = vlaneseq
        %v4660 = vshrl.u32 %v4659, 7
        %v4661 = vsub.s32 1, %v4660
        %v4662 = vrot.slane %v4477, %v4661
        %v4663 = vlaneseq
        %v4664 = vshrl.u32 %v4663, 7
        %v4665 = vsub.s32 2, %v4664
        %v4666 = vrot.slane %v4477, %v4665
        %v4667 = vlaneseq
        %v4668 = vshrl.u32 %v4667, 7
        %v4669 = vsub.s32 3, %v4668
        %v4670 = vrot.slane %v4477, %v4669
        %v4671 = vlaneseq
        %v4672 = vshrl.u32 %v4671, 7
        %v4673 = vsub.s32 0, %v4672
        %v4674 = vrot.slane %v4460, %v4673
        %v4675 = vlaneseq
        %v4676 = vshrl.u32 %v4675, 7
        %v4677 = vsub.s32 1, %v4676
        %v4678 = vrot.slane %v4460, %v4677
        %v4679 = vlaneseq
        %v4680 = vshrl.u32 %v4679, 7
        %v4681 = vsub.s32 2, %v4680
        %v4682 = vrot.slane %v4460, %v4681
        %v4683 = vlaneseq
        %v4684 = vshrl.u32 %v4683, 7
        %v4685 = vsub.s32 3, %v4684
        %v4686 = vrot.slane %v4460, %v4685
        %v4687 = vlaneseq
        %v4688 = vshrl.u32 %v4687, 7
        %v4689 = vsub.s32 0, %v4688
        %v4690 = vrot.slane %v4474, %v4689
        %v4691 = vlaneseq
        %v4692 = vshrl.u32 %v4691, 7
        %v4693 = vsub.s32 1, %v4692
        %v4694 = vrot.slane %v4474, %v4693
        %v4695 = vlaneseq
        %v4696 = vshrl.u32 %v4695, 7
        %v4697 = vsub.s32 2, %v4696
        %v4698 = vrot.slane %v4474, %v4697
        %v4699 = vlaneseq
        %v4700 = vshrl.u32 %v4699, 7
        %v4701 = vsub.s32 3, %v4700
        %v4702 = vrot.slane %v4474, %v4701
        %v4703 = vlaneseq
        %v4704 = vshrl.u32 %v4703, 7
        %v4705 = vsub.s32 0, %v4704
        %v4706 = vrot.slane %v4476, %v4705
        %v4707 = vlaneseq
        %v4708 = vshrl.u32 %v4707, 7
        %v4709 = vsub.s32 1, %v4708
        %v4710 = vrot.slane %v4476, %v4709
        %v4711 = vlaneseq
        %v4712 = vshrl.u32 %v4711, 7
        %v4713 = vsub.s32 2, %v4712
        %v4714 = vrot.slane %v4476, %v4713
        %v4715 = vlaneseq
        %v4716 = vshrl.u32 %v4715, 7
        %v4717 = vsub.s32 3, %v4716
        %v4718 = vrot.slane %v4476, %v4717
        %v4719 = vlaneseq
        %v4720 = vshrl.u32 %v4719, 7
        %v4721 = vsub.s32 0, %v4720
        %v4722 = vrot.slane %v4478, %v4721
        %v4723 = vlaneseq
        %v4724 = vshrl.u32 %v4723, 7
        %v4725 = vsub.s32 1, %v4724
        %v4726 = vrot.slane %v4478, %v4725
        %v4727 = vlaneseq
        %v4728 = vshrl.u32 %v4727, 7
        %v4729 = vsub.s32 2, %v4728
        %v4730 = vrot.slane %v4478, %v4729
        %v4731 = vlaneseq
        %v4732 = vshrl.u32 %v4731, 7
        %v4733 = vsub.s32 3, %v4732
        %v4734 = vrot.slane %v4478, %v4733
        %v4799 = vadd.f32 %v3664, %v4482
        %v4800 = vadd.f32 %v3666, %v4486
        %v4801 = vadd.f32 %v4017, %v4490
        %v4802 = vadd.f32 %v4019, %v4494
        %v4803 = vadd.f32 %v3668, %v4482
        %v4804 = vadd.f32 %v3670, %v4486
        %v4805 = vadd.f32 %v4021, %v4490
        %v4806 = vadd.f32 %v4023, %v4494
        %v4807 = vadd.f32 %v3674, %v4482
        %v4808 = vadd.f32 %v3676, %v4486
        %v4809 = vadd.f32 %v4027, %v4490
        %v4810 = vadd.f32 %v4029, %v4494
        %v4811 = vadd.f32 %v3678, %v4482
        %v4812 = vadd.f32 %v3680, %v4486
        %v4813 = vadd.f32 %v4031, %v4490
        %v4814 = vadd.f32 %v4033, %v4494
        %v4815 = vadd.f32 %v3684, %v4498
        %v4816 = vadd.f32 %v3686, %v4502
        %v4817 = vadd.f32 %v4037, %v4506
        %v4818 = vadd.f32 %v4039, %v4510
        %v4819 = vadd.f32 %v3688, %v4498
        %v4820 = vadd.f32 %v3690, %v4502
        %v4821 = vadd.f32 %v4041, %v4506
        %v4822 = vadd.f32 %v4043, %v4510
        %v4823 = vadd.f32 %v3694, %v4498
        %v4824 = vadd.f32 %v3696, %v4502
        %v4825 = vadd.f32 %v4047, %v4506
        %v4826 = vadd.f32 %v4049, %v4510
        %v4827 = vadd.f32 %v3698, %v4498
        %v4828 = vadd.f32 %v3700, %v4502
        %v4829 = vadd.f32 %v4051, %v4506
        %v4830 = vadd.f32 %v4053, %v4510
        %v4831 = vadd.f32 %v3704, %v4514
        %v4832 = vadd.f32 %v3706, %v4518
        %v4833 = vadd.f32 %v4057, %v4522
        %v4834 = vadd.f32 %v4059, %v4526
        %v4835 = vadd.f32 %v3708, %v4514
        %v4836 = vadd.f32 %v3710, %v4518
        %v4837 = vadd.f32 %v4061, %v4522
        %v4838 = vadd.f32 %v4063, %v4526
        %v4839 = vadd.f32 %v3714, %v4514
        %v4840 = vadd.f32 %v3716, %v4518
        %v4841 = vadd.f32 %v4067, %v4522
        %v4842 = vadd.f32 %v4069, %v4526
        %v4843 = vadd.f32 %v3718, %v4514
        %v4844 = vadd.f32 %v3720, %v4518
        %v4845 = vadd.f32 %v4071, %v4522
        %v4846 = vadd.f32 %v4073, %v4526
        %v4847 = vadd.f32 %v3724, %v4530
        %v4848 = vadd.f32 %v3726, %v4534
        %v4849 = vadd.f32 %v4077, %v4538
        %v4850 = vadd.f32 %v4079, %v4542
        %v4851 = vadd.f32 %v3728, %v4530
        %v4852 = vadd.f32 %v3730, %v4534
        %v4853 = vadd.f32 %v4081, %v4538
        %v4854 = vadd.f32 %v4083, %v4542
        %v4855 = vadd.f32 %v3734, %v4530
        %v4856 = vadd.f32 %v3736, %v4534
        %v4857 = vadd.f32 %v4087, %v4538
        %v4858 = vadd.f32 %v4089, %v4542
        %v4859 = vadd.f32 %v3738, %v4530
        %v4860 = vadd.f32 %v3740, %v4534
        %v4861 = vadd.f32 %v4091, %v4538
        %v4862 = vadd.f32 %v4093, %v4542
        %v4863 = vadd.f32 %v3744, %v4546
        %v4864 = vadd.f32 %v3746, %v4550
        %v4865 = vadd.f32 %v4097, %v4554
        %v4866 = vadd.f32 %v4099, %v4558
        %v4867 = vadd.f32 %v3748, %v4546
        %v4868 = vadd.f32 %v3750, %v4550
        %v4869 = vadd.f32 %v4101, %v4554
        %v4870 = vadd.f32 %v4103, %v4558
        %v4871 = vadd.f32 %v3754, %v4546
        %v4872 = vadd.f32 %v3756, %v4550
        %v4873 = vadd.f32 %v4107, %v4554
        %v4874 = vadd.f32 %v4109, %v4558
        %v4875 = vadd.f32 %v3758, %v4546
        %v4876 = vadd.f32 %v3760, %v4550
        %v4877 = vadd.f32 %v4111, %v4554
        %v4878 = vadd.f32 %v4113, %v4558
        %v4879 = vadd.f32 %v3764, %v4562
        %v4880 = vadd.f32 %v3766, %v4566
        %v4881 = vadd.f32 %v4117, %v4570
        %v4882 = vadd.f32 %v4119, %v4574
        %v4883 = vadd.f32 %v3768, %v4562
        %v4884 = vadd.f32 %v3770, %v4566
        %v4885 = vadd.f32 %v4121, %v4570
        %v4886 = vadd.f32 %v4123, %v4574
        %v4887 = vadd.f32 %v3774, %v4562
        %v4888 = vadd.f32 %v3776, %v4566
        %v4889 = vadd.f32 %v4127, %v4570
        %v4890 = vadd.f32 %v4129, %v4574
        %v4891 = vadd.f32 %v3778, %v4562
        %v4892 = vadd.f32 %v3780, %v4566
        %v4893 = vadd.f32 %v4131, %v4570
        %v4894 = vadd.f32 %v4133, %v4574
        %v4895 = vadd.f32 %v3784, %v4578
        %v4896 = vadd.f32 %v3786, %v4582
        %v4897 = vadd.f32 %v4137, %v4586
        %v4898 = vadd.f32 %v4139, %v4590
        %v4899 = vadd.f32 %v3788, %v4578
        %v4900 = vadd.f32 %v3790, %v4582
        %v4901 = vadd.f32 %v4141, %v4586
        %v4902 = vadd.f32 %v4143, %v4590
        %v4903 = vadd.f32 %v3794, %v4578
        %v4904 = vadd.f32 %v3796, %v4582
        %v4905 = vadd.f32 %v4147, %v4586
        %v4906 = vadd.f32 %v4149, %v4590
        %v4907 = vadd.f32 %v3798, %v4578
        %v4908 = vadd.f32 %v3800, %v4582
        %v4909 = vadd.f32 %v4151, %v4586
        %v4910 = vadd.f32 %v4153, %v4590
        %v4911 = vadd.f32 %v3804, %v4594
        %v4912 = vadd.f32 %v3806, %v4598
        %v4913 = vadd.f32 %v4157, %v4602
        %v4914 = vadd.f32 %v4159, %v4606
        %v4915 = vadd.f32 %v3808, %v4594
        %v4916 = vadd.f32 %v3810, %v4598
        %v4917 = vadd.f32 %v4161, %v4602
        %v4918 = vadd.f32 %v4163, %v4606
        %v4919 = vadd.f32 %v3814, %v4594
        %v4920 = vadd.f32 %v3816, %v4598
        %v4921 = vadd.f32 %v4167, %v4602
        %v4922 = vadd.f32 %v4169, %v4606
        %v4923 = vadd.f32 %v3818, %v4594
        %v4924 = vadd.f32 %v3820, %v4598
        %v4925 = vadd.f32 %v4171, %v4602
        %v4926 = vadd.f32 %v4173, %v4606
        %v4927 = vadd.f32 %v3824, %v4610
        %v4928 = vadd.f32 %v3826, %v4614
        %v4929 = vadd.f32 %v4177, %v4618
        %v4930 = vadd.f32 %v4179, %v4622
        %v4931 = vadd.f32 %v3828, %v4610
        %v4932 = vadd.f32 %v3830, %v4614
        %v4933 = vadd.f32 %v4181, %v4618
        %v4934 = vadd.f32 %v4183, %v4622
        %v4935 = vadd.f32 %v3834, %v4610
        %v4936 = vadd.f32 %v3836, %v4614
        %v4937 = vadd.f32 %v4187, %v4618
        %v4938 = vadd.f32 %v4189, %v4622
        %v4939 = vadd.f32 %v3838, %v4610
        %v4940 = vadd.f32 %v3840, %v4614
        %v4941 = vadd.f32 %v4191, %v4618
        %v4942 = vadd.f32 %v4193, %v4622
        %v4943 = vadd.f32 %v3844, %v4626
        %v4944 = vadd.f32 %v3846, %v4630
        %v4945 = vadd.f32 %v4197, %v4634
        %v4946 = vadd.f32 %v4199, %v4638
        %v4947 = vadd.f32 %v3848, %v4626
        %v4948 = vadd.f32 %v3850, %v4630
        %v4949 = vadd.f32 %v4201, %v4634
        %v4950 = vadd.f32 %v4203, %v4638
        %v4951 = vadd.f32 %v3854, %v4626
        %v4952 = vadd.f32 %v3856, %v4630
        %v4953 = vadd.f32 %v4207, %v4634
        %v4954 = vadd.f32 %v4209, %v4638
        %v4955 = vadd.f32 %v3858, %v4626
        %v4956 = vadd.f32 %v3860, %v4630
        %v4957 = vadd.f32 %v4211, %v4634
        %v4958 = vadd.f32 %v4213, %v4638
        %v4959 = vadd.f32 %v3864, %v4642
        %v4960 = vadd.f32 %v3866, %v4646
        %v4961 = vadd.f32 %v4217, %v4650
        %v4962 = vadd.f32 %v4219, %v4654
        %v4963 = vadd.f32 %v3868, %v4642
        %v4964 = vadd.f32 %v3870, %v4646
        %v4965 = vadd.f32 %v4221, %v4650
        %v4966 = vadd.f32 %v4223, %v4654
        %v4967 = vadd.f32 %v3874, %v4642
        %v4968 = vadd.f32 %v3876, %v4646
        %v4969 = vadd.f32 %v4227, %v4650
        %v4970 = vadd.f32 %v4229, %v4654
        %v4971 = vadd.f32 %v3878, %v4642
        %v4972 = vadd.f32 %v3880, %v4646
        %v4973 = vadd.f32 %v4231, %v4650
        %v4974 = vadd.f32 %v4233, %v4654
        %v4975 = vadd.f32 %v3884, %v4658
        %v4976 = vadd.f32 %v3886, %v4662
        %v4977 = vadd.f32 %v4237, %v4666
        %v4978 = vadd.f32 %v4239, %v4670
        %v4979 = vadd.f32 %v3888, %v4658
        %v4980 = vadd.f32 %v3890, %v4662
        %v4981 = vadd.f32 %v4241, %v4666
        %v4982 = vadd.f32 %v4243, %v4670
        %v4983 = vadd.f32 %v3894, %v4658
        %v4984 = vadd.f32 %v3896, %v4662
        %v4985 = vadd.f32 %v4247, %v4666
        %v4986 = vadd.f32 %v4249, %v4670
        %v4987 = vadd.f32 %v3898, %v4658
        %v4988 = vadd.f32 %v3900, %v4662
        %v4989 = vadd.f32 %v4251, %v4666
        %v4990 = vadd.f32 %v4253, %v4670
        %v4991 = vadd.f32 %v3904, %v4674
        %v4992 = vadd.f32 %v3906, %v4678
        %v4993 = vadd.f32 %v4257, %v4682
        %v4994 = vadd.f32 %v4259, %v4686
        %v4995 = vadd.f32 %v3908, %v4674
        %v4996 = vadd.f32 %v3910, %v4678
        %v4997 = vadd.f32 %v4261, %v4682
        %v4998 = vadd.f32 %v4263, %v4686
        %v4999 = vadd.f32 %v3914, %v4674
        %v5000 = vadd.f32 %v3916, %v4678
        %v5001 = vadd.f32 %v4267, %v4682
        %v5002 = vadd.f32 %v4269, %v4686
        %v5003 = vadd.f32 %v3918, %v4674
        %v5004 = vadd.f32 %v3920, %v4678
        %v5005 = vadd.f32 %v4271, %v4682
        %v5006 = vadd.f32 %v4273, %v4686
        %v5007 = vadd.f32 %v3924, %v4690
        %v5008 = vadd.f32 %v3926, %v4694
        %v5009 = vadd.f32 %v4277, %v4698
        %v5010 = vadd.f32 %v4279, %v4702
        %v5011 = vadd.f32 %v3928, %v4690
        %v5012 = vadd.f32 %v3930, %v4694
        %v5013 = vadd.f32 %v4281, %v4698
        %v5014 = vadd.f32 %v4283, %v4702
        %v5015 = vadd.f32 %v3934, %v4690
        %v5016 = vadd.f32 %v3936, %v4694
        %v5017 = vadd.f32 %v4287, %v4698
        %v5018 = vadd.f32 %v4289, %v4702
        %v5019 = vadd.f32 %v3938, %v4690
        %v5020 = vadd.f32 %v3940, %v4694
        %v5021 = vadd.f32 %v4291, %v4698
        %v5022 = vadd.f32 %v4293, %v4702
        %v5023 = vadd.f32 %v3944, %v4706
        %v5024 = vadd.f32 %v3946, %v4710
        %v5025 = vadd.f32 %v4297, %v4714
        %v5026 = vadd.f32 %v4299, %v4718
        %v5027 = vadd.f32 %v3948, %v4706
        %v5028 = vadd.f32 %v3950, %v4710
        %v5029 = vadd.f32 %v4301, %v4714
        %v5030 = vadd.f32 %v4303, %v4718
        %v5031 = vadd.f32 %v3954, %v4706
        %v5032 = vadd.f32 %v3956, %v4710
        %v5033 = vadd.f32 %v4307, %v4714
        %v5034 = vadd.f32 %v4309, %v4718
        %v5035 = vadd.f32 %v3958, %v4706
        %v5036 = vadd.f32 %v3960, %v4710
        %v5037 = vadd.f32 %v4311, %v4714
        %v5038 = vadd.f32 %v4313, %v4718
        %v5039 = vadd.f32 %v3964, %v4722
        %v5040 = vadd.f32 %v3966, %v4726
        %v5041 = vadd.f32 %v4317, %v4730
        %v5042 = vadd.f32 %v4319, %v4734
        %v5043 = vadd.f32 %v3968, %v4722
        %v5044 = vadd.f32 %v3970, %v4726
        %v5045 = vadd.f32 %v4321, %v4730
        %v5046 = vadd.f32 %v4323, %v4734
        %v5047 = vadd.f32 %v3974, %v4722
        %v5048 = vadd.f32 %v3976, %v4726
        %v5049 = vadd.f32 %v4327, %v4730
        %v5050 = vadd.f32 %v4329, %v4734
        %v5051 = vadd.f32 %v3978, %v4722
        %v5052 = vadd.f32 %v3980, %v4726
        %v5053 = vadd.f32 %v4331, %v4730
        %v5054 = vadd.f32 %v4333, %v4734
        %v5055 = vld [vmem:[%s7] sm:$0xf]
        %v5057 = vlaneseq
        %v5058 = vshrl.u32 %v5057, 7
        %v5059 = vsub.s32 0, %v5058
        %v5060 = vrot.slane %v5055, %v5059
        %v5061 = vlaneseq
        %v5062 = vshrl.u32 %v5061, 7
        %v5063 = vsub.s32 1, %v5062
        %v5064 = vrot.slane %v5055, %v5063
        %v5065 = vlaneseq
        %v5066 = vshrl.u32 %v5065, 7
        %v5067 = vsub.s32 2, %v5066
        %v5068 = vrot.slane %v5055, %v5067
        %v5069 = vlaneseq
        %v5070 = vshrl.u32 %v5069, 7
        %v5071 = vsub.s32 3, %v5070
        %v5072 = vrot.slane %v5055, %v5071
        %v5077 = vadd.f32 %v4799, %v5060
        %v5078 = vadd.f32 %v4800, %v5064
        %v5079 = vadd.f32 %v4801, %v5068
        %v5080 = vadd.f32 %v4802, %v5072
        %v5081 = vadd.f32 %v4803, %v5060
        %v5082 = vadd.f32 %v4804, %v5064
        %v5083 = vadd.f32 %v4805, %v5068
        %v5084 = vadd.f32 %v4806, %v5072
        %v5085 = vadd.f32 %v4807, %v5060
        %v5086 = vadd.f32 %v4808, %v5064
        %v5087 = vadd.f32 %v4809, %v5068
        %v5088 = vadd.f32 %v4810, %v5072
        %v5089 = vadd.f32 %v4811, %v5060
        %v5090 = vadd.f32 %v4812, %v5064
        %v5091 = vadd.f32 %v4813, %v5068
        %v5092 = vadd.f32 %v4814, %v5072
        %v5093 = vadd.f32 %v4815, %v5060
        %v5094 = vadd.f32 %v4816, %v5064
        %v5095 = vadd.f32 %v4817, %v5068
        %v5096 = vadd.f32 %v4818, %v5072
        %v5097 = vadd.f32 %v4819, %v5060
        %v5098 = vadd.f32 %v4820, %v5064
        %v5099 = vadd.f32 %v4821, %v5068
        %v5100 = vadd.f32 %v4822, %v5072
        %v5101 = vadd.f32 %v4823, %v5060
        %v5102 = vadd.f32 %v4824, %v5064
        %v5103 = vadd.f32 %v4825, %v5068
        %v5104 = vadd.f32 %v4826, %v5072
        %v5105 = vadd.f32 %v4827, %v5060
        %v5106 = vadd.f32 %v4828, %v5064
        %v5107 = vadd.f32 %v4829, %v5068
        %v5108 = vadd.f32 %v4830, %v5072
        %v5109 = vadd.f32 %v4831, %v5060
        %v5110 = vadd.f32 %v4832, %v5064
        %v5111 = vadd.f32 %v4833, %v5068
        %v5112 = vadd.f32 %v4834, %v5072
        %v5113 = vadd.f32 %v4835, %v5060
        %v5114 = vadd.f32 %v4836, %v5064
        %v5115 = vadd.f32 %v4837, %v5068
        %v5116 = vadd.f32 %v4838, %v5072
        %v5117 = vadd.f32 %v4839, %v5060
        %v5118 = vadd.f32 %v4840, %v5064
        %v5119 = vadd.f32 %v4841, %v5068
        %v5120 = vadd.f32 %v4842, %v5072
        %v5121 = vadd.f32 %v4843, %v5060
        %v5122 = vadd.f32 %v4844, %v5064
        %v5123 = vadd.f32 %v4845, %v5068
        %v5124 = vadd.f32 %v4846, %v5072
        %v5125 = vadd.f32 %v4847, %v5060
        %v5126 = vadd.f32 %v4848, %v5064
        %v5127 = vadd.f32 %v4849, %v5068
        %v5128 = vadd.f32 %v4850, %v5072
        %v5129 = vadd.f32 %v4851, %v5060
        %v5130 = vadd.f32 %v4852, %v5064
        %v5131 = vadd.f32 %v4853, %v5068
        %v5132 = vadd.f32 %v4854, %v5072
        %v5133 = vadd.f32 %v4855, %v5060
        %v5134 = vadd.f32 %v4856, %v5064
        %v5135 = vadd.f32 %v4857, %v5068
        %v5136 = vadd.f32 %v4858, %v5072
        %v5137 = vadd.f32 %v4859, %v5060
        %v5138 = vadd.f32 %v4860, %v5064
        %v5139 = vadd.f32 %v4861, %v5068
        %v5140 = vadd.f32 %v4862, %v5072
        %v5141 = vadd.f32 %v4863, %v5060
        %v5142 = vadd.f32 %v4864, %v5064
        %v5143 = vadd.f32 %v4865, %v5068
        %v5144 = vadd.f32 %v4866, %v5072
        %v5145 = vadd.f32 %v4867, %v5060
        %v5146 = vadd.f32 %v4868, %v5064
        %v5147 = vadd.f32 %v4869, %v5068
        %v5148 = vadd.f32 %v4870, %v5072
        %v5149 = vadd.f32 %v4871, %v5060
        %v5150 = vadd.f32 %v4872, %v5064
        %v5151 = vadd.f32 %v4873, %v5068
        %v5152 = vadd.f32 %v4874, %v5072
        %v5153 = vadd.f32 %v4875, %v5060
        %v5154 = vadd.f32 %v4876, %v5064
        %v5155 = vadd.f32 %v4877, %v5068
        %v5156 = vadd.f32 %v4878, %v5072
        %v5157 = vadd.f32 %v4879, %v5060
        %v5158 = vadd.f32 %v4880, %v5064
        %v5159 = vadd.f32 %v4881, %v5068
        %v5160 = vadd.f32 %v4882, %v5072
        %v5161 = vadd.f32 %v4883, %v5060
        %v5162 = vadd.f32 %v4884, %v5064
        %v5163 = vadd.f32 %v4885, %v5068
        %v5164 = vadd.f32 %v4886, %v5072
        %v5165 = vadd.f32 %v4887, %v5060
        %v5166 = vadd.f32 %v4888, %v5064
        %v5167 = vadd.f32 %v4889, %v5068
        %v5168 = vadd.f32 %v4890, %v5072
        %v5169 = vadd.f32 %v4891, %v5060
        %v5170 = vadd.f32 %v4892, %v5064
        %v5171 = vadd.f32 %v4893, %v5068
        %v5172 = vadd.f32 %v4894, %v5072
        %v5173 = vadd.f32 %v4895, %v5060
        %v5174 = vadd.f32 %v4896, %v5064
        %v5175 = vadd.f32 %v4897, %v5068
        %v5176 = vadd.f32 %v4898, %v5072
        %v5177 = vadd.f32 %v4899, %v5060
        %v5178 = vadd.f32 %v4900, %v5064
        %v5179 = vadd.f32 %v4901, %v5068
        %v5180 = vadd.f32 %v4902, %v5072
        %v5181 = vadd.f32 %v4903, %v5060
        %v5182 = vadd.f32 %v4904, %v5064
        %v5183 = vadd.f32 %v4905, %v5068
        %v5184 = vadd.f32 %v4906, %v5072
        %v5185 = vadd.f32 %v4907, %v5060
        %v5186 = vadd.f32 %v4908, %v5064
        %v5187 = vadd.f32 %v4909, %v5068
        %v5188 = vadd.f32 %v4910, %v5072
        %v5189 = vadd.f32 %v4911, %v5060
        %v5190 = vadd.f32 %v4912, %v5064
        %v5191 = vadd.f32 %v4913, %v5068
        %v5192 = vadd.f32 %v4914, %v5072
        %v5193 = vadd.f32 %v4915, %v5060
        %v5194 = vadd.f32 %v4916, %v5064
        %v5195 = vadd.f32 %v4917, %v5068
        %v5196 = vadd.f32 %v4918, %v5072
        %v5197 = vadd.f32 %v4919, %v5060
        %v5198 = vadd.f32 %v4920, %v5064
        %v5199 = vadd.f32 %v4921, %v5068
        %v5200 = vadd.f32 %v4922, %v5072
        %v5201 = vadd.f32 %v4923, %v5060
        %v5202 = vadd.f32 %v4924, %v5064
        %v5203 = vadd.f32 %v4925, %v5068
        %v5204 = vadd.f32 %v4926, %v5072
        %v5205 = vadd.f32 %v4927, %v5060
        %v5206 = vadd.f32 %v4928, %v5064
        %v5207 = vadd.f32 %v4929, %v5068
        %v5208 = vadd.f32 %v4930, %v5072
        %v5209 = vadd.f32 %v4931, %v5060
        %v5210 = vadd.f32 %v4932, %v5064
        %v5211 = vadd.f32 %v4933, %v5068
        %v5212 = vadd.f32 %v4934, %v5072
        %v5213 = vadd.f32 %v4935, %v5060
        %v5214 = vadd.f32 %v4936, %v5064
        %v5215 = vadd.f32 %v4937, %v5068
        %v5216 = vadd.f32 %v4938, %v5072
        %v5217 = vadd.f32 %v4939, %v5060
        %v5218 = vadd.f32 %v4940, %v5064
        %v5219 = vadd.f32 %v4941, %v5068
        %v5220 = vadd.f32 %v4942, %v5072
        %v5221 = vadd.f32 %v4943, %v5060
        %v5222 = vadd.f32 %v4944, %v5064
        %v5223 = vadd.f32 %v4945, %v5068
        %v5224 = vadd.f32 %v4946, %v5072
        %v5225 = vadd.f32 %v4947, %v5060
        %v5226 = vadd.f32 %v4948, %v5064
        %v5227 = vadd.f32 %v4949, %v5068
        %v5228 = vadd.f32 %v4950, %v5072
        %v5229 = vadd.f32 %v4951, %v5060
        %v5230 = vadd.f32 %v4952, %v5064
        %v5231 = vadd.f32 %v4953, %v5068
        %v5232 = vadd.f32 %v4954, %v5072
        %v5233 = vadd.f32 %v4955, %v5060
        %v5234 = vadd.f32 %v4956, %v5064
        %v5235 = vadd.f32 %v4957, %v5068
        %v5236 = vadd.f32 %v4958, %v5072
        %v5237 = vadd.f32 %v4959, %v5060
        %v5238 = vadd.f32 %v4960, %v5064
        %v5239 = vadd.f32 %v4961, %v5068
        %v5240 = vadd.f32 %v4962, %v5072
        %v5241 = vadd.f32 %v4963, %v5060
        %v5242 = vadd.f32 %v4964, %v5064
        %v5243 = vadd.f32 %v4965, %v5068
        %v5244 = vadd.f32 %v4966, %v5072
        %v5245 = vadd.f32 %v4967, %v5060
        %v5246 = vadd.f32 %v4968, %v5064
        %v5247 = vadd.f32 %v4969, %v5068
        %v5248 = vadd.f32 %v4970, %v5072
        %v5249 = vadd.f32 %v4971, %v5060
        %v5250 = vadd.f32 %v4972, %v5064
        %v5251 = vadd.f32 %v4973, %v5068
        %v5252 = vadd.f32 %v4974, %v5072
        %v5253 = vadd.f32 %v4975, %v5060
        %v5254 = vadd.f32 %v4976, %v5064
        %v5255 = vadd.f32 %v4977, %v5068
        %v5256 = vadd.f32 %v4978, %v5072
        %v5257 = vadd.f32 %v4979, %v5060
        %v5258 = vadd.f32 %v4980, %v5064
        %v5259 = vadd.f32 %v4981, %v5068
        %v5260 = vadd.f32 %v4982, %v5072
        %v5261 = vadd.f32 %v4983, %v5060
        %v5262 = vadd.f32 %v4984, %v5064
        %v5263 = vadd.f32 %v4985, %v5068
        %v5264 = vadd.f32 %v4986, %v5072
        %v5265 = vadd.f32 %v4987, %v5060
        %v5266 = vadd.f32 %v4988, %v5064
        %v5267 = vadd.f32 %v4989, %v5068
        %v5268 = vadd.f32 %v4990, %v5072
        %v5269 = vadd.f32 %v4991, %v5060
        %v5270 = vadd.f32 %v4992, %v5064
        %v5271 = vadd.f32 %v4993, %v5068
        %v5272 = vadd.f32 %v4994, %v5072
        %v5273 = vadd.f32 %v4995, %v5060
        %v5274 = vadd.f32 %v4996, %v5064
        %v5275 = vadd.f32 %v4997, %v5068
        %v5276 = vadd.f32 %v4998, %v5072
        %v5277 = vadd.f32 %v4999, %v5060
        %v5278 = vadd.f32 %v5000, %v5064
        %v5279 = vadd.f32 %v5001, %v5068
        %v5280 = vadd.f32 %v5002, %v5072
        %v5281 = vadd.f32 %v5003, %v5060
        %v5282 = vadd.f32 %v5004, %v5064
        %v5283 = vadd.f32 %v5005, %v5068
        %v5284 = vadd.f32 %v5006, %v5072
        %v5285 = vadd.f32 %v5007, %v5060
        %v5286 = vadd.f32 %v5008, %v5064
        %v5287 = vadd.f32 %v5009, %v5068
        %v5288 = vadd.f32 %v5010, %v5072
        %v5289 = vadd.f32 %v5011, %v5060
        %v5290 = vadd.f32 %v5012, %v5064
        %v5291 = vadd.f32 %v5013, %v5068
        %v5292 = vadd.f32 %v5014, %v5072
        %v5293 = vadd.f32 %v5015, %v5060
        %v5294 = vadd.f32 %v5016, %v5064
        %v5295 = vadd.f32 %v5017, %v5068
        %v5296 = vadd.f32 %v5018, %v5072
        %v5297 = vadd.f32 %v5019, %v5060
        %v5298 = vadd.f32 %v5020, %v5064
        %v5299 = vadd.f32 %v5021, %v5068
        %v5300 = vadd.f32 %v5022, %v5072
        %v5301 = vadd.f32 %v5023, %v5060
        %v5302 = vadd.f32 %v5024, %v5064
        %v5303 = vadd.f32 %v5025, %v5068
        %v5304 = vadd.f32 %v5026, %v5072
        %v5305 = vadd.f32 %v5027, %v5060
        %v5306 = vadd.f32 %v5028, %v5064
        %v5307 = vadd.f32 %v5029, %v5068
        %v5308 = vadd.f32 %v5030, %v5072
        %v5309 = vadd.f32 %v5031, %v5060
        %v5310 = vadd.f32 %v5032, %v5064
        %v5311 = vadd.f32 %v5033, %v5068
        %v5312 = vadd.f32 %v5034, %v5072
        %v5313 = vadd.f32 %v5035, %v5060
        %v5314 = vadd.f32 %v5036, %v5064
        %v5315 = vadd.f32 %v5037, %v5068
        %v5316 = vadd.f32 %v5038, %v5072
        %v5317 = vadd.f32 %v5039, %v5060
        %v5318 = vadd.f32 %v5040, %v5064
        %v5319 = vadd.f32 %v5041, %v5068
        %v5320 = vadd.f32 %v5042, %v5072
        %v5321 = vadd.f32 %v5043, %v5060
        %v5322 = vadd.f32 %v5044, %v5064
        %v5323 = vadd.f32 %v5045, %v5068
        %v5324 = vadd.f32 %v5046, %v5072
        %v5325 = vadd.f32 %v5047, %v5060
        %v5326 = vadd.f32 %v5048, %v5064
        %v5327 = vadd.f32 %v5049, %v5068
        %v5328 = vadd.f32 %v5050, %v5072
        %v5329 = vadd.f32 %v5051, %v5060
        %v5330 = vadd.f32 %v5052, %v5064
        %v5331 = vadd.f32 %v5053, %v5068
        %v5332 = vadd.f32 %v5054, %v5072
        %v5333 = vmax.f32 %v5077, 0.0
        %v5334 = vmax.f32 %v5078, 0.0
        %v5335 = vmax.f32 %v5079, 0.0
        %v5336 = vmax.f32 %v5080, 0.0
        %v5337 = vmax.f32 %v5081, 0.0
        %v5338 = vmax.f32 %v5082, 0.0
        %v5339 = vmax.f32 %v5083, 0.0
        %v5340 = vmax.f32 %v5084, 0.0
        %v5341 = vmax.f32 %v5085, 0.0
        %v5342 = vmax.f32 %v5086, 0.0
        %v5343 = vmax.f32 %v5087, 0.0
        %v5344 = vmax.f32 %v5088, 0.0
        %v5345 = vmax.f32 %v5089, 0.0
        %v5346 = vmax.f32 %v5090, 0.0
        %v5347 = vmax.f32 %v5091, 0.0
        %v5348 = vmax.f32 %v5092, 0.0
        %v5349 = vmax.f32 %v5093, 0.0
        %v5350 = vmax.f32 %v5094, 0.0
        %v5351 = vmax.f32 %v5095, 0.0
        %v5352 = vmax.f32 %v5096, 0.0
        %v5353 = vmax.f32 %v5097, 0.0
        %v5354 = vmax.f32 %v5098, 0.0
        %v5355 = vmax.f32 %v5099, 0.0
        %v5356 = vmax.f32 %v5100, 0.0
        %v5357 = vmax.f32 %v5101, 0.0
        %v5358 = vmax.f32 %v5102, 0.0
        %v5359 = vmax.f32 %v5103, 0.0
        %v5360 = vmax.f32 %v5104, 0.0
        %v5361 = vmax.f32 %v5105, 0.0
        %v5362 = vmax.f32 %v5106, 0.0
        %v5363 = vmax.f32 %v5107, 0.0
        %v5364 = vmax.f32 %v5108, 0.0
        %v5365 = vmax.f32 %v5109, 0.0
        %v5366 = vmax.f32 %v5110, 0.0
        %v5367 = vmax.f32 %v5111, 0.0
        %v5368 = vmax.f32 %v5112, 0.0
        %v5369 = vmax.f32 %v5113, 0.0
        %v5370 = vmax.f32 %v5114, 0.0
        %v5371 = vmax.f32 %v5115, 0.0
        %v5372 = vmax.f32 %v5116, 0.0
        %v5373 = vmax.f32 %v5117, 0.0
        %v5374 = vmax.f32 %v5118, 0.0
        %v5375 = vmax.f32 %v5119, 0.0
        %v5376 = vmax.f32 %v5120, 0.0
        %v5377 = vmax.f32 %v5121, 0.0
        %v5378 = vmax.f32 %v5122, 0.0
        %v5379 = vmax.f32 %v5123, 0.0
        %v5380 = vmax.f32 %v5124, 0.0
        %v5381 = vmax.f32 %v5125, 0.0
        %v5382 = vmax.f32 %v5126, 0.0
        %v5383 = vmax.f32 %v5127, 0.0
        %v5384 = vmax.f32 %v5128, 0.0
        %v5385 = vmax.f32 %v5129, 0.0
        %v5386 = vmax.f32 %v5130, 0.0
        %v5387 = vmax.f32 %v5131, 0.0
        %v5388 = vmax.f32 %v5132, 0.0
        %v5389 = vmax.f32 %v5133, 0.0
        %v5390 = vmax.f32 %v5134, 0.0
        %v5391 = vmax.f32 %v5135, 0.0
        %v5392 = vmax.f32 %v5136, 0.0
        %v5393 = vmax.f32 %v5137, 0.0
        %v5394 = vmax.f32 %v5138, 0.0
        %v5395 = vmax.f32 %v5139, 0.0
        %v5396 = vmax.f32 %v5140, 0.0
        %v5397 = vmax.f32 %v5141, 0.0
        %v5398 = vmax.f32 %v5142, 0.0
        %v5399 = vmax.f32 %v5143, 0.0
        %v5400 = vmax.f32 %v5144, 0.0
        %v5401 = vmax.f32 %v5145, 0.0
        %v5402 = vmax.f32 %v5146, 0.0
        %v5403 = vmax.f32 %v5147, 0.0
        %v5404 = vmax.f32 %v5148, 0.0
        %v5405 = vmax.f32 %v5149, 0.0
        %v5406 = vmax.f32 %v5150, 0.0
        %v5407 = vmax.f32 %v5151, 0.0
        %v5408 = vmax.f32 %v5152, 0.0
        %v5409 = vmax.f32 %v5153, 0.0
        %v5410 = vmax.f32 %v5154, 0.0
        %v5411 = vmax.f32 %v5155, 0.0
        %v5412 = vmax.f32 %v5156, 0.0
        %v5413 = vmax.f32 %v5157, 0.0
        %v5414 = vmax.f32 %v5158, 0.0
        %v5415 = vmax.f32 %v5159, 0.0
        %v5416 = vmax.f32 %v5160, 0.0
        %v5417 = vmax.f32 %v5161, 0.0
        %v5418 = vmax.f32 %v5162, 0.0
        %v5419 = vmax.f32 %v5163, 0.0
        %v5420 = vmax.f32 %v5164, 0.0
        %v5421 = vmax.f32 %v5165, 0.0
        %v5422 = vmax.f32 %v5166, 0.0
        %v5423 = vmax.f32 %v5167, 0.0
        %v5424 = vmax.f32 %v5168, 0.0
        %v5425 = vmax.f32 %v5169, 0.0
        %v5426 = vmax.f32 %v5170, 0.0
        %v5427 = vmax.f32 %v5171, 0.0
        %v5428 = vmax.f32 %v5172, 0.0
        %v5429 = vmax.f32 %v5173, 0.0
        %v5430 = vmax.f32 %v5174, 0.0
        %v5431 = vmax.f32 %v5175, 0.0
        %v5432 = vmax.f32 %v5176, 0.0
        %v5433 = vmax.f32 %v5177, 0.0
        %v5434 = vmax.f32 %v5178, 0.0
        %v5435 = vmax.f32 %v5179, 0.0
        %v5436 = vmax.f32 %v5180, 0.0
        %v5437 = vmax.f32 %v5181, 0.0
        %v5438 = vmax.f32 %v5182, 0.0
        %v5439 = vmax.f32 %v5183, 0.0
        %v5440 = vmax.f32 %v5184, 0.0
        %v5441 = vmax.f32 %v5185, 0.0
        %v5442 = vmax.f32 %v5186, 0.0
        %v5443 = vmax.f32 %v5187, 0.0
        %v5444 = vmax.f32 %v5188, 0.0
        %v5445 = vmax.f32 %v5189, 0.0
        %v5446 = vmax.f32 %v5190, 0.0
        %v5447 = vmax.f32 %v5191, 0.0
        %v5448 = vmax.f32 %v5192, 0.0
        %v5449 = vmax.f32 %v5193, 0.0
        %v5450 = vmax.f32 %v5194, 0.0
        %v5451 = vmax.f32 %v5195, 0.0
        %v5452 = vmax.f32 %v5196, 0.0
        %v5453 = vmax.f32 %v5197, 0.0
        %v5454 = vmax.f32 %v5198, 0.0
        %v5455 = vmax.f32 %v5199, 0.0
        %v5456 = vmax.f32 %v5200, 0.0
        %v5457 = vmax.f32 %v5201, 0.0
        %v5458 = vmax.f32 %v5202, 0.0
        %v5459 = vmax.f32 %v5203, 0.0
        %v5460 = vmax.f32 %v5204, 0.0
        %v5461 = vmax.f32 %v5205, 0.0
        %v5462 = vmax.f32 %v5206, 0.0
        %v5463 = vmax.f32 %v5207, 0.0
        %v5464 = vmax.f32 %v5208, 0.0
        %v5465 = vmax.f32 %v5209, 0.0
        %v5466 = vmax.f32 %v5210, 0.0
        %v5467 = vmax.f32 %v5211, 0.0
        %v5468 = vmax.f32 %v5212, 0.0
        %v5469 = vmax.f32 %v5213, 0.0
        %v5470 = vmax.f32 %v5214, 0.0
        %v5471 = vmax.f32 %v5215, 0.0
        %v5472 = vmax.f32 %v5216, 0.0
        %v5473 = vmax.f32 %v5217, 0.0
        %v5474 = vmax.f32 %v5218, 0.0
        %v5475 = vmax.f32 %v5219, 0.0
        %v5476 = vmax.f32 %v5220, 0.0
        %v5477 = vmax.f32 %v5221, 0.0
        %v5478 = vmax.f32 %v5222, 0.0
        %v5479 = vmax.f32 %v5223, 0.0
        %v5480 = vmax.f32 %v5224, 0.0
        %v5481 = vmax.f32 %v5225, 0.0
        %v5482 = vmax.f32 %v5226, 0.0
        %v5483 = vmax.f32 %v5227, 0.0
        %v5484 = vmax.f32 %v5228, 0.0
        %v5485 = vmax.f32 %v5229, 0.0
        %v5486 = vmax.f32 %v5230, 0.0
        %v5487 = vmax.f32 %v5231, 0.0
        %v5488 = vmax.f32 %v5232, 0.0
        %v5489 = vmax.f32 %v5233, 0.0
        %v5490 = vmax.f32 %v5234, 0.0
        %v5491 = vmax.f32 %v5235, 0.0
        %v5492 = vmax.f32 %v5236, 0.0
        %v5493 = vmax.f32 %v5237, 0.0
        %v5494 = vmax.f32 %v5238, 0.0
        %v5495 = vmax.f32 %v5239, 0.0
        %v5496 = vmax.f32 %v5240, 0.0
        %v5497 = vmax.f32 %v5241, 0.0
        %v5498 = vmax.f32 %v5242, 0.0
        %v5499 = vmax.f32 %v5243, 0.0
        %v5500 = vmax.f32 %v5244, 0.0
        %v5501 = vmax.f32 %v5245, 0.0
        %v5502 = vmax.f32 %v5246, 0.0
        %v5503 = vmax.f32 %v5247, 0.0
        %v5504 = vmax.f32 %v5248, 0.0
        %v5505 = vmax.f32 %v5249, 0.0
        %v5506 = vmax.f32 %v5250, 0.0
        %v5507 = vmax.f32 %v5251, 0.0
        %v5508 = vmax.f32 %v5252, 0.0
        %v5509 = vmax.f32 %v5253, 0.0
        %v5510 = vmax.f32 %v5254, 0.0
        %v5511 = vmax.f32 %v5255, 0.0
        %v5512 = vmax.f32 %v5256, 0.0
        %v5513 = vmax.f32 %v5257, 0.0
        %v5514 = vmax.f32 %v5258, 0.0
        %v5515 = vmax.f32 %v5259, 0.0
        %v5516 = vmax.f32 %v5260, 0.0
        %v5517 = vmax.f32 %v5261, 0.0
        %v5518 = vmax.f32 %v5262, 0.0
        %v5519 = vmax.f32 %v5263, 0.0
        %v5520 = vmax.f32 %v5264, 0.0
        %v5521 = vmax.f32 %v5265, 0.0
        %v5522 = vmax.f32 %v5266, 0.0
        %v5523 = vmax.f32 %v5267, 0.0
        %v5524 = vmax.f32 %v5268, 0.0
        %v5525 = vmax.f32 %v5269, 0.0
        %v5526 = vmax.f32 %v5270, 0.0
        %v5527 = vmax.f32 %v5271, 0.0
        %v5528 = vmax.f32 %v5272, 0.0
        %v5529 = vmax.f32 %v5273, 0.0
        %v5530 = vmax.f32 %v5274, 0.0
        %v5531 = vmax.f32 %v5275, 0.0
        %v5532 = vmax.f32 %v5276, 0.0
        %v5533 = vmax.f32 %v5277, 0.0
        %v5534 = vmax.f32 %v5278, 0.0
        %v5535 = vmax.f32 %v5279, 0.0
        %v5536 = vmax.f32 %v5280, 0.0
        %v5537 = vmax.f32 %v5281, 0.0
        %v5538 = vmax.f32 %v5282, 0.0
        %v5539 = vmax.f32 %v5283, 0.0
        %v5540 = vmax.f32 %v5284, 0.0
        %v5541 = vmax.f32 %v5285, 0.0
        %v5542 = vmax.f32 %v5286, 0.0
        %v5543 = vmax.f32 %v5287, 0.0
        %v5544 = vmax.f32 %v5288, 0.0
        %v5545 = vmax.f32 %v5289, 0.0
        %v5546 = vmax.f32 %v5290, 0.0
        %v5547 = vmax.f32 %v5291, 0.0
        %v5548 = vmax.f32 %v5292, 0.0
        %v5549 = vmax.f32 %v5293, 0.0
        %v5550 = vmax.f32 %v5294, 0.0
        %v5551 = vmax.f32 %v5295, 0.0
        %v5552 = vmax.f32 %v5296, 0.0
        %v5553 = vmax.f32 %v5297, 0.0
        %v5554 = vmax.f32 %v5298, 0.0
        %v5555 = vmax.f32 %v5299, 0.0
        %v5556 = vmax.f32 %v5300, 0.0
        %v5557 = vmax.f32 %v5301, 0.0
        %v5558 = vmax.f32 %v5302, 0.0
        %v5559 = vmax.f32 %v5303, 0.0
        %v5560 = vmax.f32 %v5304, 0.0
        %v5561 = vmax.f32 %v5305, 0.0
        %v5562 = vmax.f32 %v5306, 0.0
        %v5563 = vmax.f32 %v5307, 0.0
        %v5564 = vmax.f32 %v5308, 0.0
        %v5565 = vmax.f32 %v5309, 0.0
        %v5566 = vmax.f32 %v5310, 0.0
        %v5567 = vmax.f32 %v5311, 0.0
        %v5568 = vmax.f32 %v5312, 0.0
        %v5569 = vmax.f32 %v5313, 0.0
        %v5570 = vmax.f32 %v5314, 0.0
        %v5571 = vmax.f32 %v5315, 0.0
        %v5572 = vmax.f32 %v5316, 0.0
        %v5573 = vmax.f32 %v5317, 0.0
        %v5574 = vmax.f32 %v5318, 0.0
        %v5575 = vmax.f32 %v5319, 0.0
        %v5576 = vmax.f32 %v5320, 0.0
        %v5577 = vmax.f32 %v5321, 0.0
        %v5578 = vmax.f32 %v5322, 0.0
        %v5579 = vmax.f32 %v5323, 0.0
        %v5580 = vmax.f32 %v5324, 0.0
        %v5581 = vmax.f32 %v5325, 0.0
        %v5582 = vmax.f32 %v5326, 0.0
        %v5583 = vmax.f32 %v5327, 0.0
        %v5584 = vmax.f32 %v5328, 0.0
        %v5585 = vmax.f32 %v5329, 0.0
        %v5586 = vmax.f32 %v5330, 0.0
        %v5587 = vmax.f32 %v5331, 0.0
        %v5588 = vmax.f32 %v5332, 0.0
        %v5589 = vpack.c.bf16 %v5337, %v5333
        %v5590 = vpack.c.bf16 %v5338, %v5334
        %v5591 = vpack.c.bf16 %v5339, %v5335
        %v5592 = vpack.c.bf16 %v5340, %v5336
        %v5593 = vpack.c.bf16 %v5345, %v5341
        %v5594 = vpack.c.bf16 %v5346, %v5342
        %v5595 = vpack.c.bf16 %v5347, %v5343
        %v5596 = vpack.c.bf16 %v5348, %v5344
        %v5597 = vpack.c.bf16 %v5353, %v5349
        %v5598 = vpack.c.bf16 %v5354, %v5350
        %v5599 = vpack.c.bf16 %v5355, %v5351
        %v5600 = vpack.c.bf16 %v5356, %v5352
        %v5601 = vpack.c.bf16 %v5361, %v5357
        %v5602 = vpack.c.bf16 %v5362, %v5358
        %v5603 = vpack.c.bf16 %v5363, %v5359
        %v5604 = vpack.c.bf16 %v5364, %v5360
        %v5605 = vpack.c.bf16 %v5369, %v5365
        %v5606 = vpack.c.bf16 %v5370, %v5366
        %v5607 = vpack.c.bf16 %v5371, %v5367
        %v5608 = vpack.c.bf16 %v5372, %v5368
        %v5609 = vpack.c.bf16 %v5377, %v5373
        %v5610 = vpack.c.bf16 %v5378, %v5374
        %v5611 = vpack.c.bf16 %v5379, %v5375
        %v5612 = vpack.c.bf16 %v5380, %v5376
        %v5613 = vpack.c.bf16 %v5385, %v5381
        %v5614 = vpack.c.bf16 %v5386, %v5382
        %v5615 = vpack.c.bf16 %v5387, %v5383
        %v5616 = vpack.c.bf16 %v5388, %v5384
        %v5617 = vpack.c.bf16 %v5393, %v5389
        %v5618 = vpack.c.bf16 %v5394, %v5390
        %v5619 = vpack.c.bf16 %v5395, %v5391
        %v5620 = vpack.c.bf16 %v5396, %v5392
        %v5621 = vpack.c.bf16 %v5401, %v5397
        %v5622 = vpack.c.bf16 %v5402, %v5398
        %v5623 = vpack.c.bf16 %v5403, %v5399
        %v5624 = vpack.c.bf16 %v5404, %v5400
        %v5625 = vpack.c.bf16 %v5409, %v5405
        %v5626 = vpack.c.bf16 %v5410, %v5406
        %v5627 = vpack.c.bf16 %v5411, %v5407
        %v5628 = vpack.c.bf16 %v5412, %v5408
        %v5629 = vpack.c.bf16 %v5417, %v5413
        %v5630 = vpack.c.bf16 %v5418, %v5414
        %v5631 = vpack.c.bf16 %v5419, %v5415
        %v5632 = vpack.c.bf16 %v5420, %v5416
        %v5633 = vpack.c.bf16 %v5425, %v5421
        %v5634 = vpack.c.bf16 %v5426, %v5422
        %v5635 = vpack.c.bf16 %v5427, %v5423
        %v5636 = vpack.c.bf16 %v5428, %v5424
        %v5637 = vpack.c.bf16 %v5433, %v5429
        %v5638 = vpack.c.bf16 %v5434, %v5430
        %v5639 = vpack.c.bf16 %v5435, %v5431
        %v5640 = vpack.c.bf16 %v5436, %v5432
        %v5641 = vpack.c.bf16 %v5441, %v5437
        %v5642 = vpack.c.bf16 %v5442, %v5438
        %v5643 = vpack.c.bf16 %v5443, %v5439
        %v5644 = vpack.c.bf16 %v5444, %v5440
        %v5645 = vpack.c.bf16 %v5449, %v5445
        %v5646 = vpack.c.bf16 %v5450, %v5446
        %v5647 = vpack.c.bf16 %v5451, %v5447
        %v5648 = vpack.c.bf16 %v5452, %v5448
        %v5649 = vpack.c.bf16 %v5457, %v5453
        %v5650 = vpack.c.bf16 %v5458, %v5454
        %v5651 = vpack.c.bf16 %v5459, %v5455
        %v5652 = vpack.c.bf16 %v5460, %v5456
        %v5653 = vpack.c.bf16 %v5465, %v5461
        %v5654 = vpack.c.bf16 %v5466, %v5462
        %v5655 = vpack.c.bf16 %v5467, %v5463
        %v5656 = vpack.c.bf16 %v5468, %v5464
        %v5657 = vpack.c.bf16 %v5473, %v5469
        %v5658 = vpack.c.bf16 %v5474, %v5470
        %v5659 = vpack.c.bf16 %v5475, %v5471
        %v5660 = vpack.c.bf16 %v5476, %v5472
        %v5661 = vpack.c.bf16 %v5481, %v5477
        %v5662 = vpack.c.bf16 %v5482, %v5478
        %v5663 = vpack.c.bf16 %v5483, %v5479
        %v5664 = vpack.c.bf16 %v5484, %v5480
        %v5665 = vpack.c.bf16 %v5489, %v5485
        %v5666 = vpack.c.bf16 %v5490, %v5486
        %v5667 = vpack.c.bf16 %v5491, %v5487
        %v5668 = vpack.c.bf16 %v5492, %v5488
        %v5669 = vpack.c.bf16 %v5497, %v5493
        %v5670 = vpack.c.bf16 %v5498, %v5494
        %v5671 = vpack.c.bf16 %v5499, %v5495
        %v5672 = vpack.c.bf16 %v5500, %v5496
        %v5673 = vpack.c.bf16 %v5505, %v5501
        %v5674 = vpack.c.bf16 %v5506, %v5502
        %v5675 = vpack.c.bf16 %v5507, %v5503
        %v5676 = vpack.c.bf16 %v5508, %v5504
        %v5677 = vpack.c.bf16 %v5513, %v5509
        %v5678 = vpack.c.bf16 %v5514, %v5510
        %v5679 = vpack.c.bf16 %v5515, %v5511
        %v5680 = vpack.c.bf16 %v5516, %v5512
        %v5681 = vpack.c.bf16 %v5521, %v5517
        %v5682 = vpack.c.bf16 %v5522, %v5518
        %v5683 = vpack.c.bf16 %v5523, %v5519
        %v5684 = vpack.c.bf16 %v5524, %v5520
        %v5685 = vpack.c.bf16 %v5529, %v5525
        %v5686 = vpack.c.bf16 %v5530, %v5526
        %v5687 = vpack.c.bf16 %v5531, %v5527
        %v5688 = vpack.c.bf16 %v5532, %v5528
        %v5689 = vpack.c.bf16 %v5537, %v5533
        %v5690 = vpack.c.bf16 %v5538, %v5534
        %v5691 = vpack.c.bf16 %v5539, %v5535
        %v5692 = vpack.c.bf16 %v5540, %v5536
        %v5693 = vpack.c.bf16 %v5545, %v5541
        %v5694 = vpack.c.bf16 %v5546, %v5542
        %v5695 = vpack.c.bf16 %v5547, %v5543
        %v5696 = vpack.c.bf16 %v5548, %v5544
        %v5697 = vpack.c.bf16 %v5553, %v5549
        %v5698 = vpack.c.bf16 %v5554, %v5550
        %v5699 = vpack.c.bf16 %v5555, %v5551
        %v5700 = vpack.c.bf16 %v5556, %v5552
        %v5701 = vpack.c.bf16 %v5561, %v5557
        %v5702 = vpack.c.bf16 %v5562, %v5558
        %v5703 = vpack.c.bf16 %v5563, %v5559
        %v5704 = vpack.c.bf16 %v5564, %v5560
        %v5705 = vpack.c.bf16 %v5569, %v5565
        %v5706 = vpack.c.bf16 %v5570, %v5566
        %v5707 = vpack.c.bf16 %v5571, %v5567
        %v5708 = vpack.c.bf16 %v5572, %v5568
        %v5709 = vpack.c.bf16 %v5577, %v5573
        %v5710 = vpack.c.bf16 %v5578, %v5574
        %v5711 = vpack.c.bf16 %v5579, %v5575
        %v5712 = vpack.c.bf16 %v5580, %v5576
        %v5713 = vpack.c.bf16 %v5585, %v5581
        %v5714 = vpack.c.bf16 %v5586, %v5582
        %v5715 = vpack.c.bf16 %v5587, %v5583
        %v5716 = vpack.c.bf16 %v5588, %v5584
        %v5717 = vld [vmem:[%s8] sm:$0xf]
        %v5718 = vld [vmem:[%s8 + $0x4] sm:$0xf]
        %v5719 = vld [vmem:[%s8 + $0x8] sm:$0xf]
        %v5720 = vld [vmem:[%s8 + $0xc] sm:$0xf]
        %v5721 = vld [vmem:[%s8 + $0x10] sm:$0xf]
        %v5722 = vld [vmem:[%s8 + $0x14] sm:$0xf]
        %v5723 = vld [vmem:[%s8 + $0x18] sm:$0xf]
        %v5724 = vld [vmem:[%s8 + $0x1c] sm:$0xf]
        %v5725 = vld [vmem:[%s8 + $0x20] sm:$0xf]
        %v5726 = vld [vmem:[%s8 + $0x24] sm:$0xf]
        %v5727 = vld [vmem:[%s8 + $0x28] sm:$0xf]
        %v5728 = vld [vmem:[%s8 + $0x2c] sm:$0xf]
        %v5729 = vld [vmem:[%s8 + $0x30] sm:$0xf]
        %v5730 = vld [vmem:[%s8 + $0x34] sm:$0xf]
        %v5731 = vld [vmem:[%s8 + $0x38] sm:$0xf]
        %v5732 = vld [vmem:[%s8 + $0x3c] sm:$0xf]
        %v5733 = vld [vmem:[%s8 + $0x40] sm:$0xf]
        %v5734 = vld [vmem:[%s8 + $0x44] sm:$0xf]
        %v5735 = vld [vmem:[%s8 + $0x48] sm:$0xf]
        %v5736 = vld [vmem:[%s8 + $0x4c] sm:$0xf]
        %v5737 = vld [vmem:[%s8 + $0x50] sm:$0xf]
        %v5738 = vld [vmem:[%s8 + $0x54] sm:$0xf]
        %v5739 = vld [vmem:[%s8 + $0x58] sm:$0xf]
        %v5740 = vld [vmem:[%s8 + $0x5c] sm:$0xf]
        %v5741 = vld [vmem:[%s8 + $0x60] sm:$0xf]
        %v5742 = vld [vmem:[%s8 + $0x64] sm:$0xf]
        %v5743 = vld [vmem:[%s8 + $0x68] sm:$0xf]
        %v5744 = vld [vmem:[%s8 + $0x6c] sm:$0xf]
        %v5745 = vld [vmem:[%s8 + $0x70] sm:$0xf]
        %v5746 = vld [vmem:[%s8 + $0x74] sm:$0xf]
        %v5747 = vld [vmem:[%s8 + $0x78] sm:$0xf]
        %v5748 = vld [vmem:[%s8 + $0x7c] sm:$0xf]
        %v5749 = vld [vmem:[%s8 + $0x80] sm:$0xf]
        %v5750 = vld [vmem:[%s8 + $0x84] sm:$0xf]
        %v5751 = vld [vmem:[%s8 + $0x88] sm:$0xf]
        %v5752 = vld [vmem:[%s8 + $0x8c] sm:$0xf]
        %v5753 = vld [vmem:[%s8 + $0x90] sm:$0xf]
        %v5754 = vld [vmem:[%s8 + $0x94] sm:$0xf]
        %v5755 = vld [vmem:[%s8 + $0x98] sm:$0xf]
        %v5756 = vld [vmem:[%s8 + $0x9c] sm:$0xf]
        %v5757 = vld [vmem:[%s8 + $0xa0] sm:$0xf]
        %v5758 = vld [vmem:[%s8 + $0xa4] sm:$0xf]
        %v5759 = vld [vmem:[%s8 + $0xa8] sm:$0xf]
        %v5760 = vld [vmem:[%s8 + $0xac] sm:$0xf]
        %v5761 = vld [vmem:[%s8 + $0xb0] sm:$0xf]
        %v5762 = vld [vmem:[%s8 + $0xb4] sm:$0xf]
        %v5763 = vld [vmem:[%s8 + $0xb8] sm:$0xf]
        %v5764 = vld [vmem:[%s8 + $0xbc] sm:$0xf]
        %v5765 = vld [vmem:[%s8 + $0xc0] sm:$0xf]
        %v5766 = vld [vmem:[%s8 + $0xc4] sm:$0xf]
        %v5767 = vld [vmem:[%s8 + $0xc8] sm:$0xf]
        %v5768 = vld [vmem:[%s8 + $0xcc] sm:$0xf]
        %v5769 = vld [vmem:[%s8 + $0xd0] sm:$0xf]
        %v5770 = vld [vmem:[%s8 + $0xd4] sm:$0xf]
        %v5771 = vld [vmem:[%s8 + $0xd8] sm:$0xf]
        %v5772 = vld [vmem:[%s8 + $0xdc] sm:$0xf]
        %v5773 = vld [vmem:[%s8 + $0xe0] sm:$0xf]
        %v5774 = vld [vmem:[%s8 + $0xe4] sm:$0xf]
        %v5775 = vld [vmem:[%s8 + $0xe8] sm:$0xf]
        %v5776 = vld [vmem:[%s8 + $0xec] sm:$0xf]
        %v5777 = vld [vmem:[%s8 + $0xf0] sm:$0xf]
        %v5778 = vld [vmem:[%s8 + $0xf4] sm:$0xf]
        %v5779 = vld [vmem:[%s8 + $0xf8] sm:$0xf]
        %v5780 = vld [vmem:[%s8 + $0xfc] sm:$0xf]
        %v5781 = vld [vmem:[%s9] sm:$0x1]
        %v5783 = vlaneseq
        %v5784 = vshrl.u32 %v5783, 7
        %v5785 = vsub.s32 0, %v5784
        %v5786 = vrot.slane %v5781, %v5785
        %v5852 = vunpack.c.l.b16 %v5717
        %v5853 = vunpack.c.l.b16 %v5718
        %v5854 = vunpack.c.l.b16 %v5719
        %v5855 = vunpack.c.l.b16 %v5720
        %v5856 = vunpack.c.l.b16 %v5721
        %v5857 = vunpack.c.l.b16 %v5722
        %v5858 = vunpack.c.l.b16 %v5723
        %v5859 = vunpack.c.l.b16 %v5724
        %v5860 = vunpack.c.l.b16 %v5725
        %v5861 = vunpack.c.l.b16 %v5726
        %v5862 = vunpack.c.l.b16 %v5727
        %v5863 = vunpack.c.l.b16 %v5728
        %v5864 = vunpack.c.l.b16 %v5729
        %v5865 = vunpack.c.l.b16 %v5730
        %v5866 = vunpack.c.l.b16 %v5731
        %v5867 = vunpack.c.l.b16 %v5732
        %v5868 = vunpack.c.l.b16 %v5733
        %v5869 = vunpack.c.l.b16 %v5734
        %v5870 = vunpack.c.l.b16 %v5735
        %v5871 = vunpack.c.l.b16 %v5736
        %v5872 = vunpack.c.l.b16 %v5737
        %v5873 = vunpack.c.l.b16 %v5738
        %v5874 = vunpack.c.l.b16 %v5739
        %v5875 = vunpack.c.l.b16 %v5740
        %v5876 = vunpack.c.l.b16 %v5741
        %v5877 = vunpack.c.l.b16 %v5742
        %v5878 = vunpack.c.l.b16 %v5743
        %v5879 = vunpack.c.l.b16 %v5744
        %v5880 = vunpack.c.l.b16 %v5745
        %v5881 = vunpack.c.l.b16 %v5746
        %v5882 = vunpack.c.l.b16 %v5747
        %v5883 = vunpack.c.l.b16 %v5748
        %v5884 = vunpack.c.l.b16 %v5749
        %v5885 = vunpack.c.l.b16 %v5750
        %v5886 = vunpack.c.l.b16 %v5751
        %v5887 = vunpack.c.l.b16 %v5752
        %v5888 = vunpack.c.l.b16 %v5753
        %v5889 = vunpack.c.l.b16 %v5754
        %v5890 = vunpack.c.l.b16 %v5755
        %v5891 = vunpack.c.l.b16 %v5756
        %v5892 = vunpack.c.l.b16 %v5757
        %v5893 = vunpack.c.l.b16 %v5758
        %v5894 = vunpack.c.l.b16 %v5759
        %v5895 = vunpack.c.l.b16 %v5760
        %v5896 = vunpack.c.l.b16 %v5761
        %v5897 = vunpack.c.l.b16 %v5762
        %v5898 = vunpack.c.l.b16 %v5763
        %v5899 = vunpack.c.l.b16 %v5764
        %v5900 = vunpack.c.l.b16 %v5765
        %v5901 = vunpack.c.l.b16 %v5766
        %v5902 = vunpack.c.l.b16 %v5767
        %v5903 = vunpack.c.l.b16 %v5768
        %v5904 = vunpack.c.l.b16 %v5769
        %v5905 = vunpack.c.l.b16 %v5770
        %v5906 = vunpack.c.l.b16 %v5771
        %v5907 = vunpack.c.l.b16 %v5772
        %v5908 = vunpack.c.l.b16 %v5773
        %v5909 = vunpack.c.l.b16 %v5774
        %v5910 = vunpack.c.l.b16 %v5775
        %v5911 = vunpack.c.l.b16 %v5776
        %v5912 = vunpack.c.l.b16 %v5777
        %v5913 = vunpack.c.l.b16 %v5778
        %v5914 = vunpack.c.l.b16 %v5779
        %v5915 = vunpack.c.l.b16 %v5780
        %v5916 = vpack.c.b16 %v5853, %v5852
        %v5917 = vpack.c.b16 %v5855, %v5854
        %v5918 = vpack.c.b16 %v5857, %v5856
        %v5919 = vpack.c.b16 %v5859, %v5858
        %v5920 = vpack.c.b16 %v5861, %v5860
        %v5921 = vpack.c.b16 %v5863, %v5862
        %v5922 = vpack.c.b16 %v5865, %v5864
        %v5923 = vpack.c.b16 %v5867, %v5866
        %v5924 = vpack.c.b16 %v5869, %v5868
        %v5925 = vpack.c.b16 %v5871, %v5870
        %v5926 = vpack.c.b16 %v5873, %v5872
        %v5927 = vpack.c.b16 %v5875, %v5874
        %v5928 = vpack.c.b16 %v5877, %v5876
        %v5929 = vpack.c.b16 %v5879, %v5878
        %v5930 = vpack.c.b16 %v5881, %v5880
        %v5931 = vpack.c.b16 %v5883, %v5882
        %v5932 = vpack.c.b16 %v5885, %v5884
        %v5933 = vpack.c.b16 %v5887, %v5886
        %v5934 = vpack.c.b16 %v5889, %v5888
        %v5935 = vpack.c.b16 %v5891, %v5890
        %v5936 = vpack.c.b16 %v5893, %v5892
        %v5937 = vpack.c.b16 %v5895, %v5894
        %v5938 = vpack.c.b16 %v5897, %v5896
        %v5939 = vpack.c.b16 %v5899, %v5898
        %v5940 = vpack.c.b16 %v5901, %v5900
        %v5941 = vpack.c.b16 %v5903, %v5902
        %v5942 = vpack.c.b16 %v5905, %v5904
        %v5943 = vpack.c.b16 %v5907, %v5906
        %v5944 = vpack.c.b16 %v5909, %v5908
        %v5945 = vpack.c.b16 %v5911, %v5910
        %v5946 = vpack.c.b16 %v5913, %v5912
        %v5947 = vpack.c.b16 %v5915, %v5914
        %5980 = vmatprep.subr.bf16.mxu0 0
        %5981 = vmatpush1.bf16.msra.mxu0 %v5923
        %5982 = vmatprep.subr.bf16.mxu0 0
        %5983 = vmatpush1.bf16.msra.mxu0 %v5922
        %5984 = vmatprep.subr.bf16.mxu0 0
        %5985 = vmatpush1.bf16.msra.mxu0 %v5921
        %5986 = vmatprep.subr.bf16.mxu0 0
        %5987 = vmatpush1.bf16.msra.mxu0 %v5920
        %5988 = vmatprep.subr.bf16.mxu0 0
        %5989 = vmatpush1.bf16.msra.mxu0 %v5919
        %5990 = vmatprep.subr.bf16.mxu0 0
        %5991 = vmatpush1.bf16.msra.mxu0 %v5918
        %5992 = vmatprep.subr.bf16.mxu0 0
        %5993 = vmatpush1.bf16.msra.mxu0 %v5917
        %5994 = vmatprep.subr.bf16.mxu0 0
        %5995 = vmatpush1.bf16.msra.mxu0 %v5916
        %5996 = vmatprep.subr.bf16.mxu0 0
        %5997 = vmatpush2.bf16.msra.mxu0 %v5931
        %5998 = vmatprep.subr.bf16.mxu0 0
        %5999 = vmatpush2.bf16.msra.mxu0 %v5930
        %6000 = vmatprep.subr.bf16.mxu0 0
        %6001 = vmatpush2.bf16.msra.mxu0 %v5929
        %6002 = vmatprep.subr.bf16.mxu0 0
        %6003 = vmatpush2.bf16.msra.mxu0 %v5928
        %6004 = vmatprep.subr.bf16.mxu0 0
        %6005 = vmatpush2.bf16.msra.mxu0 %v5927
        %6006 = vmatprep.subr.bf16.mxu0 0
        %6007 = vmatpush2.bf16.msra.mxu0 %v5926
        %6008 = vmatprep.subr.bf16.mxu0 0
        %6009 = vmatpush2.bf16.msra.mxu0 %v5925
        %6010 = vmatprep.subr.bf16.mxu0 0
        %6011 = vmatpush2.bf16.msra.mxu0 %v5924
        %6012 = vmatprep.mubr.bf16.mxu0 %v5590
        %6013 = vmatmul.mubr.bf16.gmra.mxu0 %v5589
        %v6014 = vpop.f32.mrf.mxu0
        %v6015 = vadd.f32 %v5786, %v6014
        %v6016 = vpop.f32.mrf.mxu0
        %v6017 = vpop.f32.mrf.mxu0
        %v6018 = vadd.f32 %v5786, %v6017
        %v6019 = vpop.f32.mrf.mxu0
        %6020 = vmatprep.mubr.bf16.mxu0 %v5594
        %6021 = vmatmul.mubr.bf16.gmra.mxu0 %v5593
        %v6022 = vpop.f32.mrf.mxu0
        %v6023 = vadd.f32 %v5786, %v6022
        %v6024 = vpop.f32.mrf.mxu0
        %v6025 = vpop.f32.mrf.mxu0
        %v6026 = vadd.f32 %v5786, %v6025
        %v6027 = vpop.f32.mrf.mxu0
        %6028 = vmatprep.mubr.bf16.mxu0 %v5598
        %6029 = vmatmul.mubr.bf16.gmra.mxu0 %v5597
        %v6030 = vpop.f32.mrf.mxu0
        %v6031 = vadd.f32 %v5786, %v6030
        %v6032 = vpop.f32.mrf.mxu0
        %v6033 = vpop.f32.mrf.mxu0
        %v6034 = vadd.f32 %v5786, %v6033
        %v6035 = vpop.f32.mrf.mxu0
        %6036 = vmatprep.mubr.bf16.mxu0 %v5602
        %6037 = vmatmul.mubr.bf16.gmra.mxu0 %v5601
        %v6038 = vpop.f32.mrf.mxu0
        %v6039 = vadd.f32 %v5786, %v6038
        %v6040 = vpop.f32.mrf.mxu0
        %v6041 = vpop.f32.mrf.mxu0
        %v6042 = vadd.f32 %v5786, %v6041
        %v6043 = vpop.f32.mrf.mxu0
        %6044 = vmatprep.mubr.bf16.mxu0 %v5606
        %6045 = vmatmul.mubr.bf16.gmra.mxu0 %v5605
        %v6046 = vpop.f32.mrf.mxu0
        %v6047 = vadd.f32 %v5786, %v6046
        %v6048 = vpop.f32.mrf.mxu0
        %v6049 = vpop.f32.mrf.mxu0
        %v6050 = vadd.f32 %v5786, %v6049
        %v6051 = vpop.f32.mrf.mxu0
        %6052 = vmatprep.mubr.bf16.mxu0 %v5610
        %6053 = vmatmul.mubr.bf16.gmra.mxu0 %v5609
        %v6054 = vpop.f32.mrf.mxu0
        %v6055 = vadd.f32 %v5786, %v6054
        %v6056 = vpop.f32.mrf.mxu0
        %v6057 = vpop.f32.mrf.mxu0
        %v6058 = vadd.f32 %v5786, %v6057
        %v6059 = vpop.f32.mrf.mxu0
        %6060 = vmatprep.mubr.bf16.mxu0 %v5614
        %6061 = vmatmul.mubr.bf16.gmra.mxu0 %v5613
        %v6062 = vpop.f32.mrf.mxu0
        %v6063 = vadd.f32 %v5786, %v6062
        %v6064 = vpop.f32.mrf.mxu0
        %v6065 = vpop.f32.mrf.mxu0
        %v6066 = vadd.f32 %v5786, %v6065
        %v6067 = vpop.f32.mrf.mxu0
        %6068 = vmatprep.mubr.bf16.mxu0 %v5618
        %6069 = vmatmul.mubr.bf16.gmra.mxu0 %v5617
        %v6070 = vpop.f32.mrf.mxu0
        %v6071 = vadd.f32 %v5786, %v6070
        %v6072 = vpop.f32.mrf.mxu0
        %v6073 = vpop.f32.mrf.mxu0
        %v6074 = vadd.f32 %v5786, %v6073
        %v6075 = vpop.f32.mrf.mxu0
        %6076 = vmatprep.mubr.bf16.mxu0 %v5622
        %6077 = vmatmul.mubr.bf16.gmra.mxu0 %v5621
        %v6078 = vpop.f32.mrf.mxu0
        %v6079 = vadd.f32 %v5786, %v6078
        %v6080 = vpop.f32.mrf.mxu0
        %v6081 = vpop.f32.mrf.mxu0
        %v6082 = vadd.f32 %v5786, %v6081
        %v6083 = vpop.f32.mrf.mxu0
        %6084 = vmatprep.mubr.bf16.mxu0 %v5626
        %6085 = vmatmul.mubr.bf16.gmra.mxu0 %v5625
        %v6086 = vpop.f32.mrf.mxu0
        %v6087 = vadd.f32 %v5786, %v6086
        %v6088 = vpop.f32.mrf.mxu0
        %v6089 = vpop.f32.mrf.mxu0
        %v6090 = vadd.f32 %v5786, %v6089
        %v6091 = vpop.f32.mrf.mxu0
        %6092 = vmatprep.mubr.bf16.mxu0 %v5630
        %6093 = vmatmul.mubr.bf16.gmra.mxu0 %v5629
        %v6094 = vpop.f32.mrf.mxu0
        %v6095 = vadd.f32 %v5786, %v6094
        %v6096 = vpop.f32.mrf.mxu0
        %v6097 = vpop.f32.mrf.mxu0
        %v6098 = vadd.f32 %v5786, %v6097
        %v6099 = vpop.f32.mrf.mxu0
        %6100 = vmatprep.mubr.bf16.mxu0 %v5634
        %6101 = vmatmul.mubr.bf16.gmra.mxu0 %v5633
        %v6102 = vpop.f32.mrf.mxu0
        %v6103 = vadd.f32 %v5786, %v6102
        %v6104 = vpop.f32.mrf.mxu0
        %v6105 = vpop.f32.mrf.mxu0
        %v6106 = vadd.f32 %v5786, %v6105
        %v6107 = vpop.f32.mrf.mxu0
        %6108 = vmatprep.mubr.bf16.mxu0 %v5638
        %6109 = vmatmul.mubr.bf16.gmra.mxu0 %v5637
        %v6110 = vpop.f32.mrf.mxu0
        %v6111 = vadd.f32 %v5786, %v6110
        %v6112 = vpop.f32.mrf.mxu0
        %v6113 = vpop.f32.mrf.mxu0
        %v6114 = vadd.f32 %v5786, %v6113
        %v6115 = vpop.f32.mrf.mxu0
        %6116 = vmatprep.mubr.bf16.mxu0 %v5642
        %6117 = vmatmul.mubr.bf16.gmra.mxu0 %v5641
        %v6118 = vpop.f32.mrf.mxu0
        %v6119 = vadd.f32 %v5786, %v6118
        %v6120 = vpop.f32.mrf.mxu0
        %v6121 = vpop.f32.mrf.mxu0
        %v6122 = vadd.f32 %v5786, %v6121
        %v6123 = vpop.f32.mrf.mxu0
        %6124 = vmatprep.mubr.bf16.mxu0 %v5646
        %6125 = vmatmul.mubr.bf16.gmra.mxu0 %v5645
        %v6126 = vpop.f32.mrf.mxu0
        %v6127 = vadd.f32 %v5786, %v6126
        %v6128 = vpop.f32.mrf.mxu0
        %v6129 = vpop.f32.mrf.mxu0
        %v6130 = vadd.f32 %v5786, %v6129
        %v6131 = vpop.f32.mrf.mxu0
        %6132 = vmatprep.mubr.bf16.mxu0 %v5650
        %6133 = vmatmul.mubr.bf16.gmra.mxu0 %v5649
        %v6134 = vpop.f32.mrf.mxu0
        %v6135 = vadd.f32 %v5786, %v6134
        %v6136 = vpop.f32.mrf.mxu0
        %v6137 = vpop.f32.mrf.mxu0
        %v6138 = vadd.f32 %v5786, %v6137
        %v6139 = vpop.f32.mrf.mxu0
        %6140 = vmatprep.mubr.bf16.mxu0 %v5654
        %6141 = vmatmul.mubr.bf16.gmra.mxu0 %v5653
        %v6142 = vpop.f32.mrf.mxu0
        %v6143 = vadd.f32 %v5786, %v6142
        %v6144 = vpop.f32.mrf.mxu0
        %v6145 = vpop.f32.mrf.mxu0
        %v6146 = vadd.f32 %v5786, %v6145
        %v6147 = vpop.f32.mrf.mxu0
        %6148 = vmatprep.mubr.bf16.mxu0 %v5658
        %6149 = vmatmul.mubr.bf16.gmra.mxu0 %v5657
        %v6150 = vpop.f32.mrf.mxu0
        %v6151 = vadd.f32 %v5786, %v6150
        %v6152 = vpop.f32.mrf.mxu0
        %v6153 = vpop.f32.mrf.mxu0
        %v6154 = vadd.f32 %v5786, %v6153
        %v6155 = vpop.f32.mrf.mxu0
        %6156 = vmatprep.mubr.bf16.mxu0 %v5662
        %6157 = vmatmul.mubr.bf16.gmra.mxu0 %v5661
        %v6158 = vpop.f32.mrf.mxu0
        %v6159 = vadd.f32 %v5786, %v6158
        %v6160 = vpop.f32.mrf.mxu0
        %v6161 = vpop.f32.mrf.mxu0
        %v6162 = vadd.f32 %v5786, %v6161
        %v6163 = vpop.f32.mrf.mxu0
        %6164 = vmatprep.mubr.bf16.mxu0 %v5666
        %6165 = vmatmul.mubr.bf16.gmra.mxu0 %v5665
        %v6166 = vpop.f32.mrf.mxu0
        %v6167 = vadd.f32 %v5786, %v6166
        %v6168 = vpop.f32.mrf.mxu0
        %v6169 = vpop.f32.mrf.mxu0
        %v6170 = vadd.f32 %v5786, %v6169
        %v6171 = vpop.f32.mrf.mxu0
        %6172 = vmatprep.mubr.bf16.mxu0 %v5670
        %6173 = vmatmul.mubr.bf16.gmra.mxu0 %v5669
        %v6174 = vpop.f32.mrf.mxu0
        %v6175 = vadd.f32 %v5786, %v6174
        %v6176 = vpop.f32.mrf.mxu0
        %v6177 = vpop.f32.mrf.mxu0
        %v6178 = vadd.f32 %v5786, %v6177
        %v6179 = vpop.f32.mrf.mxu0
        %6180 = vmatprep.mubr.bf16.mxu0 %v5674
        %6181 = vmatmul.mubr.bf16.gmra.mxu0 %v5673
        %v6182 = vpop.f32.mrf.mxu0
        %v6183 = vadd.f32 %v5786, %v6182
        %v6184 = vpop.f32.mrf.mxu0
        %v6185 = vpop.f32.mrf.mxu0
        %v6186 = vadd.f32 %v5786, %v6185
        %v6187 = vpop.f32.mrf.mxu0
        %6188 = vmatprep.mubr.bf16.mxu0 %v5678
        %6189 = vmatmul.mubr.bf16.gmra.mxu0 %v5677
        %v6190 = vpop.f32.mrf.mxu0
        %v6191 = vadd.f32 %v5786, %v6190
        %v6192 = vpop.f32.mrf.mxu0
        %v6193 = vpop.f32.mrf.mxu0
        %v6194 = vadd.f32 %v5786, %v6193
        %v6195 = vpop.f32.mrf.mxu0
        %6196 = vmatprep.mubr.bf16.mxu0 %v5682
        %6197 = vmatmul.mubr.bf16.gmra.mxu0 %v5681
        %v6198 = vpop.f32.mrf.mxu0
        %v6199 = vadd.f32 %v5786, %v6198
        %v6200 = vpop.f32.mrf.mxu0
        %v6201 = vpop.f32.mrf.mxu0
        %v6202 = vadd.f32 %v5786, %v6201
        %v6203 = vpop.f32.mrf.mxu0
        %6204 = vmatprep.mubr.bf16.mxu0 %v5686
        %6205 = vmatmul.mubr.bf16.gmra.mxu0 %v5685
        %v6206 = vpop.f32.mrf.mxu0
        %v6207 = vadd.f32 %v5786, %v6206
        %v6208 = vpop.f32.mrf.mxu0
        %v6209 = vpop.f32.mrf.mxu0
        %v6210 = vadd.f32 %v5786, %v6209
        %v6211 = vpop.f32.mrf.mxu0
        %6212 = vmatprep.mubr.bf16.mxu0 %v5690
        %6213 = vmatmul.mubr.bf16.gmra.mxu0 %v5689
        %v6214 = vpop.f32.mrf.mxu0
        %v6215 = vadd.f32 %v5786, %v6214
        %v6216 = vpop.f32.mrf.mxu0
        %v6217 = vpop.f32.mrf.mxu0
        %v6218 = vadd.f32 %v5786, %v6217
        %v6219 = vpop.f32.mrf.mxu0
        %6220 = vmatprep.mubr.bf16.mxu0 %v5694
        %6221 = vmatmul.mubr.bf16.gmra.mxu0 %v5693
        %v6222 = vpop.f32.mrf.mxu0
        %v6223 = vadd.f32 %v5786, %v6222
        %v6224 = vpop.f32.mrf.mxu0
        %v6225 = vpop.f32.mrf.mxu0
        %v6226 = vadd.f32 %v5786, %v6225
        %v6227 = vpop.f32.mrf.mxu0
        %6228 = vmatprep.mubr.bf16.mxu0 %v5698
        %6229 = vmatmul.mubr.bf16.gmra.mxu0 %v5697
        %v6230 = vpop.f32.mrf.mxu0
        %v6231 = vadd.f32 %v5786, %v6230
        %v6232 = vpop.f32.mrf.mxu0
        %v6233 = vpop.f32.mrf.mxu0
        %v6234 = vadd.f32 %v5786, %v6233
        %v6235 = vpop.f32.mrf.mxu0
        %6236 = vmatprep.mubr.bf16.mxu0 %v5702
        %6237 = vmatmul.mubr.bf16.gmra.mxu0 %v5701
        %v6238 = vpop.f32.mrf.mxu0
        %v6239 = vadd.f32 %v5786, %v6238
        %v6240 = vpop.f32.mrf.mxu0
        %v6241 = vpop.f32.mrf.mxu0
        %v6242 = vadd.f32 %v5786, %v6241
        %v6243 = vpop.f32.mrf.mxu0
        %6244 = vmatprep.mubr.bf16.mxu0 %v5706
        %6245 = vmatmul.mubr.bf16.gmra.mxu0 %v5705
        %v6246 = vpop.f32.mrf.mxu0
        %v6247 = vadd.f32 %v5786, %v6246
        %v6248 = vpop.f32.mrf.mxu0
        %v6249 = vpop.f32.mrf.mxu0
        %v6250 = vadd.f32 %v5786, %v6249
        %v6251 = vpop.f32.mrf.mxu0
        %6252 = vmatprep.mubr.bf16.mxu0 %v5710
        %6253 = vmatmul.mubr.bf16.gmra.mxu0 %v5709
        %v6254 = vpop.f32.mrf.mxu0
        %v6255 = vadd.f32 %v5786, %v6254
        %v6256 = vpop.f32.mrf.mxu0
        %v6257 = vpop.f32.mrf.mxu0
        %v6258 = vadd.f32 %v5786, %v6257
        %v6259 = vpop.f32.mrf.mxu0
        %6260 = vmatprep.mubr.bf16.mxu0 %v5714
        %6261 = vmatmul.mubr.bf16.gmra.mxu0 %v5713
        %v6262 = vpop.f32.mrf.mxu0
        %v6263 = vadd.f32 %v5786, %v6262
        %v6264 = vpop.f32.mrf.mxu0
        %v6265 = vpop.f32.mrf.mxu0
        %v6266 = vadd.f32 %v5786, %v6265
        %v6267 = vpop.f32.mrf.mxu0
        %6268 = vdwg.mxu0
        %6269 = vmatprep.subr.bf16.mxu0 0
        %6270 = vmatpush1.bf16.msra.mxu0 %v5939
        %6271 = vmatprep.subr.bf16.mxu0 0
        %6272 = vmatpush1.bf16.msra.mxu0 %v5938
        %6273 = vmatprep.subr.bf16.mxu0 0
        %6274 = vmatpush1.bf16.msra.mxu0 %v5937
        %6275 = vmatprep.subr.bf16.mxu0 0
        %6276 = vmatpush1.bf16.msra.mxu0 %v5936
        %6277 = vmatprep.subr.bf16.mxu0 0
        %6278 = vmatpush1.bf16.msra.mxu0 %v5935
        %6279 = vmatprep.subr.bf16.mxu0 0
        %6280 = vmatpush1.bf16.msra.mxu0 %v5934
        %6281 = vmatprep.subr.bf16.mxu0 0
        %6282 = vmatpush1.bf16.msra.mxu0 %v5933
        %6283 = vmatprep.subr.bf16.mxu0 0
        %6284 = vmatpush1.bf16.msra.mxu0 %v5932
        %6285 = vmatprep.subr.bf16.mxu0 0
        %6286 = vmatpush2.bf16.msra.mxu0 %v5947
        %6287 = vmatprep.subr.bf16.mxu0 0
        %6288 = vmatpush2.bf16.msra.mxu0 %v5946
        %6289 = vmatprep.subr.bf16.mxu0 0
        %6290 = vmatpush2.bf16.msra.mxu0 %v5945
        %6291 = vmatprep.subr.bf16.mxu0 0
        %6292 = vmatpush2.bf16.msra.mxu0 %v5944
        %6293 = vmatprep.subr.bf16.mxu0 0
        %6294 = vmatpush2.bf16.msra.mxu0 %v5943
        %6295 = vmatprep.subr.bf16.mxu0 0
        %6296 = vmatpush2.bf16.msra.mxu0 %v5942
        %6297 = vmatprep.subr.bf16.mxu0 0
        %6298 = vmatpush2.bf16.msra.mxu0 %v5941
        %6299 = vmatprep.subr.bf16.mxu0 0
        %6300 = vmatpush2.bf16.msra.mxu0 %v5940
        %6301 = vmatprep.mubr.bf16.mxu0 %v5592
        %6302 = vmatmul.mubr.bf16.gmra.mxu0 %v5591
        %v6303 = vpop.f32.mrf.mxu0
        %v6304 = vadd.f32 %v6015, %v6303
        %v6305 = vpop.f32.mrf.mxu0
        %v6306 = vpop.f32.mrf.mxu0
        %v6307 = vadd.f32 %v6018, %v6306
        %v6308 = vpop.f32.mrf.mxu0
        %6309 = vmatprep.mubr.bf16.mxu0 %v5596
        %6310 = vmatmul.mubr.bf16.gmra.mxu0 %v5595
        %v6311 = vpop.f32.mrf.mxu0
        %v6312 = vadd.f32 %v6023, %v6311
        %v6313 = vpop.f32.mrf.mxu0
        %v6314 = vpop.f32.mrf.mxu0
        %v6315 = vadd.f32 %v6026, %v6314
        %v6316 = vpop.f32.mrf.mxu0
        %6317 = vmatprep.mubr.bf16.mxu0 %v5600
        %6318 = vmatmul.mubr.bf16.gmra.mxu0 %v5599
        %v6319 = vpop.f32.mrf.mxu0
        %v6320 = vadd.f32 %v6031, %v6319
        %v6321 = vpop.f32.mrf.mxu0
        %v6322 = vpop.f32.mrf.mxu0
        %v6323 = vadd.f32 %v6034, %v6322
        %v6324 = vpop.f32.mrf.mxu0
        %6325 = vmatprep.mubr.bf16.mxu0 %v5604
        %6326 = vmatmul.mubr.bf16.gmra.mxu0 %v5603
        %v6327 = vpop.f32.mrf.mxu0
        %v6328 = vadd.f32 %v6039, %v6327
        %v6329 = vpop.f32.mrf.mxu0
        %v6330 = vpop.f32.mrf.mxu0
        %v6331 = vadd.f32 %v6042, %v6330
        %v6332 = vpop.f32.mrf.mxu0
        %6333 = vmatprep.mubr.bf16.mxu0 %v5608
        %6334 = vmatmul.mubr.bf16.gmra.mxu0 %v5607
        %v6335 = vpop.f32.mrf.mxu0
        %v6336 = vadd.f32 %v6047, %v6335
        %v6337 = vpop.f32.mrf.mxu0
        %v6338 = vpop.f32.mrf.mxu0
        %v6339 = vadd.f32 %v6050, %v6338
        %v6340 = vpop.f32.mrf.mxu0
        %6341 = vmatprep.mubr.bf16.mxu0 %v5612
        %6342 = vmatmul.mubr.bf16.gmra.mxu0 %v5611
        %v6343 = vpop.f32.mrf.mxu0
        %v6344 = vadd.f32 %v6055, %v6343
        %v6345 = vpop.f32.mrf.mxu0
        %v6346 = vpop.f32.mrf.mxu0
        %v6347 = vadd.f32 %v6058, %v6346
        %v6348 = vpop.f32.mrf.mxu0
        %6349 = vmatprep.mubr.bf16.mxu0 %v5616
        %6350 = vmatmul.mubr.bf16.gmra.mxu0 %v5615
        %v6351 = vpop.f32.mrf.mxu0
        %v6352 = vadd.f32 %v6063, %v6351
        %v6353 = vpop.f32.mrf.mxu0
        %v6354 = vpop.f32.mrf.mxu0
        %v6355 = vadd.f32 %v6066, %v6354
        %v6356 = vpop.f32.mrf.mxu0
        %6357 = vmatprep.mubr.bf16.mxu0 %v5620
        %6358 = vmatmul.mubr.bf16.gmra.mxu0 %v5619
        %v6359 = vpop.f32.mrf.mxu0
        %v6360 = vadd.f32 %v6071, %v6359
        %v6361 = vpop.f32.mrf.mxu0
        %v6362 = vpop.f32.mrf.mxu0
        %v6363 = vadd.f32 %v6074, %v6362
        %v6364 = vpop.f32.mrf.mxu0
        %6365 = vmatprep.mubr.bf16.mxu0 %v5624
        %6366 = vmatmul.mubr.bf16.gmra.mxu0 %v5623
        %v6367 = vpop.f32.mrf.mxu0
        %v6368 = vadd.f32 %v6079, %v6367
        %v6369 = vpop.f32.mrf.mxu0
        %v6370 = vpop.f32.mrf.mxu0
        %v6371 = vadd.f32 %v6082, %v6370
        %v6372 = vpop.f32.mrf.mxu0
        %6373 = vmatprep.mubr.bf16.mxu0 %v5628
        %6374 = vmatmul.mubr.bf16.gmra.mxu0 %v5627
        %v6375 = vpop.f32.mrf.mxu0
        %v6376 = vadd.f32 %v6087, %v6375
        %v6377 = vpop.f32.mrf.mxu0
        %v6378 = vpop.f32.mrf.mxu0
        %v6379 = vadd.f32 %v6090, %v6378
        %v6380 = vpop.f32.mrf.mxu0
        %6381 = vmatprep.mubr.bf16.mxu0 %v5632
        %6382 = vmatmul.mubr.bf16.gmra.mxu0 %v5631
        %v6383 = vpop.f32.mrf.mxu0
        %v6384 = vadd.f32 %v6095, %v6383
        %v6385 = vpop.f32.mrf.mxu0
        %v6386 = vpop.f32.mrf.mxu0
        %v6387 = vadd.f32 %v6098, %v6386
        %v6388 = vpop.f32.mrf.mxu0
        %6389 = vmatprep.mubr.bf16.mxu0 %v5636
        %6390 = vmatmul.mubr.bf16.gmra.mxu0 %v5635
        %v6391 = vpop.f32.mrf.mxu0
        %v6392 = vadd.f32 %v6103, %v6391
        %v6393 = vpop.f32.mrf.mxu0
        %v6394 = vpop.f32.mrf.mxu0
        %v6395 = vadd.f32 %v6106, %v6394
        %v6396 = vpop.f32.mrf.mxu0
        %6397 = vmatprep.mubr.bf16.mxu0 %v5640
        %6398 = vmatmul.mubr.bf16.gmra.mxu0 %v5639
        %v6399 = vpop.f32.mrf.mxu0
        %v6400 = vadd.f32 %v6111, %v6399
        %v6401 = vpop.f32.mrf.mxu0
        %v6402 = vpop.f32.mrf.mxu0
        %v6403 = vadd.f32 %v6114, %v6402
        %v6404 = vpop.f32.mrf.mxu0
        %6405 = vmatprep.mubr.bf16.mxu0 %v5644
        %6406 = vmatmul.mubr.bf16.gmra.mxu0 %v5643
        %v6407 = vpop.f32.mrf.mxu0
        %v6408 = vadd.f32 %v6119, %v6407
        %v6409 = vpop.f32.mrf.mxu0
        %v6410 = vpop.f32.mrf.mxu0
        %v6411 = vadd.f32 %v6122, %v6410
        %v6412 = vpop.f32.mrf.mxu0
        %6413 = vmatprep.mubr.bf16.mxu0 %v5648
        %6414 = vmatmul.mubr.bf16.gmra.mxu0 %v5647
        %v6415 = vpop.f32.mrf.mxu0
        %v6416 = vadd.f32 %v6127, %v6415
        %v6417 = vpop.f32.mrf.mxu0
        %v6418 = vpop.f32.mrf.mxu0
        %v6419 = vadd.f32 %v6130, %v6418
        %v6420 = vpop.f32.mrf.mxu0
        %6421 = vmatprep.mubr.bf16.mxu0 %v5652
        %6422 = vmatmul.mubr.bf16.gmra.mxu0 %v5651
        %v6423 = vpop.f32.mrf.mxu0
        %v6424 = vadd.f32 %v6135, %v6423
        %v6425 = vpop.f32.mrf.mxu0
        %v6426 = vpop.f32.mrf.mxu0
        %v6427 = vadd.f32 %v6138, %v6426
        %v6428 = vpop.f32.mrf.mxu0
        %6429 = vmatprep.mubr.bf16.mxu0 %v5656
        %6430 = vmatmul.mubr.bf16.gmra.mxu0 %v5655
        %v6431 = vpop.f32.mrf.mxu0
        %v6432 = vadd.f32 %v6143, %v6431
        %v6433 = vpop.f32.mrf.mxu0
        %v6434 = vpop.f32.mrf.mxu0
        %v6435 = vadd.f32 %v6146, %v6434
        %v6436 = vpop.f32.mrf.mxu0
        %6437 = vmatprep.mubr.bf16.mxu0 %v5660
        %6438 = vmatmul.mubr.bf16.gmra.mxu0 %v5659
        %v6439 = vpop.f32.mrf.mxu0
        %v6440 = vadd.f32 %v6151, %v6439
        %v6441 = vpop.f32.mrf.mxu0
        %v6442 = vpop.f32.mrf.mxu0
        %v6443 = vadd.f32 %v6154, %v6442
        %v6444 = vpop.f32.mrf.mxu0
        %6445 = vmatprep.mubr.bf16.mxu0 %v5664
        %6446 = vmatmul.mubr.bf16.gmra.mxu0 %v5663
        %v6447 = vpop.f32.mrf.mxu0
        %v6448 = vadd.f32 %v6159, %v6447
        %v6449 = vpop.f32.mrf.mxu0
        %v6450 = vpop.f32.mrf.mxu0
        %v6451 = vadd.f32 %v6162, %v6450
        %v6452 = vpop.f32.mrf.mxu0
        %6453 = vmatprep.mubr.bf16.mxu0 %v5668
        %6454 = vmatmul.mubr.bf16.gmra.mxu0 %v5667
        %v6455 = vpop.f32.mrf.mxu0
        %v6456 = vadd.f32 %v6167, %v6455
        %v6457 = vpop.f32.mrf.mxu0
        %v6458 = vpop.f32.mrf.mxu0
        %v6459 = vadd.f32 %v6170, %v6458
        %v6460 = vpop.f32.mrf.mxu0
        %6461 = vmatprep.mubr.bf16.mxu0 %v5672
        %6462 = vmatmul.mubr.bf16.gmra.mxu0 %v5671
        %v6463 = vpop.f32.mrf.mxu0
        %v6464 = vadd.f32 %v6175, %v6463
        %v6465 = vpop.f32.mrf.mxu0
        %v6466 = vpop.f32.mrf.mxu0
        %v6467 = vadd.f32 %v6178, %v6466
        %v6468 = vpop.f32.mrf.mxu0
        %6469 = vmatprep.mubr.bf16.mxu0 %v5676
        %6470 = vmatmul.mubr.bf16.gmra.mxu0 %v5675
        %v6471 = vpop.f32.mrf.mxu0
        %v6472 = vadd.f32 %v6183, %v6471
        %v6473 = vpop.f32.mrf.mxu0
        %v6474 = vpop.f32.mrf.mxu0
        %v6475 = vadd.f32 %v6186, %v6474
        %v6476 = vpop.f32.mrf.mxu0
        %6477 = vmatprep.mubr.bf16.mxu0 %v5680
        %6478 = vmatmul.mubr.bf16.gmra.mxu0 %v5679
        %v6479 = vpop.f32.mrf.mxu0
        %v6480 = vadd.f32 %v6191, %v6479
        %v6481 = vpop.f32.mrf.mxu0
        %v6482 = vpop.f32.mrf.mxu0
        %v6483 = vadd.f32 %v6194, %v6482
        %v6484 = vpop.f32.mrf.mxu0
        %6485 = vmatprep.mubr.bf16.mxu0 %v5684
        %6486 = vmatmul.mubr.bf16.gmra.mxu0 %v5683
        %v6487 = vpop.f32.mrf.mxu0
        %v6488 = vadd.f32 %v6199, %v6487
        %v6489 = vpop.f32.mrf.mxu0
        %v6490 = vpop.f32.mrf.mxu0
        %v6491 = vadd.f32 %v6202, %v6490
        %v6492 = vpop.f32.mrf.mxu0
        %6493 = vmatprep.mubr.bf16.mxu0 %v5688
        %6494 = vmatmul.mubr.bf16.gmra.mxu0 %v5687
        %v6495 = vpop.f32.mrf.mxu0
        %v6496 = vadd.f32 %v6207, %v6495
        %v6497 = vpop.f32.mrf.mxu0
        %v6498 = vpop.f32.mrf.mxu0
        %v6499 = vadd.f32 %v6210, %v6498
        %v6500 = vpop.f32.mrf.mxu0
        %6501 = vmatprep.mubr.bf16.mxu0 %v5692
        %6502 = vmatmul.mubr.bf16.gmra.mxu0 %v5691
        %v6503 = vpop.f32.mrf.mxu0
        %v6504 = vadd.f32 %v6215, %v6503
        %v6505 = vpop.f32.mrf.mxu0
        %v6506 = vpop.f32.mrf.mxu0
        %v6507 = vadd.f32 %v6218, %v6506
        %v6508 = vpop.f32.mrf.mxu0
        %6509 = vmatprep.mubr.bf16.mxu0 %v5696
        %6510 = vmatmul.mubr.bf16.gmra.mxu0 %v5695
        %v6511 = vpop.f32.mrf.mxu0
        %v6512 = vadd.f32 %v6223, %v6511
        %v6513 = vpop.f32.mrf.mxu0
        %v6514 = vpop.f32.mrf.mxu0
        %v6515 = vadd.f32 %v6226, %v6514
        %v6516 = vpop.f32.mrf.mxu0
        %6517 = vmatprep.mubr.bf16.mxu0 %v5700
        %6518 = vmatmul.mubr.bf16.gmra.mxu0 %v5699
        %v6519 = vpop.f32.mrf.mxu0
        %v6520 = vadd.f32 %v6231, %v6519
        %v6521 = vpop.f32.mrf.mxu0
        %v6522 = vpop.f32.mrf.mxu0
        %v6523 = vadd.f32 %v6234, %v6522
        %v6524 = vpop.f32.mrf.mxu0
        %6525 = vmatprep.mubr.bf16.mxu0 %v5704
        %6526 = vmatmul.mubr.bf16.gmra.mxu0 %v5703
        %v6527 = vpop.f32.mrf.mxu0
        %v6528 = vadd.f32 %v6239, %v6527
        %v6529 = vpop.f32.mrf.mxu0
        %v6530 = vpop.f32.mrf.mxu0
        %v6531 = vadd.f32 %v6242, %v6530
        %v6532 = vpop.f32.mrf.mxu0
        %6533 = vmatprep.mubr.bf16.mxu0 %v5708
        %6534 = vmatmul.mubr.bf16.gmra.mxu0 %v5707
        %v6535 = vpop.f32.mrf.mxu0
        %v6536 = vadd.f32 %v6247, %v6535
        %v6537 = vpop.f32.mrf.mxu0
        %v6538 = vpop.f32.mrf.mxu0
        %v6539 = vadd.f32 %v6250, %v6538
        %v6540 = vpop.f32.mrf.mxu0
        %6541 = vmatprep.mubr.bf16.mxu0 %v5712
        %6542 = vmatmul.mubr.bf16.gmra.mxu0 %v5711
        %v6543 = vpop.f32.mrf.mxu0
        %v6544 = vadd.f32 %v6255, %v6543
        %v6545 = vpop.f32.mrf.mxu0
        %v6546 = vpop.f32.mrf.mxu0
        %v6547 = vadd.f32 %v6258, %v6546
        %v6548 = vpop.f32.mrf.mxu0
        %6549 = vmatprep.mubr.bf16.mxu0 %v5716
        %6550 = vmatmul.mubr.bf16.gmra.mxu0 %v5715
        %v6551 = vpop.f32.mrf.mxu0
        %v6552 = vadd.f32 %v6263, %v6551
        %v6553 = vpop.f32.mrf.mxu0
        %v6554 = vpop.f32.mrf.mxu0
        %v6555 = vadd.f32 %v6266, %v6554
        %v6556 = vpop.f32.mrf.mxu0
        %6557 = vdwg.mxu0
        %v6558 = vmax.f32 %v6304, %v6307
        %v6559 = vmax.f32 %v6558, %v6312
        %v6560 = vmax.f32 %v6559, %v6315
        %v6561 = vrot.slane %v6560, 4
        %v6562 = vmax.f32 %v6560, %v6561
        %v6563 = vrot.slane %v6562, 2
        %v6564 = vmax.f32 %v6562, %v6563
        %v6565 = vrot.slane %v6564, 1
        %v6566 = vmax.f32 %v6564, %v6565
        %v6567 = vmax.f32 %v6320, %v6323
        %v6568 = vmax.f32 %v6567, %v6328
        %v6569 = vmax.f32 %v6568, %v6331
        %v6570 = vrot.slane %v6569, 4
        %v6571 = vmax.f32 %v6569, %v6570
        %v6572 = vrot.slane %v6571, 2
        %v6573 = vmax.f32 %v6571, %v6572
        %v6574 = vrot.slane %v6573, 1
        %v6575 = vmax.f32 %v6573, %v6574
        %v6576 = vmax.f32 %v6336, %v6339
        %v6577 = vmax.f32 %v6576, %v6344
        %v6578 = vmax.f32 %v6577, %v6347
        %v6579 = vrot.slane %v6578, 4
        %v6580 = vmax.f32 %v6578, %v6579
        %v6581 = vrot.slane %v6580, 2
        %v6582 = vmax.f32 %v6580, %v6581
        %v6583 = vrot.slane %v6582, 1
        %v6584 = vmax.f32 %v6582, %v6583
        %v6585 = vmax.f32 %v6352, %v6355
        %v6586 = vmax.f32 %v6585, %v6360
        %v6587 = vmax.f32 %v6586, %v6363
        %v6588 = vrot.slane %v6587, 4
        %v6589 = vmax.f32 %v6587, %v6588
        %v6590 = vrot.slane %v6589, 2
        %v6591 = vmax.f32 %v6589, %v6590
        %v6592 = vrot.slane %v6591, 1
        %v6593 = vmax.f32 %v6591, %v6592
        %v6594 = vmax.f32 %v6368, %v6371
        %v6595 = vmax.f32 %v6594, %v6376
        %v6596 = vmax.f32 %v6595, %v6379
        %v6597 = vrot.slane %v6596, 4
        %v6598 = vmax.f32 %v6596, %v6597
        %v6599 = vrot.slane %v6598, 2
        %v6600 = vmax.f32 %v6598, %v6599
        %v6601 = vrot.slane %v6600, 1
        %v6602 = vmax.f32 %v6600, %v6601
        %v6603 = vmax.f32 %v6384, %v6387
        %v6604 = vmax.f32 %v6603, %v6392
        %v6605 = vmax.f32 %v6604, %v6395
        %v6606 = vrot.slane %v6605, 4
        %v6607 = vmax.f32 %v6605, %v6606
        %v6608 = vrot.slane %v6607, 2
        %v6609 = vmax.f32 %v6607, %v6608
        %v6610 = vrot.slane %v6609, 1
        %v6611 = vmax.f32 %v6609, %v6610
        %v6612 = vmax.f32 %v6400, %v6403
        %v6613 = vmax.f32 %v6612, %v6408
        %v6614 = vmax.f32 %v6613, %v6411
        %v6615 = vrot.slane %v6614, 4
        %v6616 = vmax.f32 %v6614, %v6615
        %v6617 = vrot.slane %v6616, 2
        %v6618 = vmax.f32 %v6616, %v6617
        %v6619 = vrot.slane %v6618, 1
        %v6620 = vmax.f32 %v6618, %v6619
        %v6621 = vmax.f32 %v6416, %v6419
        %v6622 = vmax.f32 %v6621, %v6424
        %v6623 = vmax.f32 %v6622, %v6427
        %v6624 = vrot.slane %v6623, 4
        %v6625 = vmax.f32 %v6623, %v6624
        %v6626 = vrot.slane %v6625, 2
        %v6627 = vmax.f32 %v6625, %v6626
        %v6628 = vrot.slane %v6627, 1
        %v6629 = vmax.f32 %v6627, %v6628
        %v6630 = vmax.f32 %v6432, %v6435
        %v6631 = vmax.f32 %v6630, %v6440
        %v6632 = vmax.f32 %v6631, %v6443
        %v6633 = vrot.slane %v6632, 4
        %v6634 = vmax.f32 %v6632, %v6633
        %v6635 = vrot.slane %v6634, 2
        %v6636 = vmax.f32 %v6634, %v6635
        %v6637 = vrot.slane %v6636, 1
        %v6638 = vmax.f32 %v6636, %v6637
        %v6639 = vmax.f32 %v6448, %v6451
        %v6640 = vmax.f32 %v6639, %v6456
        %v6641 = vmax.f32 %v6640, %v6459
        %v6642 = vrot.slane %v6641, 4
        %v6643 = vmax.f32 %v6641, %v6642
        %v6644 = vrot.slane %v6643, 2
        %v6645 = vmax.f32 %v6643, %v6644
        %v6646 = vrot.slane %v6645, 1
        %v6647 = vmax.f32 %v6645, %v6646
        %v6648 = vmax.f32 %v6464, %v6467
        %v6649 = vmax.f32 %v6648, %v6472
        %v6650 = vmax.f32 %v6649, %v6475
        %v6651 = vrot.slane %v6650, 4
        %v6652 = vmax.f32 %v6650, %v6651
        %v6653 = vrot.slane %v6652, 2
        %v6654 = vmax.f32 %v6652, %v6653
        %v6655 = vrot.slane %v6654, 1
        %v6656 = vmax.f32 %v6654, %v6655
        %v6657 = vmax.f32 %v6480, %v6483
        %v6658 = vmax.f32 %v6657, %v6488
        %v6659 = vmax.f32 %v6658, %v6491
        %v6660 = vrot.slane %v6659, 4
        %v6661 = vmax.f32 %v6659, %v6660
        %v6662 = vrot.slane %v6661, 2
        %v6663 = vmax.f32 %v6661, %v6662
        %v6664 = vrot.slane %v6663, 1
        %v6665 = vmax.f32 %v6663, %v6664
        %v6666 = vmax.f32 %v6496, %v6499
        %v6667 = vmax.f32 %v6666, %v6504
        %v6668 = vmax.f32 %v6667, %v6507
        %v6669 = vrot.slane %v6668, 4
        %v6670 = vmax.f32 %v6668, %v6669
        %v6671 = vrot.slane %v6670, 2
        %v6672 = vmax.f32 %v6670, %v6671
        %v6673 = vrot.slane %v6672, 1
        %v6674 = vmax.f32 %v6672, %v6673
        %v6675 = vmax.f32 %v6512, %v6515
        %v6676 = vmax.f32 %v6675, %v6520
        %v6677 = vmax.f32 %v6676, %v6523
        %v6678 = vrot.slane %v6677, 4
        %v6679 = vmax.f32 %v6677, %v6678
        %v6680 = vrot.slane %v6679, 2
        %v6681 = vmax.f32 %v6679, %v6680
        %v6682 = vrot.slane %v6681, 1
        %v6683 = vmax.f32 %v6681, %v6682
        %v6684 = vmax.f32 %v6528, %v6531
        %v6685 = vmax.f32 %v6684, %v6536
        %v6686 = vmax.f32 %v6685, %v6539
        %v6687 = vrot.slane %v6686, 4
        %v6688 = vmax.f32 %v6686, %v6687
        %v6689 = vrot.slane %v6688, 2
        %v6690 = vmax.f32 %v6688, %v6689
        %v6691 = vrot.slane %v6690, 1
        %v6692 = vmax.f32 %v6690, %v6691
        %v6693 = vmax.f32 %v6544, %v6547
        %v6694 = vmax.f32 %v6693, %v6552
        %v6695 = vmax.f32 %v6694, %v6555
        %v6696 = vrot.slane %v6695, 4
        %v6697 = vmax.f32 %v6695, %v6696
        %v6698 = vrot.slane %v6697, 2
        %v6699 = vmax.f32 %v6697, %v6698
        %v6700 = vrot.slane %v6699, 1
        %v6701 = vmax.f32 %v6699, %v6700
        %v6718 = vsel %vm2736, %v6575, %v6566
        %v6719 = vsel %vm2738, %v6584, %v6718
        %v6720 = vsel %vm2740, %v6593, %v6719
        %v6721 = vsel %vm2742, %v6602, %v6720
        %v6722 = vsel %vm2744, %v6611, %v6721
        %v6723 = vsel %vm2746, %v6620, %v6722
        %v6724 = vsel %vm2748, %v6629, %v6723
        %v6725 = vsel %vm2736, %v6647, %v6638
        %v6726 = vsel %vm2738, %v6656, %v6725
        %v6727 = vsel %vm2740, %v6665, %v6726
        %v6728 = vsel %vm2742, %v6674, %v6727
        %v6729 = vsel %vm2744, %v6683, %v6728
        %v6730 = vsel %vm2746, %v6692, %v6729
        %v6731 = vsel %vm2748, %v6701, %v6730
        %6734 = vst [vmem:[%s355] sm:$0xff] %v6724
        %6735 = vst [vmem:[%s355 + $0x8] sm:$0xff] %v6731
        %s6736 = sand.u32 %s247, 1
        %s6737 = scalar_lea.sflag [#allocation3], %s6736
        %s6738 = sand.u32 %s247, 1
        %s6739 = smul.addr %s6738, 16
        %s6740 = scalar_lea.vmem [#allocation2], %s6739
        // Predicated region
        $region61: #{patch_embedding_forward.1} parent=59 // pred_check
          %p6741 = pneg %p257
        $region62: #{patch_embedding_forward.1} parent=59 // pred_check_branch
          %6743 = sbr.rel (%p6741) target = $region64
        $region63: #{patch_embedding_forward.1} parent=59 // pred_region
          %s6744 = smul.u32 2, %s24
          %s6746 = ssub.s32 256, 256
          %6747 = vsyncadd %s6737, %s6746
          %s6748 = smul.addr %s6744, 128
          %s6749 = scalar_lea.hbm %s10, %s6748
          %s6750 = sshll.u32 %s6740, 4
          %s6751 = int_to_ptr.vmem [resolvable:$true] %s6750
          %6756 = dma.vmem_to_hbm [thread:$0]  %s6751, 256, %s6749, %s6737, 128, 128, 8
        $region64: #{patch_embedding_forward.1} parent=59 // pred_fallthru
          _
      $region60: #{patch_embedding_forward.1} parent=5 // pred_fallthru
        _
      %p6757 = scmp.le.s32.totalorder 2, %s19
      // Predicated region
      $region65: #{patch_embedding_forward.1} parent=5 // pred_check
        %p6758 = pneg %p6757
      $region66: #{patch_embedding_forward.1} parent=5 // pred_check_branch
        %6760 = sbr.rel (%p6758) target = $region68
      $region67: #{patch_embedding_forward.1} parent=5 // pred_region
        %s6761 = ssub.s32 %s19, 2
        // Predicated region
        $region69: #{patch_embedding_forward.1} parent=67 // pred_check
          %p6762 = pneg %p263
        $region70: #{patch_embedding_forward.1} parent=67 // pred_check_branch
          %6764 = sbr.rel (%p6762) target = $region72
        $region71: #{patch_embedding_forward.1} parent=67 // pred_region
          %s6765 = sand.u32 %s248, 1
          %s6766 = scalar_lea.sflag [#allocation3], %s6765
          %s6767 = sand.u32 %s248, 1
          %s6768 = smul.addr %s6767, 16
          %s6769 = scalar_lea.vmem [#allocation2], %s6768
          %6770 = dma.done %s6766, 256
        $region72: #{patch_embedding_forward.1} parent=67 // pred_fallthru
          _
      $region68: #{patch_embedding_forward.1} parent=5 // pred_fallthru
        _
    $region6: #{patch_embedding_forward.1} parent=1 // loop_footer
      %s23 = sadd.s32 1, %s19
    $region7: #{patch_embedding_forward.1} parent=1 // loop_footer_branch
      %18 = sbr.rel target = $region3
    $region8: #{patch_embedding_forward.1} parent=1 // loop_exit
      _
    %6771 = vsyncpa [#allocation3], 1
    %s6772 = scalar_lea.sflag [#allocation3], 1
    %6773 = vsyncpa %s6772, 1

</llo_original>
